<compile_context>
chip_gen: v5e
topology: v5e:2x2
jax: 0.10.0
libtpu: 0.0.40
codegen_flags: <defaults>
</compile_context>

<pallas_src>
import numpy as np
import jax
import jax.numpy as jnp
from jax.experimental import pallas as pl
from jax.experimental.pallas import tpu as pltpu

# ----------------------------- hyper-parameters (small, consistent with module) ----
DIM = 128
DEPTH = 2
NUM_LATENTS = 8
NUM_MEDIA = 4
PATCH = 8
DIM_HEAD = 32
HEADS = 4
FF_MULT = 4
IN_CH = 4
IMG = 64                      # PatchEmbed(height=64, width=64)
LN_EPS = 1e-5
INNER = HEADS * DIM_HEAD      # 128
FF_INNER = DIM * FF_MULT      # 512
NEG_INF = -1e30               # finite "minus infinity" (defensive vs NaN)

_FOLDED_LAYER_NAMES = (
    "wq", "bq", "wkv_m", "bkv_m", "wkv_l", "bkv_l", "wo", "bo", "w1", "b1", "w2",
)


# ----------------------------- in-kernel helpers -------------------------------------
def _normalize(z):
    """LayerNorm without affine (affines are folded into the adjacent projections)."""
    mu = jnp.mean(z, axis=-1, keepdims=True)
    var = jnp.mean(jnp.square(z - mu), axis=-1, keepdims=True)
    return (z - mu) * jax.lax.rsqrt(var + LN_EPS)


def _ln(z, g, b):
    return _normalize(z) * g + b


def _gelu_tanh(h):
    # TODO(synk): PyTorch nn.GELU() default is the exact erf form; tanh approximation used
    # for robust Mosaic lowering (~1e-3 relative difference, well inside tolerance).
    return 0.5 * h * (1.0 + jnp.tanh(0.7978845608028654 * (h + 0.044715 * h * h * h)))


# ----------------------------- the single fused kernel -------------------------------
def _conditioner_kernel(
    idx_ref,                                  # SMEM (b,) int32  -- scalar prefetch
    p_ref,                                    # (n, cpp) bf16    -- this batch's patches
    pw_ref,                                   # (cpp, D) bf16    -- conv-as-matmul weight
    tb_ref,                                   # (n, D)   f32     -- conv bias + pos-embs
    lat0_ref,                                 # (NUM_LATENTS, D) f32 initial latents
    wq_ref, bq_ref,                           # (DEPTH, D, I) bf16, (DEPTH, 1, I) f32  (LN+scale folded)
    wkvm_ref, bkvm_ref,                       # (DEPTH, D, 2I) bf16, (DEPTH, 1, 2I) f32 (media-LN folded)
    wkvl_ref, bkvl_ref,                       # (DEPTH, D, 2I) bf16, (DEPTH, 1, 2I) f32 (latent-LN folded)
    wo_ref, bo_ref,                           # (DEPTH, I, D) bf16, (DEPTH, 1, D) f32
    w1_ref, b1_ref,                           # (DEPTH, D, 4D) bf16, (DEPTH, 1, 4D) f32 (FF-LN folded)
    w2_ref,                                   # (DEPTH, 4D, D) bf16
    ng_ref, nb_ref,                           # (1, D) f32 final LayerNorm
    o_ref,                                    # (NUM_LATENTS, D) f32
):
    n = p_ref.shape[0]                        # f * num_patches_per_frame
    S = NUM_LATENTS
    HS = HEADS * S                            # 32 stacked rows

    # --- patch embedding (conv-as-matmul, bf16 operands / f32 accum) + all static biases -
    x = jnp.dot(p_ref[...], pw_ref[...], preferred_element_type=jnp.float32) + tb_ref[...]
    # media LayerNorm WITHOUT affine: layer-independent -> compute once (affine folded)
    x_hat16 = _normalize(x).astype(jnp.bfloat16)                       # (n, D)

    # --- additive frame mask, pre-broadcast to (HS, n) (built once, used per layer) ------
    start = idx_ref[pl.program_id(0)] * (PATCH * PATCH)
    col = jax.lax.broadcasted_iota(jnp.int32, (HS, n), 1)
    mask_x = jnp.where(col >= start, jnp.float32(NEG_INF), jnp.float32(0.0))

    # --- head-selection mask for the stacked-head attention (rows grouped by head) -------
    lane = jax.lax.broadcasted_iota(jnp.int32, (S, INNER), 1)
    head_sel = jnp.concatenate(
        [((lane >= h * DIM_HEAD) & (lane < (h + 1) * DIM_HEAD)).astype(jnp.float32)
         for h in range(HEADS)], axis=0)                               # (HS, INNER)

    lat = lat0_ref[...].astype(jnp.float32)                            # (S, D)

    for l in range(DEPTH):                    # static unroll, DEPTH = 2
        # ---------------- PerceiverAttention ------------------------------------------
        lat16 = _normalize(lat).astype(jnp.bfloat16)                   # latent LN (affine folded)

        q = jnp.dot(lat16, wq_ref[l], preferred_element_type=jnp.float32) + bq_ref[l]
        kv_x = jnp.dot(x_hat16, wkvm_ref[l], preferred_element_type=jnp.float32) + bkvm_ref[l]
        kv_l = jnp.dot(lat16, wkvl_ref[l], preferred_element_type=jnp.float32) + bkvl_ref[l]
        k_x, v_x = kv_x[:, :INNER], kv_x[:, INNER:]                    # lane-aligned slices
        k_l, v_l = kv_l[:, :INNER], kv_l[:, INNER:]

        # stacked heads: Q_stack row h*S+i == q_i masked to head-h lanes
        q_stack = (jnp.concatenate([q] * HEADS, axis=0) * head_sel).astype(jnp.bfloat16)
        sim_x = jax.lax.dot_general(q_stack, k_x.astype(jnp.bfloat16),
                                    (((1,), (1,)), ((), ())),
                                    preferred_element_type=jnp.float32) + mask_x   # (HS, n)
        sim_l = jax.lax.dot_general(q_stack, k_l.astype(jnp.bfloat16),
                                    (((1,), (1,)), ((), ())),
                                    preferred_element_type=jnp.float32)            # (HS, S)

        m = jnp.maximum(jnp.max(sim_x, axis=-1, keepdims=True),
                        jnp.max(sim_l, axis=-1, keepdims=True))
        px = jnp.exp(sim_x - m)
        pl_ = jnp.exp(sim_l - m)
        inv = pl.reciprocal(jnp.sum(px, axis=-1, keepdims=True)
                            + jnp.sum(pl_, axis=-1, keepdims=True), approx=True)
        att = (jnp.dot((px * inv).astype(jnp.bfloat16), v_x.astype(jnp.bfloat16),
                       preferred_element_type=jnp.float32)
               + jnp.dot((pl_ * inv).astype(jnp.bfloat16), v_l.astype(jnp.bfloat16),
                         preferred_element_type=jnp.float32))                       # (HS, INNER)

        # merge 'b h n d -> b n (h d)': sublane-aligned static slices + lane masks
        merged = att * head_sel
        out_m = merged[0:S, :]
        for h in range(1, HEADS):
            out_m = out_m + merged[h * S:(h + 1) * S, :]                            # (S, INNER)

        lat = (jnp.dot(out_m.astype(jnp.bfloat16), wo_ref[l],
                       preferred_element_type=jnp.float32) + bo_ref[l]) + lat       # residual

        # ---------------- FeedForward (LN affine folded into w1/b1) --------------------
        xf16 = _normalize(lat).astype(jnp.bfloat16)
        hmid = jnp.dot(xf16, w1_ref[l], preferred_element_type=jnp.float32) + b1_ref[l]
        hmid = _gelu_tanh(hmid)
        lat = jnp.dot(hmid.astype(jnp.bfloat16), w2_ref[l],
                      preferred_element_type=jnp.float32) + lat                     # residual

    o_ref[...] = _ln(lat, ng_ref[...], nb_ref[...]).astype(o_ref.dtype)


# ----------------------------- host-side parameter folding ----------------------------
def fold_params(params):
    """Free host-side weight folding:
       * dim_head**-0.5 into to_q weight AND bias (module applies scale after full linear),
       * media-LN / latent-LN / FF-LN affines into the adjacent projections,
       * to_kv kept fused (D, 2*INNER) so k,v come from one 256-wide matmul,
       * MXU-operand weights cast to bf16 (f32 accumulation stays in the kernel)."""
    L = params["layers"]
    scale = DIM_HEAD ** -0.5

    def row_scale(g, w):          # (depth,1,D) row-scales (depth,D,K)
        return jnp.swapaxes(g, 1, 2) * w

    def bias_fold(b, w, extra=None):   # (depth,1,D) @ (depth,D,K) [+ (depth,1,K)]
        out = jnp.einsum("lod,ldk->lok", b, w)
        return out if extra is None else out + extra

    return {
        "patch_w": params["patch_w"].astype(jnp.bfloat16),
        "patch_b": params["patch_b"],
        "pos_embed": params["pos_embed"],
        "media_pos": params["media_pos"],
        "latents": params["latents"],
        "norm_g": params["norm_g"],
        "norm_b": params["norm_b"],
        "wq": (row_scale(L["ln_l_g"], L["wq"]) * scale).astype(jnp.bfloat16),
        "bq": (bias_fold(L["ln_l_b"], L["wq"], L["bq"]) * scale),
        "wkv_m": row_scale(L["ln_m_g"], L["wkv"]).astype(jnp.bfloat16),
        "bkv_m": bias_fold(L["ln_m_b"], L["wkv"], L["bkv"]),
        "wkv_l": row_scale(L["ln_l_g"], L["wkv"]).astype(jnp.bfloat16),
        "bkv_l": bias_fold(L["ln_l_b"], L["wkv"], L["bkv"]),
        "wo": L["wo"].astype(jnp.bfloat16),
        "bo": L["bo"],
        "w1": row_scale(L["ff_g"], L["w1"]).astype(jnp.bfloat16),
        "b1": bias_fold(L["ff_b"], L["w1"]),
        "w2": L["w2"].astype(jnp.bfloat16),
    }


# ----------------------------- host-side wrapper --------------------------------------
def _const_spec(shape):
    nd = len(shape)
    return pl.BlockSpec(tuple(shape), lambda bi, idx, _nd=nd: (0,) * _nd)


def conditioner_forward(fp, x, random_frame_indices):
    b, f, c, hh, ww = x.shape
    assert f <= NUM_MEDIA, (f, NUM_MEDIA)     # media_pos_emb[:f]
    p = PATCH
    gh, gw = hh // p, ww // p
    n = f * gh * gw
    cpp = c * p * p

    # glue: patchify into conv-as-matmul rows, each patch flattened as (c, ph, pw)
    patches = x.reshape(b, f, c, gh, p, gw, p).transpose(0, 1, 3, 5, 2, 4, 6)
    patches = patches.reshape(b, n, cpp).astype(jnp.bfloat16)

    # glue: combined static token bias (conv bias + sincos pos-embed + media_pos_emb[:f])
    tok_bias = ((fp["patch_b"] + fp["pos_embed"])[None] + fp["media_pos"][:f]).reshape(n, DIM)

    layer_args = [fp[name] for name in _FOLDED_LAYER_NAMES]

    in_specs = [
        pl.BlockSpec((None, n, cpp), lambda bi, idx: (bi, 0, 0)),     # patches (per batch)
        _const_spec((cpp, DIM)),                                      # patch_w
        _const_spec((n, DIM)),                                        # tok_bias
        _const_spec((NUM_LATENTS, DIM)),                              # latents
    ]
    in_specs += [_const_spec(a.shape) for a in layer_args]
    in_specs += [_const_spec((1, DIM)), _const_spec((1, DIM))]        # final norm g/b

    grid_spec = pltpu.PrefetchScalarGridSpec(
        num_scalar_prefetch=1,
        grid=(b,),
        in_specs=in_specs,
        out_specs=pl.BlockSpec((None, NUM_LATENTS, DIM), lambda bi, idx: (bi, 0, 0)),
    )

    return pl.pallas_call(
        _conditioner_kernel,
        out_shape=jax.ShapeDtypeStruct((b, NUM_LATENTS, DIM), jnp.float32),
        grid_spec=grid_spec,
        compiler_params=pltpu.CompilerParams(dimension_semantics=("parallel",)),
    )(random_frame_indices.astype(jnp.int32),
      patches, fp["patch_w"], tok_bias, fp["latents"],
      *layer_args, fp["norm_g"], fp["norm_b"])


# ----------------------------- pure-JAX reference (correctness, raw params) -----------
def _reference_forward(params, x, random_frame_indices):
    b, f, c, hh, ww = x.shape
    p = PATCH
    gh, gw = hh // p, ww // p
    n = f * gh * gw
    cpp = c * p * p
    t = n + NUM_LATENTS

    patches = x.reshape(b, f, c, gh, p, gw, p).transpose(0, 1, 3, 5, 2, 4, 6).reshape(b, n, cpp)
    tok_bias = ((params["patch_b"] + params["pos_embed"])[None]
                + params["media_pos"][:f]).reshape(n, DIM)
    x_tok = patches @ params["patch_w"] + tok_bias[None]

    col = jnp.arange(t)
    masked = (col[None, :] >= random_frame_indices[:, None] * (PATCH * PATCH)) & (col[None, :] < n)
    mask = jnp.where(masked, NEG_INF, 0.0)[:, None, None, :]          # (b,1,1,t)

    def ln(z, g, bia):
        mu = jnp.mean(z, -1, keepdims=True)
        var = jnp.mean(jnp.square(z - mu), -1, keepdims=True)
        return (z - mu) * jax.lax.rsqrt(var + LN_EPS) * g + bia

    lat = jnp.broadcast_to(params["latents"][None], (b, NUM_LATENTS, DIM))
    L = params["layers"]
    scale = DIM_HEAD ** -0.5
    for l in range(DEPTH):
        xn = ln(x_tok, L["ln_m_g"][l], L["ln_m_b"][l])
        lnl = ln(lat, L["ln_l_g"][l], L["ln_l_b"][l])
        q = lnl @ L["wq"][l] + L["bq"][l]
        kv_in = jnp.concatenate([xn, lnl], axis=1)
        kv = kv_in @ L["wkv"][l] + L["bkv"][l]
        k, v = kv[..., :INNER], kv[..., INNER:]

        def heads(z):
            return z.reshape(b, z.shape[1], HEADS, DIM_HEAD).transpose(0, 2, 1, 3)

        sim = jnp.einsum("bhsd,bhtd->bhst", heads(q) * scale, heads(k)) + mask
        sim = sim - jnp.max(sim, axis=-1, keepdims=True)
        pr = jnp.exp(sim)
        attn = pr / jnp.sum(pr, axis=-1, keepdims=True)
        o = jnp.einsum("bhst,bhtd->bhsd", attn, heads(v))
        o = o.transpose(0, 2, 1, 3).reshape(b, NUM_LATENTS, INNER)
        lat = o @ L["wo"][l] + L["bo"][l] + lat

        xf = ln(lat, L["ff_g"][l], L["ff_b"][l])
        hmid = xf @ L["w1"][l]
        hmid = 0.5 * hmid * (1.0 + jnp.tanh(0.7978845608028654 * (hmid + 0.044715 * hmid ** 3)))
        lat = hmid @ L["w2"][l] + lat

    return ln(lat, params["norm_g"], params["norm_b"])


# ----------------------------- parameter init (deterministic, synthetic, RAW) ---------
def _get_1d_sincos(embed_dim, pos):
    omega = np.arange(embed_dim // 2, dtype=np.float64) / (embed_dim / 2.0)
    omega = 1.0 / 10000 ** omega
    out = np.einsum("m,d->md", pos.reshape(-1), omega)
    return np.concatenate([np.sin(out), np.cos(out)], axis=1)


def _get_2d_sincos_pos_embed(embed_dim, grid_size, base_size, interpolation_scale):
    gh = np.arange(grid_size, dtype=np.float32) / (grid_size / base_size) / interpolation_scale
    gw = np.arange(grid_size, dtype=np.float32) / (grid_size / base_size) / interpolation_scale
    grid = np.meshgrid(gw, gh)                      # w first (matches diffusers PatchEmbed)
    grid = np.stack(grid, axis=0).reshape([2, 1, grid_size, grid_size])
    emb_h = _get_1d_sincos(embed_dim // 2, grid[0])
    emb_w = _get_1d_sincos(embed_dim // 2, grid[1])
    return np.concatenate([emb_h, emb_w], axis=1)   # (grid_size**2, embed_dim)


def init_params(key):
    keys = iter(jax.random.split(key, 80))

    def randn(shape, scale=0.02):
        return scale * jax.random.normal(next(keys), shape, dtype=jnp.float32)

    cpp = IN_CH * PATCH * PATCH
    params = {}
    w_conv = randn((DIM, IN_CH, PATCH, PATCH))                # torch Conv2d weight layout
    params["patch_w"] = w_conv.reshape(DIM, cpp).T            # (c*p*p, DIM) matmul form
    params["patch_b"] = randn((1, DIM))
    params["pos_embed"] = jnp.asarray(
        _get_2d_sincos_pos_embed(DIM, IMG // PATCH, IMG // PATCH, 1), dtype=jnp.float32)
    params["latents"] = randn((NUM_LATENTS, DIM), 1.0)        # nn.Parameter(torch.randn)
    params["media_pos"] = randn((NUM_MEDIA, 1, DIM), 1.0)     # (num_media, 1, dim)

    names = ("ln_m_g", "ln_m_b", "ln_l_g", "ln_l_b", "wq", "bq", "wkv", "bkv",
             "wo", "bo", "ff_g", "ff_b", "w1", "w2")
    per = {name: [] for name in names}
    for _ in range(DEPTH):
        # non-trivial LN affines so the host-side folding path is actually exercised
        per["ln_m_g"].append(1.0 + randn((1, DIM), 0.1))
        per["ln_m_b"].append(randn((1, DIM), 0.1))
        per["ln_l_g"].append(1.0 + randn((1, DIM), 0.1))
        per["ln_l_b"].append(randn((1, DIM), 0.1))
        per["wq"].append(randn((DIM, INNER)))
        per["bq"].append(randn((1, INNER)))
        per["wkv"].append(randn((DIM, 2 * INNER)))            # to_kv, chunk(2, dim=-1)
        per["bkv"].append(randn((1, 2 * INNER)))
        per["wo"].append(randn((INNER, DIM)))
        per["bo"].append(randn((1, DIM)))
        per["ff_g"].append(1.0 + randn((1, DIM), 0.1))
        per["ff_b"].append(randn((1, DIM), 0.1))
        per["w1"].append(randn((DIM, FF_INNER)))
        per["w2"].append(randn((FF_INNER, DIM)))
    params["layers"] = {name: jnp.stack(vals, axis=0) for name, vals in per.items()}
    params["norm_g"] = jnp.ones((1, DIM), jnp.float32)
    params["norm_b"] = jnp.zeros((1, DIM), jnp.float32)
    return params


# ----------------------------- main ----------------------------------------------------
if __name__ == "__main__":
    key = jax.random.PRNGKey(0)
    k_param, k_x = jax.random.split(key)

    params = init_params(k_param)            # raw, module-like parameters
    folded = fold_params(params)             # one-time free host-side folding

    B, F = 2, 2
    x = jax.random.normal(k_x, (B, F, IN_CH, IMG, IMG), dtype=jnp.float32)
    random_frame_indices = jnp.array([0, 1], dtype=jnp.int32)

    fwd = jax.jit(conditioner_forward)
    out = jax.block_until_ready(fwd(folded, x, random_frame_indices))

    assert out.shape == (B, NUM_LATENTS, DIM), out.shape
    assert bool(jnp.all(jnp.isfinite(out)))

    # loose-tolerance parity vs pure-f32 reference (bf16 MXU operands + approx reciprocal)
    ref = _reference_forward(params, x, random_frame_indices)
    max_err = float(jnp.max(jnp.abs(out - ref)))
    assert max_err < 5e-2, max_err

    print("KERNEL_OK")
</pallas_src>

<mosaic_0001>
module attributes {stable_mosaic.version = 11 : i64} {
  func.func @_conditioner_kernel(%arg0: i32, %arg1: memref<2xi32, #tpu.memory_space<smem>>, %arg2: memref<1x128x256xbf16, #tpu.memory_space<vmem>>, %arg3: memref<256x128xbf16, #tpu.memory_space<vmem>>, %arg4: memref<128x128xf32, #tpu.memory_space<vmem>>, %arg5: memref<8x128xf32, #tpu.memory_space<vmem>>, %arg6: memref<2x128x128xbf16, #tpu.memory_space<vmem>>, %arg7: memref<2x1x128xf32, #tpu.memory_space<vmem>>, %arg8: memref<2x128x256xbf16, #tpu.memory_space<vmem>>, %arg9: memref<2x1x256xf32, #tpu.memory_space<vmem>>, %arg10: memref<2x128x256xbf16, #tpu.memory_space<vmem>>, %arg11: memref<2x1x256xf32, #tpu.memory_space<vmem>>, %arg12: memref<2x128x128xbf16, #tpu.memory_space<vmem>>, %arg13: memref<2x1x128xf32, #tpu.memory_space<vmem>>, %arg14: memref<2x128x512xbf16, #tpu.memory_space<vmem>>, %arg15: memref<2x1x512xf32, #tpu.memory_space<vmem>>, %arg16: memref<2x512x128xbf16, #tpu.memory_space<vmem>>, %arg17: memref<1x128xf32, #tpu.memory_space<vmem>>, %arg18: memref<1x128xf32, #tpu.memory_space<vmem>>, %arg19: memref<1x8x128xf32, #tpu.memory_space<vmem>>) attributes {dimension_semantics = [#tpu.dimension_semantics<parallel>], iteration_bounds = array<i64: 2>, scalar_prefetch = 1 : i64, scratch_operands = 0 : i64, tpu.core_type = #tpu.core_type<tc>, window_params = [{transform_indices = @transform_0, window_bounds = array<i64: 1, 128, 256>}, {pipeline_mode = #tpu.pipeline_mode<synchronous>, transform_indices = @transform_1, window_bounds = array<i64: 256, 128>}, {pipeline_mode = #tpu.pipeline_mode<synchronous>, transform_indices = @transform_2, window_bounds = array<i64: 128, 128>}, {pipeline_mode = #tpu.pipeline_mode<synchronous>, transform_indices = @transform_3, window_bounds = array<i64: 8, 128>}, {pipeline_mode = #tpu.pipeline_mode<synchronous>, transform_indices = @transform_4, window_bounds = array<i64: 2, 128, 128>}, {pipeline_mode = #tpu.pipeline_mode<synchronous>, transform_indices = @transform_5, window_bounds = array<i64: 2, 1, 128>}, {pipeline_mode = #tpu.pipeline_mode<synchronous>, transform_indices = @transform_6, window_bounds = array<i64: 2, 128, 256>}, {pipeline_mode = #tpu.pipeline_mode<synchronous>, transform_indices = @transform_7, window_bounds = array<i64: 2, 1, 256>}, {pipeline_mode = #tpu.pipeline_mode<synchronous>, transform_indices = @transform_8, window_bounds = array<i64: 2, 128, 256>}, {pipeline_mode = #tpu.pipeline_mode<synchronous>, transform_indices = @transform_9, window_bounds = array<i64: 2, 1, 256>}, {pipeline_mode = #tpu.pipeline_mode<synchronous>, transform_indices = @transform_10, window_bounds = array<i64: 2, 128, 128>}, {pipeline_mode = #tpu.pipeline_mode<synchronous>, transform_indices = @transform_11, window_bounds = array<i64: 2, 1, 128>}, {pipeline_mode = #tpu.pipeline_mode<synchronous>, transform_indices = @transform_12, window_bounds = array<i64: 2, 128, 512>}, {pipeline_mode = #tpu.pipeline_mode<synchronous>, transform_indices = @transform_13, window_bounds = array<i64: 2, 1, 512>}, {pipeline_mode = #tpu.pipeline_mode<synchronous>, transform_indices = @transform_14, window_bounds = array<i64: 2, 512, 128>}, {pipeline_mode = #tpu.pipeline_mode<synchronous>, transform_indices = @transform_15, window_bounds = array<i64: 1, 128>}, {pipeline_mode = #tpu.pipeline_mode<synchronous>, transform_indices = @transform_16, window_bounds = array<i64: 1, 128>}, {transform_indices = @transform_17, window_bounds = array<i64: 1, 8, 128>}]} {
    %c0 = arith.constant 0 : index
    %c0_0 = arith.constant 0 : index
    %c0_1 = arith.constant 0 : index
    %0 = vector.load %arg2[%c0, %c0_0, %c0_1] : memref<1x128x256xbf16, #tpu.memory_space<vmem>>, vector<1x128x256xbf16>
    %1 = vector.shape_cast %0 : vector<1x128x256xbf16> to vector<128x256xbf16>
    %c0_2 = arith.constant 0 : index
    %c0_3 = arith.constant 0 : index
    %2 = vector.load %arg3[%c0_2, %c0_3] : memref<256x128xbf16, #tpu.memory_space<vmem>>, vector<256x128xbf16>
    %cst = arith.constant dense<0.000000e+00> : vector<128x128xf32>
    %3 = tpu.matmul %1, %2, %cst {dimension_numbers = #tpu.dot_dimension_numbers<[1], [0], [0], [1], [0, 0, 1, 1], [], []>} : vector<128x256xbf16>, vector<256x128xbf16>, vector<128x128xf32> -> vector<128x128xf32>
    %c0_4 = arith.constant 0 : index
    %c0_5 = arith.constant 0 : index
    %4 = vector.load %arg4[%c0_4, %c0_5] : memref<128x128xf32, #tpu.memory_space<vmem>>, vector<128x128xf32>
    %5 = arith.addf %3, %4 : vector<128x128xf32>
    %cst_6 = arith.constant dense<0.000000e+00> : vector<128xf32>
    %6 = vector.multi_reduction <add>, %5, %cst_6 [1] : vector<128x128xf32> to vector<128xf32>
    %7 = vector.shape_cast %6 : vector<128xf32> to vector<128x1xf32>
    %cst_7 = arith.constant 1.280000e+02 : f32
    %8 = vector.broadcast %cst_7 : f32 to vector<128x1xf32>
    %9 = arith.divf %7, %8 : vector<128x1xf32>
    %10 = vector.broadcast %9 : vector<128x1xf32> to vector<128x128xf32>
    %11 = arith.subf %5, %10 : vector<128x128xf32>
    %12 = arith.mulf %11, %11 : vector<128x128xf32>
    %cst_8 = arith.constant dense<0.000000e+00> : vector<128xf32>
    %13 = vector.multi_reduction <add>, %12, %cst_8 [1] : vector<128x128xf32> to vector<128xf32>
    %14 = vector.shape_cast %13 : vector<128xf32> to vector<128x1xf32>
    %cst_9 = arith.constant 1.280000e+02 : f32
    %15 = vector.broadcast %cst_9 : f32 to vector<128x1xf32>
    %16 = arith.divf %14, %15 : vector<128x1xf32>
    %17 = vector.broadcast %9 : vector<128x1xf32> to vector<128x128xf32>
    %18 = arith.subf %5, %17 : vector<128x128xf32>
    %cst_10 = arith.constant 9.99999974E-6 : f32
    %19 = vector.broadcast %cst_10 : f32 to vector<128x1xf32>
    %20 = arith.addf %16, %19 : vector<128x1xf32>
    %21 = math.rsqrt %20 : vector<128x1xf32>
    %22 = vector.broadcast %21 : vector<128x1xf32> to vector<128x128xf32>
    %23 = arith.mulf %18, %22 : vector<128x128xf32>
    %24 = arith.truncf %23 : vector<128x128xf32> to vector<128x128xbf16>
    %25 = arith.index_cast %arg0 : i32 to index
    %26 = memref.load %arg1[%25] : memref<2xi32, #tpu.memory_space<smem>>
    %c64_i32 = arith.constant 64 : i32
    %27 = arith.muli %26, %c64_i32 : i32
    %28 = tpu.iota {dimensions = array<i32: 1>} : vector<32x128xi32>
    %29 = vector.broadcast %27 : i32 to vector<32x128xi32>
    %30 = arith.cmpi sge, %28, %29 : vector<32x128xi32>
    %cst_11 = arith.constant -1.000000e+30 : f32
    %cst_12 = arith.constant 0.000000e+00 : f32
    %31 = vector.broadcast %cst_11 : f32 to vector<32x128xf32>
    %32 = vector.broadcast %cst_12 : f32 to vector<32x128xf32>
    %33 = arith.select %30, %31, %32 : vector<32x128xi1>, vector<32x128xf32>
    %34 = tpu.iota {dimensions = array<i32: 1>} : vector<8x128xi32>
    %c0_i32 = arith.constant 0 : i32
    %35 = vector.broadcast %c0_i32 : i32 to vector<8x128xi32>
    %36 = arith.cmpi sge, %34, %35 : vector<8x128xi32>
    %c32_i32 = arith.constant 32 : i32
    %37 = vector.broadcast %c32_i32 : i32 to vector<8x128xi32>
    %38 = arith.cmpi slt, %34, %37 : vector<8x128xi32>
    %39 = arith.andi %36, %38 : vector<8x128xi1>
    %40 = arith.extui %39 : vector<8x128xi1> to vector<8x128xi32>
    %41 = arith.sitofp %40 : vector<8x128xi32> to vector<8x128xf32>
    %c32_i32_13 = arith.constant 32 : i32
    %42 = vector.broadcast %c32_i32_13 : i32 to vector<8x128xi32>
    %43 = arith.cmpi sge, %34, %42 : vector<8x128xi32>
    %c64_i32_14 = arith.constant 64 : i32
    %44 = vector.broadcast %c64_i32_14 : i32 to vector<8x128xi32>
    %45 = arith.cmpi slt, %34, %44 : vector<8x128xi32>
    %46 = arith.andi %43, %45 : vector<8x128xi1>
    %47 = arith.extui %46 : vector<8x128xi1> to vector<8x128xi32>
    %48 = arith.sitofp %47 : vector<8x128xi32> to vector<8x128xf32>
    %c64_i32_15 = arith.constant 64 : i32
    %49 = vector.broadcast %c64_i32_15 : i32 to vector<8x128xi32>
    %50 = arith.cmpi sge, %34, %49 : vector<8x128xi32>
    %c96_i32 = arith.constant 96 : i32
    %51 = vector.broadcast %c96_i32 : i32 to vector<8x128xi32>
    %52 = arith.cmpi slt, %34, %51 : vector<8x128xi32>
    %53 = arith.andi %50, %52 : vector<8x128xi1>
    %54 = arith.extui %53 : vector<8x128xi1> to vector<8x128xi32>
    %55 = arith.sitofp %54 : vector<8x128xi32> to vector<8x128xf32>
    %c96_i32_16 = arith.constant 96 : i32
    %56 = vector.broadcast %c96_i32_16 : i32 to vector<8x128xi32>
    %57 = arith.cmpi sge, %34, %56 : vector<8x128xi32>
    %c128_i32 = arith.constant 128 : i32
    %58 = vector.broadcast %c128_i32 : i32 to vector<8x128xi32>
    %59 = arith.cmpi slt, %34, %58 : vector<8x128xi32>
    %60 = arith.andi %57, %59 : vector<8x128xi1>
    %61 = arith.extui %60 : vector<8x128xi1> to vector<8x128xi32>
    %62 = arith.sitofp %61 : vector<8x128xi32> to vector<8x128xf32>
    %63 = tpu.concatenate %41, %48, %55, %62 in 0 : vector<8x128xf32>, vector<8x128xf32>, vector<8x128xf32>, vector<8x128xf32> -> vector<32x128xf32>
    %c0_17 = arith.constant 0 : index
    %c0_18 = arith.constant 0 : index
    %64 = vector.load %arg5[%c0_17, %c0_18] : memref<8x128xf32, #tpu.memory_space<vmem>>, vector<8x128xf32>
    %cst_19 = arith.constant dense<0.000000e+00> : vector<8xf32>
    %65 = vector.multi_reduction <add>, %64, %cst_19 [1] : vector<8x128xf32> to vector<8xf32>
    %66 = vector.shape_cast %65 : vector<8xf32> to vector<8x1xf32>
    %cst_20 = arith.constant 1.280000e+02 : f32
    %67 = vector.broadcast %cst_20 : f32 to vector<8x1xf32>
    %68 = arith.divf %66, %67 : vector<8x1xf32>
    %69 = vector.broadcast %68 : vector<8x1xf32> to vector<8x128xf32>
    %70 = arith.subf %64, %69 : vector<8x128xf32>
    %71 = arith.mulf %70, %70 : vector<8x128xf32>
    %cst_21 = arith.constant dense<0.000000e+00> : vector<8xf32>
    %72 = vector.multi_reduction <add>, %71, %cst_21 [1] : vector<8x128xf32> to vector<8xf32>
    %73 = vector.shape_cast %72 : vector<8xf32> to vector<8x1xf32>
    %cst_22 = arith.constant 1.280000e+02 : f32
    %74 = vector.broadcast %cst_22 : f32 to vector<8x1xf32>
    %75 = arith.divf %73, %74 : vector<8x1xf32>
    %76 = vector.broadcast %68 : vector<8x1xf32> to vector<8x128xf32>
    %77 = arith.subf %64, %76 : vector<8x128xf32>
    %cst_23 = arith.constant 9.99999974E-6 : f32
    %78 = vector.broadcast %cst_23 : f32 to vector<8x1xf32>
    %79 = arith.addf %75, %78 : vector<8x1xf32>
    %80 = math.rsqrt %79 : vector<8x1xf32>
    %81 = vector.broadcast %80 : vector<8x1xf32> to vector<8x128xf32>
    %82 = arith.mulf %77, %81 : vector<8x128xf32>
    %83 = arith.truncf %82 : vector<8x128xf32> to vector<8x128xbf16>
    %c0_24 = arith.constant 0 : index
    %c0_25 = arith.constant 0 : index
    %c0_26 = arith.constant 0 : index
    %84 = vector.load %arg6[%c0_24, %c0_25, %c0_26] : memref<2x128x128xbf16, #tpu.memory_space<vmem>>, vector<1x128x128xbf16>
    %85 = vector.shape_cast %84 : vector<1x128x128xbf16> to vector<128x128xbf16>
    %cst_27 = arith.constant dense<0.000000e+00> : vector<8x128xf32>
    %86 = tpu.matmul %83, %85, %cst_27 {dimension_numbers = #tpu.dot_dimension_numbers<[1], [0], [0], [1], [0, 0, 1, 1], [], []>} : vector<8x128xbf16>, vector<128x128xbf16>, vector<8x128xf32> -> vector<8x128xf32>
    %c0_28 = arith.constant 0 : index
    %c0_29 = arith.constant 0 : index
    %c0_30 = arith.constant 0 : index
    %87 = vector.load %arg7[%c0_28, %c0_29, %c0_30] : memref<2x1x128xf32, #tpu.memory_space<vmem>>, vector<1x1x128xf32>
    %88 = vector.shape_cast %87 : vector<1x1x128xf32> to vector<1x128xf32>
    %89 = vector.broadcast %88 : vector<1x128xf32> to vector<8x128xf32>
    %90 = arith.addf %86, %89 : vector<8x128xf32>
    %c0_31 = arith.constant 0 : index
    %c0_32 = arith.constant 0 : index
    %c0_33 = arith.constant 0 : index
    %91 = vector.load %arg8[%c0_31, %c0_32, %c0_33] : memref<2x128x256xbf16, #tpu.memory_space<vmem>>, vector<1x128x256xbf16>
    %92 = vector.shape_cast %91 : vector<1x128x256xbf16> to vector<128x256xbf16>
    %cst_34 = arith.constant dense<0.000000e+00> : vector<128x256xf32>
    %93 = tpu.matmul %24, %92, %cst_34 {dimension_numbers = #tpu.dot_dimension_numbers<[1], [0], [0], [1], [0, 0, 1, 1], [], []>} : vector<128x128xbf16>, vector<128x256xbf16>, vector<128x256xf32> -> vector<128x256xf32>
    %c0_35 = arith.constant 0 : index
    %c0_36 = arith.constant 0 : index
    %c0_37 = arith.constant 0 : index
    %94 = vector.load %arg9[%c0_35, %c0_36, %c0_37] : memref<2x1x256xf32, #tpu.memory_space<vmem>>, vector<1x1x256xf32>
    %95 = vector.shape_cast %94 : vector<1x1x256xf32> to vector<1x256xf32>
    %96 = vector.broadcast %95 : vector<1x256xf32> to vector<128x256xf32>
    %97 = arith.addf %93, %96 : vector<128x256xf32>
    %c0_38 = arith.constant 0 : index
    %c0_39 = arith.constant 0 : index
    %c0_40 = arith.constant 0 : index
    %98 = vector.load %arg10[%c0_38, %c0_39, %c0_40] : memref<2x128x256xbf16, #tpu.memory_space<vmem>>, vector<1x128x256xbf16>
    %99 = vector.shape_cast %98 : vector<1x128x256xbf16> to vector<128x256xbf16>
    %cst_41 = arith.constant dense<0.000000e+00> : vector<8x256xf32>
    %100 = tpu.matmul %83, %99, %cst_41 {dimension_numbers = #tpu.dot_dimension_numbers<[1], [0], [0], [1], [0, 0, 1, 1], [], []>} : vector<8x128xbf16>, vector<128x256xbf16>, vector<8x256xf32> -> vector<8x256xf32>
    %c0_42 = arith.constant 0 : index
    %c0_43 = arith.constant 0 : index
    %c0_44 = arith.constant 0 : index
    %101 = vector.load %arg11[%c0_42, %c0_43, %c0_44] : memref<2x1x256xf32, #tpu.memory_space<vmem>>, vector<1x1x256xf32>
    %102 = vector.shape_cast %101 : vector<1x1x256xf32> to vector<1x256xf32>
    %103 = vector.broadcast %102 : vector<1x256xf32> to vector<8x256xf32>
    %104 = arith.addf %100, %103 : vector<8x256xf32>
    %105 = vector.extract_strided_slice %97 {offsets = [0, 0], sizes = [128, 128], strides = [1, 1]} : vector<128x256xf32> to vector<128x128xf32>
    %106 = vector.extract_strided_slice %97 {offsets = [0, 128], sizes = [128, 128], strides = [1, 1]} : vector<128x256xf32> to vector<128x128xf32>
    %107 = vector.extract_strided_slice %104 {offsets = [0, 0], sizes = [8, 128], strides = [1, 1]} : vector<8x256xf32> to vector<8x128xf32>
    %108 = vector.extract_strided_slice %104 {offsets = [0, 128], sizes = [8, 128], strides = [1, 1]} : vector<8x256xf32> to vector<8x128xf32>
    %109 = tpu.concatenate %90, %90, %90, %90 in 0 : vector<8x128xf32>, vector<8x128xf32>, vector<8x128xf32>, vector<8x128xf32> -> vector<32x128xf32>
    %110 = arith.mulf %109, %63 : vector<32x128xf32>
    %111 = arith.truncf %110 : vector<32x128xf32> to vector<32x128xbf16>
    %112 = arith.truncf %105 : vector<128x128xf32> to vector<128x128xbf16>
    %cst_45 = arith.constant dense<0.000000e+00> : vector<32x128xf32>
    %113 = tpu.matmul %111, %112, %cst_45 {dimension_numbers = #tpu.dot_dimension_numbers<[1], [1], [0], [0], [0, 0, 1, 0], [], []>} : vector<32x128xbf16>, vector<128x128xbf16>, vector<32x128xf32> -> vector<32x128xf32>
    %114 = arith.addf %113, %33 : vector<32x128xf32>
    %115 = arith.truncf %107 : vector<8x128xf32> to vector<8x128xbf16>
    %cst_46 = arith.constant dense<0.000000e+00> : vector<32x8xf32>
    %116 = tpu.matmul %111, %115, %cst_46 {dimension_numbers = #tpu.dot_dimension_numbers<[1], [1], [0], [0], [0, 0, 1, 0], [], []>} : vector<32x128xbf16>, vector<8x128xbf16>, vector<32x8xf32> -> vector<32x8xf32>
    %cst_47 = arith.constant dense<0xFF800000> : vector<32xf32>
    %117 = vector.multi_reduction <maximumf>, %114, %cst_47 [1] : vector<32x128xf32> to vector<32xf32>
    %118 = vector.shape_cast %117 : vector<32xf32> to vector<32x1xf32>
    %cst_48 = arith.constant dense<0xFF800000> : vector<32xf32>
    %119 = vector.multi_reduction <maximumf>, %116, %cst_48 [1] : vector<32x8xf32> to vector<32xf32>
    %120 = vector.shape_cast %119 : vector<32xf32> to vector<32x1xf32>
    %121 = arith.maximumf %118, %120 : vector<32x1xf32>
    %122 = vector.broadcast %121 : vector<32x1xf32> to vector<32x128xf32>
    %123 = arith.subf %114, %122 : vector<32x128xf32>
    %124 = math.exp %123 : vector<32x128xf32>
    %125 = vector.broadcast %121 : vector<32x1xf32> to vector<32x8xf32>
    %126 = arith.subf %116, %125 : vector<32x8xf32>
    %127 = math.exp %126 : vector<32x8xf32>
    %cst_49 = arith.constant dense<0.000000e+00> : vector<32xf32>
    %128 = vector.multi_reduction <add>, %124, %cst_49 [1] : vector<32x128xf32> to vector<32xf32>
    %129 = vector.shape_cast %128 : vector<32xf32> to vector<32x1xf32>
    %cst_50 = arith.constant dense<0.000000e+00> : vector<32xf32>
    %130 = vector.multi_reduction <add>, %127, %cst_50 [1] : vector<32x8xf32> to vector<32xf32>
    %131 = vector.shape_cast %130 : vector<32xf32> to vector<32x1xf32>
    %132 = arith.addf %129, %131 : vector<32x1xf32>
    %133 = tpu.reciprocal %132 {approx = true} : vector<32x1xf32> -> vector<32x1xf32>
    %134 = vector.broadcast %133 : vector<32x1xf32> to vector<32x128xf32>
    %135 = arith.mulf %124, %134 : vector<32x128xf32>
    %136 = arith.truncf %135 : vector<32x128xf32> to vector<32x128xbf16>
    %137 = arith.truncf %106 : vector<128x128xf32> to vector<128x128xbf16>
    %cst_51 = arith.constant dense<0.000000e+00> : vector<32x128xf32>
    %138 = tpu.matmul %136, %137, %cst_51 {dimension_numbers = #tpu.dot_dimension_numbers<[1], [0], [0], [1], [0, 0, 1, 1], [], []>} : vector<32x128xbf16>, vector<128x128xbf16>, vector<32x128xf32> -> vector<32x128xf32>
    %139 = vector.broadcast %133 : vector<32x1xf32> to vector<32x8xf32>
    %140 = arith.mulf %127, %139 : vector<32x8xf32>
    %141 = arith.truncf %140 : vector<32x8xf32> to vector<32x8xbf16>
    %142 = arith.truncf %108 : vector<8x128xf32> to vector<8x128xbf16>
    %cst_52 = arith.constant dense<0.000000e+00> : vector<32x128xf32>
    %143 = tpu.matmul %141, %142, %cst_52 {dimension_numbers = #tpu.dot_dimension_numbers<[1], [0], [0], [1], [0, 0, 1, 1], [], []>} : vector<32x8xbf16>, vector<8x128xbf16>, vector<32x128xf32> -> vector<32x128xf32>
    %144 = arith.addf %138, %143 : vector<32x128xf32>
    %145 = arith.mulf %144, %63 : vector<32x128xf32>
    %146 = vector.extract_strided_slice %145 {offsets = [0, 0], sizes = [8, 128], strides = [1, 1]} : vector<32x128xf32> to vector<8x128xf32>
    %147 = vector.extract_strided_slice %145 {offsets = [8, 0], sizes = [8, 128], strides = [1, 1]} : vector<32x128xf32> to vector<8x128xf32>
    %148 = arith.addf %146, %147 : vector<8x128xf32>
    %149 = vector.extract_strided_slice %145 {offsets = [16, 0], sizes = [8, 128], strides = [1, 1]} : vector<32x128xf32> to vector<8x128xf32>
    %150 = arith.addf %148, %149 : vector<8x128xf32>
    %151 = vector.extract_strided_slice %145 {offsets = [24, 0], sizes = [8, 128], strides = [1, 1]} : vector<32x128xf32> to vector<8x128xf32>
    %152 = arith.addf %150, %151 : vector<8x128xf32>
    %153 = arith.truncf %152 : vector<8x128xf32> to vector<8x128xbf16>
    %c0_53 = arith.constant 0 : index
    %c0_54 = arith.constant 0 : index
    %c0_55 = arith.constant 0 : index
    %154 = vector.load %arg12[%c0_53, %c0_54, %c0_55] : memref<2x128x128xbf16, #tpu.memory_space<vmem>>, vector<1x128x128xbf16>
    %155 = vector.shape_cast %154 : vector<1x128x128xbf16> to vector<128x128xbf16>
    %cst_56 = arith.constant dense<0.000000e+00> : vector<8x128xf32>
    %156 = tpu.matmul %153, %155, %cst_56 {dimension_numbers = #tpu.dot_dimension_numbers<[1], [0], [0], [1], [0, 0, 1, 1], [], []>} : vector<8x128xbf16>, vector<128x128xbf16>, vector<8x128xf32> -> vector<8x128xf32>
    %c0_57 = arith.constant 0 : index
    %c0_58 = arith.constant 0 : index
    %c0_59 = arith.constant 0 : index
    %157 = vector.load %arg13[%c0_57, %c0_58, %c0_59] : memref<2x1x128xf32, #tpu.memory_space<vmem>>, vector<1x1x128xf32>
    %158 = vector.shape_cast %157 : vector<1x1x128xf32> to vector<1x128xf32>
    %159 = vector.broadcast %158 : vector<1x128xf32> to vector<8x128xf32>
    %160 = arith.addf %156, %159 : vector<8x128xf32>
    %161 = arith.addf %160, %64 : vector<8x128xf32>
    %cst_60 = arith.constant dense<0.000000e+00> : vector<8xf32>
    %162 = vector.multi_reduction <add>, %161, %cst_60 [1] : vector<8x128xf32> to vector<8xf32>
    %163 = vector.shape_cast %162 : vector<8xf32> to vector<8x1xf32>
    %cst_61 = arith.constant 1.280000e+02 : f32
    %164 = vector.broadcast %cst_61 : f32 to vector<8x1xf32>
    %165 = arith.divf %163, %164 : vector<8x1xf32>
    %166 = vector.broadcast %165 : vector<8x1xf32> to vector<8x128xf32>
    %167 = arith.subf %161, %166 : vector<8x128xf32>
    %168 = arith.mulf %167, %167 : vector<8x128xf32>
    %cst_62 = arith.constant dense<0.000000e+00> : vector<8xf32>
    %169 = vector.multi_reduction <add>, %168, %cst_62 [1] : vector<8x128xf32> to vector<8xf32>
    %170 = vector.shape_cast %169 : vector<8xf32> to vector<8x1xf32>
    %cst_63 = arith.constant 1.280000e+02 : f32
    %171 = vector.broadcast %cst_63 : f32 to vector<8x1xf32>
    %172 = arith.divf %170, %171 : vector<8x1xf32>
    %173 = vector.broadcast %165 : vector<8x1xf32> to vector<8x128xf32>
    %174 = arith.subf %161, %173 : vector<8x128xf32>
    %cst_64 = arith.constant 9.99999974E-6 : f32
    %175 = vector.broadcast %cst_64 : f32 to vector<8x1xf32>
    %176 = arith.addf %172, %175 : vector<8x1xf32>
    %177 = math.rsqrt %176 : vector<8x1xf32>
    %178 = vector.broadcast %177 : vector<8x1xf32> to vector<8x128xf32>
    %179 = arith.mulf %174, %178 : vector<8x128xf32>
    %180 = arith.truncf %179 : vector<8x128xf32> to vector<8x128xbf16>
    %c0_65 = arith.constant 0 : index
    %c0_66 = arith.constant 0 : index
    %c0_67 = arith.constant 0 : index
    %181 = vector.load %arg14[%c0_65, %c0_66, %c0_67] : memref<2x128x512xbf16, #tpu.memory_space<vmem>>, vector<1x128x512xbf16>
    %182 = vector.shape_cast %181 : vector<1x128x512xbf16> to vector<128x512xbf16>
    %cst_68 = arith.constant dense<0.000000e+00> : vector<8x512xf32>
    %183 = tpu.matmul %180, %182, %cst_68 {dimension_numbers = #tpu.dot_dimension_numbers<[1], [0], [0], [1], [0, 0, 1, 1], [], []>} : vector<8x128xbf16>, vector<128x512xbf16>, vector<8x512xf32> -> vector<8x512xf32>
    %c0_69 = arith.constant 0 : index
    %c0_70 = arith.constant 0 : index
    %c0_71 = arith.constant 0 : index
    %184 = vector.load %arg15[%c0_69, %c0_70, %c0_71] : memref<2x1x512xf32, #tpu.memory_space<vmem>>, vector<1x1x512xf32>
    %185 = vector.shape_cast %184 : vector<1x1x512xf32> to vector<1x512xf32>
    %186 = vector.broadcast %185 : vector<1x512xf32> to vector<8x512xf32>
    %187 = arith.addf %183, %186 : vector<8x512xf32>
    %cst_72 = arith.constant 5.000000e-01 : f32
    %188 = vector.broadcast %cst_72 : f32 to vector<8x512xf32>
    %189 = arith.mulf %188, %187 : vector<8x512xf32>
    %cst_73 = arith.constant 4.471500e-02 : f32
    %190 = vector.broadcast %cst_73 : f32 to vector<8x512xf32>
    %191 = arith.mulf %190, %187 : vector<8x512xf32>
    %192 = arith.mulf %191, %187 : vector<8x512xf32>
    %193 = arith.mulf %192, %187 : vector<8x512xf32>
    %194 = arith.addf %187, %193 : vector<8x512xf32>
    %cst_74 = arith.constant 0.797884583 : f32
    %195 = vector.broadcast %cst_74 : f32 to vector<8x512xf32>
    %196 = arith.mulf %195, %194 : vector<8x512xf32>
    %197 = math.tanh %196 : vector<8x512xf32>
    %cst_75 = arith.constant 1.000000e+00 : f32
    %198 = vector.broadcast %cst_75 : f32 to vector<8x512xf32>
    %199 = arith.addf %198, %197 : vector<8x512xf32>
    %200 = arith.mulf %189, %199 : vector<8x512xf32>
    %201 = arith.truncf %200 : vector<8x512xf32> to vector<8x512xbf16>
    %c0_76 = arith.constant 0 : index
    %c0_77 = arith.constant 0 : index
    %c0_78 = arith.constant 0 : index
    %202 = vector.load %arg16[%c0_76, %c0_77, %c0_78] : memref<2x512x128xbf16, #tpu.memory_space<vmem>>, vector<1x512x128xbf16>
    %203 = vector.shape_cast %202 : vector<1x512x128xbf16> to vector<512x128xbf16>
    %cst_79 = arith.constant dense<0.000000e+00> : vector<8x128xf32>
    %204 = tpu.matmul %201, %203, %cst_79 {dimension_numbers = #tpu.dot_dimension_numbers<[1], [0], [0], [1], [0, 0, 1, 1], [], []>} : vector<8x512xbf16>, vector<512x128xbf16>, vector<8x128xf32> -> vector<8x128xf32>
    %205 = arith.addf %204, %161 : vector<8x128xf32>
    %cst_80 = arith.constant dense<0.000000e+00> : vector<8xf32>
    %206 = vector.multi_reduction <add>, %205, %cst_80 [1] : vector<8x128xf32> to vector<8xf32>
    %207 = vector.shape_cast %206 : vector<8xf32> to vector<8x1xf32>
    %cst_81 = arith.constant 1.280000e+02 : f32
    %208 = vector.broadcast %cst_81 : f32 to vector<8x1xf32>
    %209 = arith.divf %207, %208 : vector<8x1xf32>
    %210 = vector.broadcast %209 : vector<8x1xf32> to vector<8x128xf32>
    %211 = arith.subf %205, %210 : vector<8x128xf32>
    %212 = arith.mulf %211, %211 : vector<8x128xf32>
    %cst_82 = arith.constant dense<0.000000e+00> : vector<8xf32>
    %213 = vector.multi_reduction <add>, %212, %cst_82 [1] : vector<8x128xf32> to vector<8xf32>
    %214 = vector.shape_cast %213 : vector<8xf32> to vector<8x1xf32>
    %cst_83 = arith.constant 1.280000e+02 : f32
    %215 = vector.broadcast %cst_83 : f32 to vector<8x1xf32>
    %216 = arith.divf %214, %215 : vector<8x1xf32>
    %217 = vector.broadcast %209 : vector<8x1xf32> to vector<8x128xf32>
    %218 = arith.subf %205, %217 : vector<8x128xf32>
    %cst_84 = arith.constant 9.99999974E-6 : f32
    %219 = vector.broadcast %cst_84 : f32 to vector<8x1xf32>
    %220 = arith.addf %216, %219 : vector<8x1xf32>
    %221 = math.rsqrt %220 : vector<8x1xf32>
    %222 = vector.broadcast %221 : vector<8x1xf32> to vector<8x128xf32>
    %223 = arith.mulf %218, %222 : vector<8x128xf32>
    %224 = arith.truncf %223 : vector<8x128xf32> to vector<8x128xbf16>
    %c1 = arith.constant 1 : index
    %c0_85 = arith.constant 0 : index
    %c0_86 = arith.constant 0 : index
    %225 = vector.load %arg6[%c1, %c0_85, %c0_86] : memref<2x128x128xbf16, #tpu.memory_space<vmem>>, vector<1x128x128xbf16>
    %226 = vector.shape_cast %225 : vector<1x128x128xbf16> to vector<128x128xbf16>
    %cst_87 = arith.constant dense<0.000000e+00> : vector<8x128xf32>
    %227 = tpu.matmul %224, %226, %cst_87 {dimension_numbers = #tpu.dot_dimension_numbers<[1], [0], [0], [1], [0, 0, 1, 1], [], []>} : vector<8x128xbf16>, vector<128x128xbf16>, vector<8x128xf32> -> vector<8x128xf32>
    %c1_88 = arith.constant 1 : index
    %c0_89 = arith.constant 0 : index
    %c0_90 = arith.constant 0 : index
    %228 = vector.load %arg7[%c1_88, %c0_89, %c0_90] : memref<2x1x128xf32, #tpu.memory_space<vmem>>, vector<1x1x128xf32>
    %229 = vector.shape_cast %228 : vector<1x1x128xf32> to vector<1x128xf32>
    %230 = vector.broadcast %229 : vector<1x128xf32> to vector<8x128xf32>
    %231 = arith.addf %227, %230 : vector<8x128xf32>
    %c1_91 = arith.constant 1 : index
    %c0_92 = arith.constant 0 : index
    %c0_93 = arith.constant 0 : index
    %232 = vector.load %arg8[%c1_91, %c0_92, %c0_93] : memref<2x128x256xbf16, #tpu.memory_space<vmem>>, vector<1x128x256xbf16>
    %233 = vector.shape_cast %232 : vector<1x128x256xbf16> to vector<128x256xbf16>
    %cst_94 = arith.constant dense<0.000000e+00> : vector<128x256xf32>
    %234 = tpu.matmul %24, %233, %cst_94 {dimension_numbers = #tpu.dot_dimension_numbers<[1], [0], [0], [1], [0, 0, 1, 1], [], []>} : vector<128x128xbf16>, vector<128x256xbf16>, vector<128x256xf32> -> vector<128x256xf32>
    %c1_95 = arith.constant 1 : index
    %c0_96 = arith.constant 0 : index
    %c0_97 = arith.constant 0 : index
    %235 = vector.load %arg9[%c1_95, %c0_96, %c0_97] : memref<2x1x256xf32, #tpu.memory_space<vmem>>, vector<1x1x256xf32>
    %236 = vector.shape_cast %235 : vector<1x1x256xf32> to vector<1x256xf32>
    %237 = vector.broadcast %236 : vector<1x256xf32> to vector<128x256xf32>
    %238 = arith.addf %234, %237 : vector<128x256xf32>
    %c1_98 = arith.constant 1 : index
    %c0_99 = arith.constant 0 : index
    %c0_100 = arith.constant 0 : index
    %239 = vector.load %arg10[%c1_98, %c0_99, %c0_100] : memref<2x128x256xbf16, #tpu.memory_space<vmem>>, vector<1x128x256xbf16>
    %240 = vector.shape_cast %239 : vector<1x128x256xbf16> to vector<128x256xbf16>
    %cst_101 = arith.constant dense<0.000000e+00> : vector<8x256xf32>
    %241 = tpu.matmul %224, %240, %cst_101 {dimension_numbers = #tpu.dot_dimension_numbers<[1], [0], [0], [1], [0, 0, 1, 1], [], []>} : vector<8x128xbf16>, vector<128x256xbf16>, vector<8x256xf32> -> vector<8x256xf32>
    %c1_102 = arith.constant 1 : index
    %c0_103 = arith.constant 0 : index
    %c0_104 = arith.constant 0 : index
    %242 = vector.load %arg11[%c1_102, %c0_103, %c0_104] : memref<2x1x256xf32, #tpu.memory_space<vmem>>, vector<1x1x256xf32>
    %243 = vector.shape_cast %242 : vector<1x1x256xf32> to vector<1x256xf32>
    %244 = vector.broadcast %243 : vector<1x256xf32> to vector<8x256xf32>
    %245 = arith.addf %241, %244 : vector<8x256xf32>
    %246 = vector.extract_strided_slice %238 {offsets = [0, 0], sizes = [128, 128], strides = [1, 1]} : vector<128x256xf32> to vector<128x128xf32>
    %247 = vector.extract_strided_slice %238 {offsets = [0, 128], sizes = [128, 128], strides = [1, 1]} : vector<128x256xf32> to vector<128x128xf32>
    %248 = vector.extract_strided_slice %245 {offsets = [0, 0], sizes = [8, 128], strides = [1, 1]} : vector<8x256xf32> to vector<8x128xf32>
    %249 = vector.extract_strided_slice %245 {offsets = [0, 128], sizes = [8, 128], strides = [1, 1]} : vector<8x256xf32> to vector<8x128xf32>
    %250 = tpu.concatenate %231, %231, %231, %231 in 0 : vector<8x128xf32>, vector<8x128xf32>, vector<8x128xf32>, vector<8x128xf32> -> vector<32x128xf32>
    %251 = arith.mulf %250, %63 : vector<32x128xf32>
    %252 = arith.truncf %251 : vector<32x128xf32> to vector<32x128xbf16>
    %253 = arith.truncf %246 : vector<128x128xf32> to vector<128x128xbf16>
    %cst_105 = arith.constant dense<0.000000e+00> : vector<32x128xf32>
    %254 = tpu.matmul %252, %253, %cst_105 {dimension_numbers = #tpu.dot_dimension_numbers<[1], [1], [0], [0], [0, 0, 1, 0], [], []>} : vector<32x128xbf16>, vector<128x128xbf16>, vector<32x128xf32> -> vector<32x128xf32>
    %255 = arith.addf %254, %33 : vector<32x128xf32>
    %256 = arith.truncf %248 : vector<8x128xf32> to vector<8x128xbf16>
    %cst_106 = arith.constant dense<0.000000e+00> : vector<32x8xf32>
    %257 = tpu.matmul %252, %256, %cst_106 {dimension_numbers = #tpu.dot_dimension_numbers<[1], [1], [0], [0], [0, 0, 1, 0], [], []>} : vector<32x128xbf16>, vector<8x128xbf16>, vector<32x8xf32> -> vector<32x8xf32>
    %cst_107 = arith.constant dense<0xFF800000> : vector<32xf32>
    %258 = vector.multi_reduction <maximumf>, %255, %cst_107 [1] : vector<32x128xf32> to vector<32xf32>
    %259 = vector.shape_cast %258 : vector<32xf32> to vector<32x1xf32>
    %cst_108 = arith.constant dense<0xFF800000> : vector<32xf32>
    %260 = vector.multi_reduction <maximumf>, %257, %cst_108 [1] : vector<32x8xf32> to vector<32xf32>
    %261 = vector.shape_cast %260 : vector<32xf32> to vector<32x1xf32>
    %262 = arith.maximumf %259, %261 : vector<32x1xf32>
    %263 = vector.broadcast %262 : vector<32x1xf32> to vector<32x128xf32>
    %264 = arith.subf %255, %263 : vector<32x128xf32>
    %265 = math.exp %264 : vector<32x128xf32>
    %266 = vector.broadcast %262 : vector<32x1xf32> to vector<32x8xf32>
    %267 = arith.subf %257, %266 : vector<32x8xf32>
    %268 = math.exp %267 : vector<32x8xf32>
    %cst_109 = arith.constant dense<0.000000e+00> : vector<32xf32>
    %269 = vector.multi_reduction <add>, %265, %cst_109 [1] : vector<32x128xf32> to vector<32xf32>
    %270 = vector.shape_cast %269 : vector<32xf32> to vector<32x1xf32>
    %cst_110 = arith.constant dense<0.000000e+00> : vector<32xf32>
    %271 = vector.multi_reduction <add>, %268, %cst_110 [1] : vector<32x8xf32> to vector<32xf32>
    %272 = vector.shape_cast %271 : vector<32xf32> to vector<32x1xf32>
    %273 = arith.addf %270, %272 : vector<32x1xf32>
    %274 = tpu.reciprocal %273 {approx = true} : vector<32x1xf32> -> vector<32x1xf32>
    %275 = vector.broadcast %274 : vector<32x1xf32> to vector<32x128xf32>
    %276 = arith.mulf %265, %275 : vector<32x128xf32>
    %277 = arith.truncf %276 : vector<32x128xf32> to vector<32x128xbf16>
    %278 = arith.truncf %247 : vector<128x128xf32> to vector<128x128xbf16>
    %cst_111 = arith.constant dense<0.000000e+00> : vector<32x128xf32>
    %279 = tpu.matmul %277, %278, %cst_111 {dimension_numbers = #tpu.dot_dimension_numbers<[1], [0], [0], [1], [0, 0, 1, 1], [], []>} : vector<32x128xbf16>, vector<128x128xbf16>, vector<32x128xf32> -> vector<32x128xf32>
    %280 = vector.broadcast %274 : vector<32x1xf32> to vector<32x8xf32>
    %281 = arith.mulf %268, %280 : vector<32x8xf32>
    %282 = arith.truncf %281 : vector<32x8xf32> to vector<32x8xbf16>
    %283 = arith.truncf %249 : vector<8x128xf32> to vector<8x128xbf16>
    %cst_112 = arith.constant dense<0.000000e+00> : vector<32x128xf32>
    %284 = tpu.matmul %282, %283, %cst_112 {dimension_numbers = #tpu.dot_dimension_numbers<[1], [0], [0], [1], [0, 0, 1, 1], [], []>} : vector<32x8xbf16>, vector<8x128xbf16>, vector<32x128xf32> -> vector<32x128xf32>
    %285 = arith.addf %279, %284 : vector<32x128xf32>
    %286 = arith.mulf %285, %63 : vector<32x128xf32>
    %287 = vector.extract_strided_slice %286 {offsets = [0, 0], sizes = [8, 128], strides = [1, 1]} : vector<32x128xf32> to vector<8x128xf32>
    %288 = vector.extract_strided_slice %286 {offsets = [8, 0], sizes = [8, 128], strides = [1, 1]} : vector<32x128xf32> to vector<8x128xf32>
    %289 = arith.addf %287, %288 : vector<8x128xf32>
    %290 = vector.extract_strided_slice %286 {offsets = [16, 0], sizes = [8, 128], strides = [1, 1]} : vector<32x128xf32> to vector<8x128xf32>
    %291 = arith.addf %289, %290 : vector<8x128xf32>
    %292 = vector.extract_strided_slice %286 {offsets = [24, 0], sizes = [8, 128], strides = [1, 1]} : vector<32x128xf32> to vector<8x128xf32>
    %293 = arith.addf %291, %292 : vector<8x128xf32>
    %294 = arith.truncf %293 : vector<8x128xf32> to vector<8x128xbf16>
    %c1_113 = arith.constant 1 : index
    %c0_114 = arith.constant 0 : index
    %c0_115 = arith.constant 0 : index
    %295 = vector.load %arg12[%c1_113, %c0_114, %c0_115] : memref<2x128x128xbf16, #tpu.memory_space<vmem>>, vector<1x128x128xbf16>
    %296 = vector.shape_cast %295 : vector<1x128x128xbf16> to vector<128x128xbf16>
    %cst_116 = arith.constant dense<0.000000e+00> : vector<8x128xf32>
    %297 = tpu.matmul %294, %296, %cst_116 {dimension_numbers = #tpu.dot_dimension_numbers<[1], [0], [0], [1], [0, 0, 1, 1], [], []>} : vector<8x128xbf16>, vector<128x128xbf16>, vector<8x128xf32> -> vector<8x128xf32>
    %c1_117 = arith.constant 1 : index
    %c0_118 = arith.constant 0 : index
    %c0_119 = arith.constant 0 : index
    %298 = vector.load %arg13[%c1_117, %c0_118, %c0_119] : memref<2x1x128xf32, #tpu.memory_space<vmem>>, vector<1x1x128xf32>
    %299 = vector.shape_cast %298 : vector<1x1x128xf32> to vector<1x128xf32>
    %300 = vector.broadcast %299 : vector<1x128xf32> to vector<8x128xf32>
    %301 = arith.addf %297, %300 : vector<8x128xf32>
    %302 = arith.addf %301, %205 : vector<8x128xf32>
    %cst_120 = arith.constant dense<0.000000e+00> : vector<8xf32>
    %303 = vector.multi_reduction <add>, %302, %cst_120 [1] : vector<8x128xf32> to vector<8xf32>
    %304 = vector.shape_cast %303 : vector<8xf32> to vector<8x1xf32>
    %cst_121 = arith.constant 1.280000e+02 : f32
    %305 = vector.broadcast %cst_121 : f32 to vector<8x1xf32>
    %306 = arith.divf %304, %305 : vector<8x1xf32>
    %307 = vector.broadcast %306 : vector<8x1xf32> to vector<8x128xf32>
    %308 = arith.subf %302, %307 : vector<8x128xf32>
    %309 = arith.mulf %308, %308 : vector<8x128xf32>
    %cst_122 = arith.constant dense<0.000000e+00> : vector<8xf32>
    %310 = vector.multi_reduction <add>, %309, %cst_122 [1] : vector<8x128xf32> to vector<8xf32>
    %311 = vector.shape_cast %310 : vector<8xf32> to vector<8x1xf32>
    %cst_123 = arith.constant 1.280000e+02 : f32
    %312 = vector.broadcast %cst_123 : f32 to vector<8x1xf32>
    %313 = arith.divf %311, %312 : vector<8x1xf32>
    %314 = vector.broadcast %306 : vector<8x1xf32> to vector<8x128xf32>
    %315 = arith.subf %302, %314 : vector<8x128xf32>
    %cst_124 = arith.constant 9.99999974E-6 : f32
    %316 = vector.broadcast %cst_124 : f32 to vector<8x1xf32>
    %317 = arith.addf %313, %316 : vector<8x1xf32>
    %318 = math.rsqrt %317 : vector<8x1xf32>
    %319 = vector.broadcast %318 : vector<8x1xf32> to vector<8x128xf32>
    %320 = arith.mulf %315, %319 : vector<8x128xf32>
    %321 = arith.truncf %320 : vector<8x128xf32> to vector<8x128xbf16>
    %c1_125 = arith.constant 1 : index
    %c0_126 = arith.constant 0 : index
    %c0_127 = arith.constant 0 : index
    %322 = vector.load %arg14[%c1_125, %c0_126, %c0_127] : memref<2x128x512xbf16, #tpu.memory_space<vmem>>, vector<1x128x512xbf16>
    %323 = vector.shape_cast %322 : vector<1x128x512xbf16> to vector<128x512xbf16>
    %cst_128 = arith.constant dense<0.000000e+00> : vector<8x512xf32>
    %324 = tpu.matmul %321, %323, %cst_128 {dimension_numbers = #tpu.dot_dimension_numbers<[1], [0], [0], [1], [0, 0, 1, 1], [], []>} : vector<8x128xbf16>, vector<128x512xbf16>, vector<8x512xf32> -> vector<8x512xf32>
    %c1_129 = arith.constant 1 : index
    %c0_130 = arith.constant 0 : index
    %c0_131 = arith.constant 0 : index
    %325 = vector.load %arg15[%c1_129, %c0_130, %c0_131] : memref<2x1x512xf32, #tpu.memory_space<vmem>>, vector<1x1x512xf32>
    %326 = vector.shape_cast %325 : vector<1x1x512xf32> to vector<1x512xf32>
    %327 = vector.broadcast %326 : vector<1x512xf32> to vector<8x512xf32>
    %328 = arith.addf %324, %327 : vector<8x512xf32>
    %cst_132 = arith.constant 5.000000e-01 : f32
    %329 = vector.broadcast %cst_132 : f32 to vector<8x512xf32>
    %330 = arith.mulf %329, %328 : vector<8x512xf32>
    %cst_133 = arith.constant 4.471500e-02 : f32
    %331 = vector.broadcast %cst_133 : f32 to vector<8x512xf32>
    %332 = arith.mulf %331, %328 : vector<8x512xf32>
    %333 = arith.mulf %332, %328 : vector<8x512xf32>
    %334 = arith.mulf %333, %328 : vector<8x512xf32>
    %335 = arith.addf %328, %334 : vector<8x512xf32>
    %cst_134 = arith.constant 0.797884583 : f32
    %336 = vector.broadcast %cst_134 : f32 to vector<8x512xf32>
    %337 = arith.mulf %336, %335 : vector<8x512xf32>
    %338 = math.tanh %337 : vector<8x512xf32>
    %cst_135 = arith.constant 1.000000e+00 : f32
    %339 = vector.broadcast %cst_135 : f32 to vector<8x512xf32>
    %340 = arith.addf %339, %338 : vector<8x512xf32>
    %341 = arith.mulf %330, %340 : vector<8x512xf32>
    %342 = arith.truncf %341 : vector<8x512xf32> to vector<8x512xbf16>
    %c1_136 = arith.constant 1 : index
    %c0_137 = arith.constant 0 : index
    %c0_138 = arith.constant 0 : index
    %343 = vector.load %arg16[%c1_136, %c0_137, %c0_138] : memref<2x512x128xbf16, #tpu.memory_space<vmem>>, vector<1x512x128xbf16>
    %344 = vector.shape_cast %343 : vector<1x512x128xbf16> to vector<512x128xbf16>
    %cst_139 = arith.constant dense<0.000000e+00> : vector<8x128xf32>
    %345 = tpu.matmul %342, %344, %cst_139 {dimension_numbers = #tpu.dot_dimension_numbers<[1], [0], [0], [1], [0, 0, 1, 1], [], []>} : vector<8x512xbf16>, vector<512x128xbf16>, vector<8x128xf32> -> vector<8x128xf32>
    %346 = arith.addf %345, %302 : vector<8x128xf32>
    %c0_140 = arith.constant 0 : index
    %c0_141 = arith.constant 0 : index
    %347 = vector.load %arg17[%c0_140, %c0_141] : memref<1x128xf32, #tpu.memory_space<vmem>>, vector<1x128xf32>
    %c0_142 = arith.constant 0 : index
    %c0_143 = arith.constant 0 : index
    %348 = vector.load %arg18[%c0_142, %c0_143] : memref<1x128xf32, #tpu.memory_space<vmem>>, vector<1x128xf32>
    %cst_144 = arith.constant dense<0.000000e+00> : vector<8xf32>
    %349 = vector.multi_reduction <add>, %346, %cst_144 [1] : vector<8x128xf32> to vector<8xf32>
    %350 = vector.shape_cast %349 : vector<8xf32> to vector<8x1xf32>
    %cst_145 = arith.constant 1.280000e+02 : f32
    %351 = vector.broadcast %cst_145 : f32 to vector<8x1xf32>
    %352 = arith.divf %350, %351 : vector<8x1xf32>
    %353 = vector.broadcast %352 : vector<8x1xf32> to vector<8x128xf32>
    %354 = arith.subf %346, %353 : vector<8x128xf32>
    %355 = arith.mulf %354, %354 : vector<8x128xf32>
    %cst_146 = arith.constant dense<0.000000e+00> : vector<8xf32>
    %356 = vector.multi_reduction <add>, %355, %cst_146 [1] : vector<8x128xf32> to vector<8xf32>
    %357 = vector.shape_cast %356 : vector<8xf32> to vector<8x1xf32>
    %cst_147 = arith.constant 1.280000e+02 : f32
    %358 = vector.broadcast %cst_147 : f32 to vector<8x1xf32>
    %359 = arith.divf %357, %358 : vector<8x1xf32>
    %360 = vector.broadcast %352 : vector<8x1xf32> to vector<8x128xf32>
    %361 = arith.subf %346, %360 : vector<8x128xf32>
    %cst_148 = arith.constant 9.99999974E-6 : f32
    %362 = vector.broadcast %cst_148 : f32 to vector<8x1xf32>
    %363 = arith.addf %359, %362 : vector<8x1xf32>
    %364 = math.rsqrt %363 : vector<8x1xf32>
    %365 = vector.broadcast %364 : vector<8x1xf32> to vector<8x128xf32>
    %366 = arith.mulf %361, %365 : vector<8x128xf32>
    %367 = vector.broadcast %347 : vector<1x128xf32> to vector<8x128xf32>
    %368 = arith.mulf %366, %367 : vector<8x128xf32>
    %369 = vector.broadcast %348 : vector<1x128xf32> to vector<8x128xf32>
    %370 = arith.addf %368, %369 : vector<8x128xf32>
    %c0_149 = arith.constant 0 : index
    %c0_150 = arith.constant 0 : index
    %c0_151 = arith.constant 0 : index
    %371 = vector.load %arg19[%c0_149, %c0_150, %c0_151] : memref<1x8x128xf32, #tpu.memory_space<vmem>>, vector<1x8x128xf32>
    %372 = vector.shape_cast %371 : vector<1x8x128xf32> to vector<8x128xf32>
    %373 = vector.shape_cast %370 : vector<8x128xf32> to vector<1x8x128xf32>
    tpu.vector_store %arg19[%c0_149, %c0_150, %c0_151], %373 {strides = array<i32>} : memref<1x8x128xf32, #tpu.memory_space<vmem>>, vector<1x8x128xf32>,
    return
  }
  func.func @transform_0(%arg0: i32, %arg1: memref<2xi32, #tpu.memory_space<smem>>) -> (i32, i32, i32) {
    %c0_i32 = arith.constant 0 : i32
    %c0_i32_0 = arith.constant 0 : i32
    %c0_i32_1 = arith.constant 0 : i32
    return %arg0, %c0_i32, %c0_i32_0 : i32, i32, i32
  }
  func.func @transform_1(%arg0: i32, %arg1: memref<2xi32, #tpu.memory_space<smem>>) -> (i32, i32) {
    %c0_i32 = arith.constant 0 : i32
    %c0_i32_0 = arith.constant 0 : i32
    %c0_i32_1 = arith.constant 0 : i32
    return %c0_i32, %c0_i32_0 : i32, i32
  }
  func.func @transform_2(%arg0: i32, %arg1: memref<2xi32, #tpu.memory_space<smem>>) -> (i32, i32) {
    %c0_i32 = arith.constant 0 : i32
    %c0_i32_0 = arith.constant 0 : i32
    %c0_i32_1 = arith.constant 0 : i32
    return %c0_i32, %c0_i32_0 : i32, i32
  }
  func.func @transform_3(%arg0: i32, %arg1: memref<2xi32, #tpu.memory_space<smem>>) -> (i32, i32) {
    %c0_i32 = arith.constant 0 : i32
    %c0_i32_0 = arith.constant 0 : i32
    %c0_i32_1 = arith.constant 0 : i32
    return %c0_i32, %c0_i32_0 : i32, i32
  }
  func.func @transform_4(%arg0: i32, %arg1: memref<2xi32, #tpu.memory_space<smem>>) -> (i32, i32, i32) {
    %c0_i32 = arith.constant 0 : i32
    %c0_i32_0 = arith.constant 0 : i32
    %c0_i32_1 = arith.constant 0 : i32
    %c0_i32_2 = arith.constant 0 : i32
    return %c0_i32, %c0_i32_0, %c0_i32_1 : i32, i32, i32
  }
  func.func @transform_5(%arg0: i32, %arg1: memref<2xi32, #tpu.memory_space<smem>>) -> (i32, i32, i32) {
    %c0_i32 = arith.constant 0 : i32
    %c0_i32_0 = arith.constant 0 : i32
    %c0_i32_1 = arith.constant 0 : i32
    %c0_i32_2 = arith.constant 0 : i32
    return %c0_i32, %c0_i32_0, %c0_i32_1 : i32, i32, i32
  }
  func.func @transform_6(%arg0: i32, %arg1: memref<2xi32, #tpu.memory_space<smem>>) -> (i32, i32, i32) {
    %c0_i32 = arith.constant 0 : i32
    %c0_i32_0 = arith.constant 0 : i32
    %c0_i32_1 = arith.constant 0 : i32
    %c0_i32_2 = arith.constant 0 : i32
    return %c0_i32, %c0_i32_0, %c0_i32_1 : i32, i32, i32
  }
  func.func @transform_7(%arg0: i32, %arg1: memref<2xi32, #tpu.memory_space<smem>>) -> (i32, i32, i32) {
    %c0_i32 = arith.constant 0 : i32
    %c0_i32_0 = arith.constant 0 : i32
    %c0_i32_1 = arith.constant 0 : i32
    %c0_i32_2 = arith.constant 0 : i32
    return %c0_i32, %c0_i32_0, %c0_i32_1 : i32, i32, i32
  }
  func.func @transform_8(%arg0: i32, %arg1: memref<2xi32, #tpu.memory_space<smem>>) -> (i32, i32, i32) {
    %c0_i32 = arith.constant 0 : i32
    %c0_i32_0 = arith.constant 0 : i32
    %c0_i32_1 = arith.constant 0 : i32
    %c0_i32_2 = arith.constant 0 : i32
    return %c0_i32, %c0_i32_0, %c0_i32_1 : i32, i32, i32
  }
  func.func @transform_9(%arg0: i32, %arg1: memref<2xi32, #tpu.memory_space<smem>>) -> (i32, i32, i32) {
    %c0_i32 = arith.constant 0 : i32
    %c0_i32_0 = arith.constant 0 : i32
    %c0_i32_1 = arith.constant 0 : i32
    %c0_i32_2 = arith.constant 0 : i32
    return %c0_i32, %c0_i32_0, %c0_i32_1 : i32, i32, i32
  }
  func.func @transform_10(%arg0: i32, %arg1: memref<2xi32, #tpu.memory_space<smem>>) -> (i32, i32, i32) {
    %c0_i32 = arith.constant 0 : i32
    %c0_i32_0 = arith.constant 0 : i32
    %c0_i32_1 = arith.constant 0 : i32
    %c0_i32_2 = arith.constant 0 : i32
    return %c0_i32, %c0_i32_0, %c0_i32_1 : i32, i32, i32
  }
  func.func @transform_11(%arg0: i32, %arg1: memref<2xi32, #tpu.memory_space<smem>>) -> (i32, i32, i32) {
    %c0_i32 = arith.constant 0 : i32
    %c0_i32_0 = arith.constant 0 : i32
    %c0_i32_1 = arith.constant 0 : i32
    %c0_i32_2 = arith.constant 0 : i32
    return %c0_i32, %c0_i32_0, %c0_i32_1 : i32, i32, i32
  }
  func.func @transform_12(%arg0: i32, %arg1: memref<2xi32, #tpu.memory_space<smem>>) -> (i32, i32, i32) {
    %c0_i32 = arith.constant 0 : i32
    %c0_i32_0 = arith.constant 0 : i32
    %c0_i32_1 = arith.constant 0 : i32
    %c0_i32_2 = arith.constant 0 : i32
    return %c0_i32, %c0_i32_0, %c0_i32_1 : i32, i32, i32
  }
  func.func @transform_13(%arg0: i32, %arg1: memref<2xi32, #tpu.memory_space<smem>>) -> (i32, i32, i32) {
    %c0_i32 = arith.constant 0 : i32
    %c0_i32_0 = arith.constant 0 : i32
    %c0_i32_1 = arith.constant 0 : i32
    %c0_i32_2 = arith.constant 0 : i32
    return %c0_i32, %c0_i32_0, %c0_i32_1 : i32, i32, i32
  }
  func.func @transform_14(%arg0: i32, %arg1: memref<2xi32, #tpu.memory_space<smem>>) -> (i32, i32, i32) {
    %c0_i32 = arith.constant 0 : i32
    %c0_i32_0 = arith.constant 0 : i32
    %c0_i32_1 = arith.constant 0 : i32
    %c0_i32_2 = arith.constant 0 : i32
    return %c0_i32, %c0_i32_0, %c0_i32_1 : i32, i32, i32
  }
  func.func @transform_15(%arg0: i32, %arg1: memref<2xi32, #tpu.memory_space<smem>>) -> (i32, i32) {
    %c0_i32 = arith.constant 0 : i32
    %c0_i32_0 = arith.constant 0 : i32
    %c0_i32_1 = arith.constant 0 : i32
    return %c0_i32, %c0_i32_0 : i32, i32
  }
  func.func @transform_16(%arg0: i32, %arg1: memref<2xi32, #tpu.memory_space<smem>>) -> (i32, i32) {
    %c0_i32 = arith.constant 0 : i32
    %c0_i32_0 = arith.constant 0 : i32
    %c0_i32_1 = arith.constant 0 : i32
    return %c0_i32, %c0_i32_0 : i32, i32
  }
  func.func @transform_17(%arg0: i32, %arg1: memref<2xi32, #tpu.memory_space<smem>>) -> (i32, i32, i32) {
    %c0_i32 = arith.constant 0 : i32
    %c0_i32_0 = arith.constant 0 : i32
    %c0_i32_1 = arith.constant 0 : i32
    return %arg0, %c0_i32, %c0_i32_0 : i32, i32, i32
  }
}

</mosaic_0001>

<llo_original>
// kernel: conditioner_forward.1
$region0: #{conditioner_forward.1}
  #allocation0 [shape = 'u32[]', space=smem, size = 0x4, offset = 0x4, fixed_abs, tag = 'smem constant byte address 0x4 - core index']
  #allocation1 [shape = 'u32[72,128]{1,0:T(1,128)}', space=vmem, size = 0x9000, scoped, tag = 'internal scratch']
  #allocation2 [shape = 's32[1]{0}', space=sflag, size = 0x4, scoped, tag = 'scoped memory for conditioner_forward.1']
  #allocation3 [shape = 'u8[512]{0}', space=smem, size = 0x200, scoped, tag = 'prefetched SMEM operand 0']
  %s0 = inlined_call_operand.vmem [shape: s32[2], index: 0, kind: input, shape index: {}]
  %s1 = inlined_call_operand.vmem [shape: bf16[2,128,256], index: 1, kind: input, shape index: {}]
  %s2 = inlined_call_operand.vmem [shape: bf16[256,128], index: 2, kind: input, shape index: {}]
  %s3 = inlined_call_operand.vmem [shape: f32[128,128], index: 3, kind: input, shape index: {}]
  %s4 = inlined_call_operand.vmem [shape: f32[8,128], index: 4, kind: input, shape index: {}]
  %s5 = inlined_call_operand.vmem [shape: bf16[2,128,128], index: 5, kind: input, shape index: {}]
  %s6 = inlined_call_operand.vmem [shape: f32[2,1,128], index: 6, kind: input, shape index: {}]
  %s7 = inlined_call_operand.vmem [shape: bf16[2,128,256], index: 7, kind: input, shape index: {}]
  %s8 = inlined_call_operand.vmem [shape: f32[2,1,256], index: 8, kind: input, shape index: {}]
  %s9 = inlined_call_operand.vmem [shape: bf16[2,128,256], index: 9, kind: input, shape index: {}]
  %s10 = inlined_call_operand.vmem [shape: f32[2,1,256], index: 10, kind: input, shape index: {}]
  %s11 = inlined_call_operand.vmem [shape: bf16[2,128,128], index: 11, kind: input, shape index: {}]
  %s12 = inlined_call_operand.vmem [shape: f32[2,1,128], index: 12, kind: input, shape index: {}]
  %s13 = inlined_call_operand.vmem [shape: bf16[2,128,512], index: 13, kind: input, shape index: {}]
  %s14 = inlined_call_operand.vmem [shape: f32[2,1,512], index: 14, kind: input, shape index: {}]
  %s15 = inlined_call_operand.vmem [shape: bf16[2,512,128], index: 15, kind: input, shape index: {}]
  %s16 = inlined_call_operand.vmem [shape: f32[1,128], index: 16, kind: input, shape index: {}]
  %s17 = inlined_call_operand.vmem [shape: f32[1,128], index: 17, kind: input, shape index: {}]
  %s18 = inlined_call_operand.hbm [shape: f32[2,8,128], index: 18, kind: output, shape index: {}]
  %s19 = sld [smem:[#allocation0]]
  $region101: #{conditioner_forward.1} parent=0
    _
  %s21 = ssub.s32 1, %s19
  %s22 = scalar_select 0, %s21, %s19
  %s24 = sshll.u32 %s0, 4
  %s25 = int_to_ptr.vmem [resolvable:$true] %s24
  %27 = dma.vmem_to_smem %s25, 16, [#allocation3], [#allocation2]
  %29 = dma.done [#allocation2], 16
  %30 = sfence
  $region1: #{conditioner_forward.1} parent=0
    #allocation4 [shape = 'u8[8192]{0}', space=vmem, size = 0x2000, scoped, tag = 'output window, operand 0']
    #allocation5 [shape = 's32[2]{0}', space=sflag, size = 0x8, scoped, tag = 'scoped memory for conditioner_forward.1']
    %31 = vsyncpa [#allocation5], 0
    %s32 = scalar_lea.sflag [#allocation5], 1
    %33 = vsyncpa %s32, 0
    loop: start=0, step=1, limit=4
    $region2: #{conditioner_forward.1} parent=1 // loop_pre_header
      _
    $region3: #{conditioner_forward.1} parent=1 // loop_header
      %s35 = sphi 0, %s39
      %p36 = scmp.ge.s32.totalorder %s35, 4
      %s45 = sphi 0, %s47
      %s48 = sphi 0, %s45
      %s49 = sphi 0, %s48
      %s65 = sphi 0, %s49
      %s69 = sphi 0, %s69
      %s71 = sphi 0, %s69
      %s72 = sphi 0, %s71
      %s86 = sphi 0, %s72
      %s90 = sphi 0, %s90
      %s92 = sphi 0, %s90
      %s93 = sphi 0, %s92
      %s107 = sphi 0, %s93
      %s111 = sphi 0, %s111
      %s113 = sphi 0, %s111
      %s114 = sphi 0, %s113
      %s128 = sphi 0, %s114
      %s132 = sphi 0, %s132
      %s134 = sphi 0, %s132
      %s135 = sphi 0, %s134
      %s149 = sphi 0, %s135
      %s153 = sphi 0, %s153
      %s155 = sphi 0, %s153
      %s156 = sphi 0, %s155
      %s170 = sphi 0, %s156
      %s174 = sphi 0, %s174
      %s176 = sphi 0, %s174
      %s177 = sphi 0, %s176
      %s191 = sphi 0, %s177
      %s195 = sphi 0, %s195
      %s197 = sphi 0, %s195
      %s198 = sphi 0, %s197
      %s212 = sphi 0, %s198
      %s216 = sphi 0, %s216
      %s218 = sphi 0, %s216
      %s219 = sphi 0, %s218
      %s233 = sphi 0, %s219
      %s237 = sphi 0, %s237
      %s239 = sphi 0, %s237
      %s240 = sphi 0, %s239
      %s254 = sphi 0, %s240
      %s258 = sphi 0, %s258
      %s260 = sphi 0, %s258
      %s261 = sphi 0, %s260
      %s275 = sphi 0, %s261
      %s279 = sphi 0, %s279
      %s281 = sphi 0, %s279
      %s282 = sphi 0, %s281
      %s296 = sphi 0, %s282
      %s300 = sphi 0, %s300
      %s302 = sphi 0, %s300
      %s303 = sphi 0, %s302
      %s317 = sphi 0, %s303
      %s321 = sphi 0, %s321
      %s323 = sphi 0, %s321
      %s324 = sphi 0, %s323
      %s338 = sphi 0, %s324
      %s342 = sphi 0, %s342
      %s344 = sphi 0, %s342
      %s345 = sphi 0, %s344
      %s359 = sphi 0, %s345
      %s363 = sphi 0, %s363
      %s365 = sphi 0, %s363
      %s366 = sphi 0, %s365
      %s380 = sphi 0, %s366
      %s384 = sphi 0, %s384
      %s386 = sphi 0, %s384
      %s387 = sphi 0, %s386
      %s401 = sphi 0, %s387
      %s407 = sphi 0, %s409
      %s410 = sphi 0, %s407
      %s411 = sphi 0, %s410
      %s427 = sphi 0, %s411
    $region4: #{conditioner_forward.1} parent=1 // loop_header_branch
      %38 = sbr.rel (%p36) target = $region8
    $region5: #{conditioner_forward.1} parent=1 // loop_body
      %s40 = ssub.s32 %s35, 1
      %s41 = ssub.s32 %s35, 2
      %s42 = sadd.s32 %s35, 1
      %s43 = ssub.s32 %s35, %s42
      %p44 = scmp.eq.s32.totalorder %s43, 0
      %s46 = sadd.s32 %s45, 1
      %s47 = scalar_select %p44, %s45, %s46
      %p50 = pneg %p44
      %p51 = scmp.eq.s32.totalorder %s35, 1
      %p52 = por %p50, %p51
      %p53 = scmp.ne.s32.totalorder %s45, %s48
      %p54 = scmp.eq.s32.totalorder %s35, 0
      %p55 = por %p53, %p54
      %p56 = scmp.ne.s32.totalorder %s45, %s48
      %p57 = scmp.eq.s32.totalorder %s40, 1
      %p58 = por %p56, %p57
      %p59 = scmp.ne.s32.totalorder %s48, %s49
      %p60 = scmp.eq.s32.totalorder %s40, 0
      %p61 = por %p59, %p60
      %p62 = scmp.ne.s32.totalorder %s48, %s49
      %p63 = scmp.eq.s32.totalorder %s41, 1
      %p64 = por %p62, %p63
      %p66 = scmp.ne.s32.totalorder %s49, %s65
      %p67 = scmp.eq.s32.totalorder %s41, 0
      %p68 = por %p66, %p67
      %s70 = sadd.s32 %s69, 1
      %p73 = scmp.eq.s32.totalorder %s35, 1
      %p74 = scmp.ne.s32.totalorder %s69, %s71
      %p75 = scmp.eq.s32.totalorder %s35, 0
      %p76 = por %p74, %p75
      %p77 = scmp.ne.s32.totalorder %s69, %s71
      %p78 = scmp.eq.s32.totalorder %s40, 1
      %p79 = por %p77, %p78
      %p80 = scmp.ne.s32.totalorder %s71, %s72
      %p81 = scmp.eq.s32.totalorder %s40, 0
      %p82 = por %p80, %p81
      %p83 = scmp.ne.s32.totalorder %s71, %s72
      %p84 = scmp.eq.s32.totalorder %s41, 1
      %p85 = por %p83, %p84
      %p87 = scmp.ne.s32.totalorder %s72, %s86
      %p88 = scmp.eq.s32.totalorder %s41, 0
      %p89 = por %p87, %p88
      %s91 = sadd.s32 %s90, 1
      %p94 = scmp.eq.s32.totalorder %s35, 1
      %p95 = scmp.ne.s32.totalorder %s90, %s92
      %p96 = scmp.eq.s32.totalorder %s35, 0
      %p97 = por %p95, %p96
      %p98 = scmp.ne.s32.totalorder %s90, %s92
      %p99 = scmp.eq.s32.totalorder %s40, 1
      %p100 = por %p98, %p99
      %p101 = scmp.ne.s32.totalorder %s92, %s93
      %p102 = scmp.eq.s32.totalorder %s40, 0
      %p103 = por %p101, %p102
      %p104 = scmp.ne.s32.totalorder %s92, %s93
      %p105 = scmp.eq.s32.totalorder %s41, 1
      %p106 = por %p104, %p105
      %p108 = scmp.ne.s32.totalorder %s93, %s107
      %p109 = scmp.eq.s32.totalorder %s41, 0
      %p110 = por %p108, %p109
      %s112 = sadd.s32 %s111, 1
      %p115 = scmp.eq.s32.totalorder %s35, 1
      %p116 = scmp.ne.s32.totalorder %s111, %s113
      %p117 = scmp.eq.s32.totalorder %s35, 0
      %p118 = por %p116, %p117
      %p119 = scmp.ne.s32.totalorder %s111, %s113
      %p120 = scmp.eq.s32.totalorder %s40, 1
      %p121 = por %p119, %p120
      %p122 = scmp.ne.s32.totalorder %s113, %s114
      %p123 = scmp.eq.s32.totalorder %s40, 0
      %p124 = por %p122, %p123
      %p125 = scmp.ne.s32.totalorder %s113, %s114
      %p126 = scmp.eq.s32.totalorder %s41, 1
      %p127 = por %p125, %p126
      %p129 = scmp.ne.s32.totalorder %s114, %s128
      %p130 = scmp.eq.s32.totalorder %s41, 0
      %p131 = por %p129, %p130
      %s133 = sadd.s32 %s132, 1
      %p136 = scmp.eq.s32.totalorder %s35, 1
      %p137 = scmp.ne.s32.totalorder %s132, %s134
      %p138 = scmp.eq.s32.totalorder %s35, 0
      %p139 = por %p137, %p138
      %p140 = scmp.ne.s32.totalorder %s132, %s134
      %p141 = scmp.eq.s32.totalorder %s40, 1
      %p142 = por %p140, %p141
      %p143 = scmp.ne.s32.totalorder %s134, %s135
      %p144 = scmp.eq.s32.totalorder %s40, 0
      %p145 = por %p143, %p144
      %p146 = scmp.ne.s32.totalorder %s134, %s135
      %p147 = scmp.eq.s32.totalorder %s41, 1
      %p148 = por %p146, %p147
      %p150 = scmp.ne.s32.totalorder %s135, %s149
      %p151 = scmp.eq.s32.totalorder %s41, 0
      %p152 = por %p150, %p151
      %s154 = sadd.s32 %s153, 1
      %p157 = scmp.eq.s32.totalorder %s35, 1
      %p158 = scmp.ne.s32.totalorder %s153, %s155
      %p159 = scmp.eq.s32.totalorder %s35, 0
      %p160 = por %p158, %p159
      %p161 = scmp.ne.s32.totalorder %s153, %s155
      %p162 = scmp.eq.s32.totalorder %s40, 1
      %p163 = por %p161, %p162
      %p164 = scmp.ne.s32.totalorder %s155, %s156
      %p165 = scmp.eq.s32.totalorder %s40, 0
      %p166 = por %p164, %p165
      %p167 = scmp.ne.s32.totalorder %s155, %s156
      %p168 = scmp.eq.s32.totalorder %s41, 1
      %p169 = por %p167, %p168
      %p171 = scmp.ne.s32.totalorder %s156, %s170
      %p172 = scmp.eq.s32.totalorder %s41, 0
      %p173 = por %p171, %p172
      %s175 = sadd.s32 %s174, 1
      %p178 = scmp.eq.s32.totalorder %s35, 1
      %p179 = scmp.ne.s32.totalorder %s174, %s176
      %p180 = scmp.eq.s32.totalorder %s35, 0
      %p181 = por %p179, %p180
      %p182 = scmp.ne.s32.totalorder %s174, %s176
      %p183 = scmp.eq.s32.totalorder %s40, 1
      %p184 = por %p182, %p183
      %p185 = scmp.ne.s32.totalorder %s176, %s177
      %p186 = scmp.eq.s32.totalorder %s40, 0
      %p187 = por %p185, %p186
      %p188 = scmp.ne.s32.totalorder %s176, %s177
      %p189 = scmp.eq.s32.totalorder %s41, 1
      %p190 = por %p188, %p189
      %p192 = scmp.ne.s32.totalorder %s177, %s191
      %p193 = scmp.eq.s32.totalorder %s41, 0
      %p194 = por %p192, %p193
      %s196 = sadd.s32 %s195, 1
      %p199 = scmp.eq.s32.totalorder %s35, 1
      %p200 = scmp.ne.s32.totalorder %s195, %s197
      %p201 = scmp.eq.s32.totalorder %s35, 0
      %p202 = por %p200, %p201
      %p203 = scmp.ne.s32.totalorder %s195, %s197
      %p204 = scmp.eq.s32.totalorder %s40, 1
      %p205 = por %p203, %p204
      %p206 = scmp.ne.s32.totalorder %s197, %s198
      %p207 = scmp.eq.s32.totalorder %s40, 0
      %p208 = por %p206, %p207
      %p209 = scmp.ne.s32.totalorder %s197, %s198
      %p210 = scmp.eq.s32.totalorder %s41, 1
      %p211 = por %p209, %p210
      %p213 = scmp.ne.s32.totalorder %s198, %s212
      %p214 = scmp.eq.s32.totalorder %s41, 0
      %p215 = por %p213, %p214
      %s217 = sadd.s32 %s216, 1
      %p220 = scmp.eq.s32.totalorder %s35, 1
      %p221 = scmp.ne.s32.totalorder %s216, %s218
      %p222 = scmp.eq.s32.totalorder %s35, 0
      %p223 = por %p221, %p222
      %p224 = scmp.ne.s32.totalorder %s216, %s218
      %p225 = scmp.eq.s32.totalorder %s40, 1
      %p226 = por %p224, %p225
      %p227 = scmp.ne.s32.totalorder %s218, %s219
      %p228 = scmp.eq.s32.totalorder %s40, 0
      %p229 = por %p227, %p228
      %p230 = scmp.ne.s32.totalorder %s218, %s219
      %p231 = scmp.eq.s32.totalorder %s41, 1
      %p232 = por %p230, %p231
      %p234 = scmp.ne.s32.totalorder %s219, %s233
      %p235 = scmp.eq.s32.totalorder %s41, 0
      %p236 = por %p234, %p235
      %s238 = sadd.s32 %s237, 1
      %p241 = scmp.eq.s32.totalorder %s35, 1
      %p242 = scmp.ne.s32.totalorder %s237, %s239
      %p243 = scmp.eq.s32.totalorder %s35, 0
      %p244 = por %p242, %p243
      %p245 = scmp.ne.s32.totalorder %s237, %s239
      %p246 = scmp.eq.s32.totalorder %s40, 1
      %p247 = por %p245, %p246
      %p248 = scmp.ne.s32.totalorder %s239, %s240
      %p249 = scmp.eq.s32.totalorder %s40, 0
      %p250 = por %p248, %p249
      %p251 = scmp.ne.s32.totalorder %s239, %s240
      %p252 = scmp.eq.s32.totalorder %s41, 1
      %p253 = por %p251, %p252
      %p255 = scmp.ne.s32.totalorder %s240, %s254
      %p256 = scmp.eq.s32.totalorder %s41, 0
      %p257 = por %p255, %p256
      %s259 = sadd.s32 %s258, 1
      %p262 = scmp.eq.s32.totalorder %s35, 1
      %p263 = scmp.ne.s32.totalorder %s258, %s260
      %p264 = scmp.eq.s32.totalorder %s35, 0
      %p265 = por %p263, %p264
      %p266 = scmp.ne.s32.totalorder %s258, %s260
      %p267 = scmp.eq.s32.totalorder %s40, 1
      %p268 = por %p266, %p267
      %p269 = scmp.ne.s32.totalorder %s260, %s261
      %p270 = scmp.eq.s32.totalorder %s40, 0
      %p271 = por %p269, %p270
      %p272 = scmp.ne.s32.totalorder %s260, %s261
      %p273 = scmp.eq.s32.totalorder %s41, 1
      %p274 = por %p272, %p273
      %p276 = scmp.ne.s32.totalorder %s261, %s275
      %p277 = scmp.eq.s32.totalorder %s41, 0
      %p278 = por %p276, %p277
      %s280 = sadd.s32 %s279, 1
      %p283 = scmp.eq.s32.totalorder %s35, 1
      %p284 = scmp.ne.s32.totalorder %s279, %s281
      %p285 = scmp.eq.s32.totalorder %s35, 0
      %p286 = por %p284, %p285
      %p287 = scmp.ne.s32.totalorder %s279, %s281
      %p288 = scmp.eq.s32.totalorder %s40, 1
      %p289 = por %p287, %p288
      %p290 = scmp.ne.s32.totalorder %s281, %s282
      %p291 = scmp.eq.s32.totalorder %s40, 0
      %p292 = por %p290, %p291
      %p293 = scmp.ne.s32.totalorder %s281, %s282
      %p294 = scmp.eq.s32.totalorder %s41, 1
      %p295 = por %p293, %p294
      %p297 = scmp.ne.s32.totalorder %s282, %s296
      %p298 = scmp.eq.s32.totalorder %s41, 0
      %p299 = por %p297, %p298
      %s301 = sadd.s32 %s300, 1
      %p304 = scmp.eq.s32.totalorder %s35, 1
      %p305 = scmp.ne.s32.totalorder %s300, %s302
      %p306 = scmp.eq.s32.totalorder %s35, 0
      %p307 = por %p305, %p306
      %p308 = scmp.ne.s32.totalorder %s300, %s302
      %p309 = scmp.eq.s32.totalorder %s40, 1
      %p310 = por %p308, %p309
      %p311 = scmp.ne.s32.totalorder %s302, %s303
      %p312 = scmp.eq.s32.totalorder %s40, 0
      %p313 = por %p311, %p312
      %p314 = scmp.ne.s32.totalorder %s302, %s303
      %p315 = scmp.eq.s32.totalorder %s41, 1
      %p316 = por %p314, %p315
      %p318 = scmp.ne.s32.totalorder %s303, %s317
      %p319 = scmp.eq.s32.totalorder %s41, 0
      %p320 = por %p318, %p319
      %s322 = sadd.s32 %s321, 1
      %p325 = scmp.eq.s32.totalorder %s35, 1
      %p326 = scmp.ne.s32.totalorder %s321, %s323
      %p327 = scmp.eq.s32.totalorder %s35, 0
      %p328 = por %p326, %p327
      %p329 = scmp.ne.s32.totalorder %s321, %s323
      %p330 = scmp.eq.s32.totalorder %s40, 1
      %p331 = por %p329, %p330
      %p332 = scmp.ne.s32.totalorder %s323, %s324
      %p333 = scmp.eq.s32.totalorder %s40, 0
      %p334 = por %p332, %p333
      %p335 = scmp.ne.s32.totalorder %s323, %s324
      %p336 = scmp.eq.s32.totalorder %s41, 1
      %p337 = por %p335, %p336
      %p339 = scmp.ne.s32.totalorder %s324, %s338
      %p340 = scmp.eq.s32.totalorder %s41, 0
      %p341 = por %p339, %p340
      %s343 = sadd.s32 %s342, 1
      %p346 = scmp.eq.s32.totalorder %s35, 1
      %p347 = scmp.ne.s32.totalorder %s342, %s344
      %p348 = scmp.eq.s32.totalorder %s35, 0
      %p349 = por %p347, %p348
      %p350 = scmp.ne.s32.totalorder %s342, %s344
      %p351 = scmp.eq.s32.totalorder %s40, 1
      %p352 = por %p350, %p351
      %p353 = scmp.ne.s32.totalorder %s344, %s345
      %p354 = scmp.eq.s32.totalorder %s40, 0
      %p355 = por %p353, %p354
      %p356 = scmp.ne.s32.totalorder %s344, %s345
      %p357 = scmp.eq.s32.totalorder %s41, 1
      %p358 = por %p356, %p357
      %p360 = scmp.ne.s32.totalorder %s345, %s359
      %p361 = scmp.eq.s32.totalorder %s41, 0
      %p362 = por %p360, %p361
      %s364 = sadd.s32 %s363, 1
      %p367 = scmp.eq.s32.totalorder %s35, 1
      %p368 = scmp.ne.s32.totalorder %s363, %s365
      %p369 = scmp.eq.s32.totalorder %s35, 0
      %p370 = por %p368, %p369
      %p371 = scmp.ne.s32.totalorder %s363, %s365
      %p372 = scmp.eq.s32.totalorder %s40, 1
      %p373 = por %p371, %p372
      %p374 = scmp.ne.s32.totalorder %s365, %s366
      %p375 = scmp.eq.s32.totalorder %s40, 0
      %p376 = por %p374, %p375
      %p377 = scmp.ne.s32.totalorder %s365, %s366
      %p378 = scmp.eq.s32.totalorder %s41, 1
      %p379 = por %p377, %p378
      %p381 = scmp.ne.s32.totalorder %s366, %s380
      %p382 = scmp.eq.s32.totalorder %s41, 0
      %p383 = por %p381, %p382
      %s385 = sadd.s32 %s384, 1
      %p388 = scmp.eq.s32.totalorder %s35, 1
      %p389 = scmp.ne.s32.totalorder %s384, %s386
      %p390 = scmp.eq.s32.totalorder %s35, 0
      %p391 = por %p389, %p390
      %p392 = scmp.ne.s32.totalorder %s384, %s386
      %p393 = scmp.eq.s32.totalorder %s40, 1
      %p394 = por %p392, %p393
      %p395 = scmp.ne.s32.totalorder %s386, %s387
      %p396 = scmp.eq.s32.totalorder %s40, 0
      %p397 = por %p395, %p396
      %p398 = scmp.ne.s32.totalorder %s386, %s387
      %p399 = scmp.eq.s32.totalorder %s41, 1
      %p400 = por %p398, %p399
      %p402 = scmp.ne.s32.totalorder %s387, %s401
      %p403 = scmp.eq.s32.totalorder %s41, 0
      %p404 = por %p402, %p403
      %s405 = ssub.s32 %s35, %s42
      %p406 = scmp.eq.s32.totalorder %s405, 0
      %s408 = sadd.s32 %s407, 1
      %s409 = scalar_select %p406, %s407, %s408
      %p412 = pneg %p406
      %p413 = scmp.eq.s32.totalorder %s35, 1
      %p414 = por %p412, %p413
      %p415 = scmp.ne.s32.totalorder %s407, %s410
      %p416 = scmp.eq.s32.totalorder %s35, 0
      %p417 = por %p415, %p416
      %p418 = scmp.ne.s32.totalorder %s407, %s410
      %p419 = scmp.eq.s32.totalorder %s40, 1
      %p420 = por %p418, %p419
      %p421 = scmp.ne.s32.totalorder %s410, %s411
      %p422 = scmp.eq.s32.totalorder %s40, 0
      %p423 = por %p421, %p422
      %p424 = scmp.ne.s32.totalorder %s410, %s411
      %p425 = scmp.eq.s32.totalorder %s41, 1
      %p426 = por %p424, %p425
      %p428 = scmp.ne.s32.totalorder %s411, %s427
      %p429 = scmp.eq.s32.totalorder %s41, 0
      %p430 = por %p428, %p429
      %p431 = scmp.le.s32.totalorder 1, %s35
      %p432 = scmp.lt.s32.totalorder %s35, 3
      %p433 = pnand %p431, %p432
      %p434 = pneg %p433
      // Predicated region
      $region9: #{conditioner_forward.1} parent=5 // pred_check
        _
      $region10: #{conditioner_forward.1} parent=5 // pred_check_branch
        %436 = sbr.rel (%p433) target = $region12
      $region11: #{conditioner_forward.1} parent=5 // pred_region
        %s437 = ssub.s32 %s35, 1
        // Predicated region
        $region13: #{conditioner_forward.1} parent=11 // pred_check
          %p438 = pneg %p82
        $region14: #{conditioner_forward.1} parent=11 // pred_check_branch
          %440 = sbr.rel (%p438) target = $region16
        $region15: #{conditioner_forward.1} parent=11 // pred_region
          _
        $region16: #{conditioner_forward.1} parent=11 // pred_fallthru
          _
        // Predicated region
        $region17: #{conditioner_forward.1} parent=11 // pred_check
          %p441 = pneg %p103
        $region18: #{conditioner_forward.1} parent=11 // pred_check_branch
          %443 = sbr.rel (%p441) target = $region20
        $region19: #{conditioner_forward.1} parent=11 // pred_region
          _
        $region20: #{conditioner_forward.1} parent=11 // pred_fallthru
          _
        // Predicated region
        $region21: #{conditioner_forward.1} parent=11 // pred_check
          %p444 = pneg %p124
        $region22: #{conditioner_forward.1} parent=11 // pred_check_branch
          %446 = sbr.rel (%p444) target = $region24
        $region23: #{conditioner_forward.1} parent=11 // pred_region
          _
        $region24: #{conditioner_forward.1} parent=11 // pred_fallthru
          _
        // Predicated region
        $region25: #{conditioner_forward.1} parent=11 // pred_check
          %p447 = pneg %p145
        $region26: #{conditioner_forward.1} parent=11 // pred_check_branch
          %449 = sbr.rel (%p447) target = $region28
        $region27: #{conditioner_forward.1} parent=11 // pred_region
          _
        $region28: #{conditioner_forward.1} parent=11 // pred_fallthru
          _
        // Predicated region
        $region29: #{conditioner_forward.1} parent=11 // pred_check
          %p450 = pneg %p166
        $region30: #{conditioner_forward.1} parent=11 // pred_check_branch
          %452 = sbr.rel (%p450) target = $region32
        $region31: #{conditioner_forward.1} parent=11 // pred_region
          _
        $region32: #{conditioner_forward.1} parent=11 // pred_fallthru
          _
        // Predicated region
        $region33: #{conditioner_forward.1} parent=11 // pred_check
          %p453 = pneg %p187
        $region34: #{conditioner_forward.1} parent=11 // pred_check_branch
          %455 = sbr.rel (%p453) target = $region36
        $region35: #{conditioner_forward.1} parent=11 // pred_region
          _
        $region36: #{conditioner_forward.1} parent=11 // pred_fallthru
          _
        // Predicated region
        $region37: #{conditioner_forward.1} parent=11 // pred_check
          %p456 = pneg %p208
        $region38: #{conditioner_forward.1} parent=11 // pred_check_branch
          %458 = sbr.rel (%p456) target = $region40
        $region39: #{conditioner_forward.1} parent=11 // pred_region
          _
        $region40: #{conditioner_forward.1} parent=11 // pred_fallthru
          _
        // Predicated region
        $region41: #{conditioner_forward.1} parent=11 // pred_check
          %p459 = pneg %p229
        $region42: #{conditioner_forward.1} parent=11 // pred_check_branch
          %461 = sbr.rel (%p459) target = $region44
        $region43: #{conditioner_forward.1} parent=11 // pred_region
          _
        $region44: #{conditioner_forward.1} parent=11 // pred_fallthru
          _
        // Predicated region
        $region45: #{conditioner_forward.1} parent=11 // pred_check
          %p462 = pneg %p250
        $region46: #{conditioner_forward.1} parent=11 // pred_check_branch
          %464 = sbr.rel (%p462) target = $region48
        $region47: #{conditioner_forward.1} parent=11 // pred_region
          _
        $region48: #{conditioner_forward.1} parent=11 // pred_fallthru
          _
        // Predicated region
        $region49: #{conditioner_forward.1} parent=11 // pred_check
          %p465 = pneg %p271
        $region50: #{conditioner_forward.1} parent=11 // pred_check_branch
          %467 = sbr.rel (%p465) target = $region52
        $region51: #{conditioner_forward.1} parent=11 // pred_region
          _
        $region52: #{conditioner_forward.1} parent=11 // pred_fallthru
          _
        // Predicated region
        $region53: #{conditioner_forward.1} parent=11 // pred_check
          %p468 = pneg %p292
        $region54: #{conditioner_forward.1} parent=11 // pred_check_branch
          %470 = sbr.rel (%p468) target = $region56
        $region55: #{conditioner_forward.1} parent=11 // pred_region
          _
        $region56: #{conditioner_forward.1} parent=11 // pred_fallthru
          _
        // Predicated region
        $region57: #{conditioner_forward.1} parent=11 // pred_check
          %p471 = pneg %p313
        $region58: #{conditioner_forward.1} parent=11 // pred_check_branch
          %473 = sbr.rel (%p471) target = $region60
        $region59: #{conditioner_forward.1} parent=11 // pred_region
          _
        $region60: #{conditioner_forward.1} parent=11 // pred_fallthru
          _
        // Predicated region
        $region61: #{conditioner_forward.1} parent=11 // pred_check
          %p474 = pneg %p334
        $region62: #{conditioner_forward.1} parent=11 // pred_check_branch
          %476 = sbr.rel (%p474) target = $region64
        $region63: #{conditioner_forward.1} parent=11 // pred_region
          _
        $region64: #{conditioner_forward.1} parent=11 // pred_fallthru
          _
        // Predicated region
        $region65: #{conditioner_forward.1} parent=11 // pred_check
          %p477 = pneg %p355
        $region66: #{conditioner_forward.1} parent=11 // pred_check_branch
          %479 = sbr.rel (%p477) target = $region68
        $region67: #{conditioner_forward.1} parent=11 // pred_region
          _
        $region68: #{conditioner_forward.1} parent=11 // pred_fallthru
          _
        // Predicated region
        $region69: #{conditioner_forward.1} parent=11 // pred_check
          %p480 = pneg %p376
        $region70: #{conditioner_forward.1} parent=11 // pred_check_branch
          %482 = sbr.rel (%p480) target = $region72
        $region71: #{conditioner_forward.1} parent=11 // pred_region
          _
        $region72: #{conditioner_forward.1} parent=11 // pred_fallthru
          _
        // Predicated region
        $region73: #{conditioner_forward.1} parent=11 // pred_check
          %p483 = pneg %p397
        $region74: #{conditioner_forward.1} parent=11 // pred_check_branch
          %485 = sbr.rel (%p483) target = $region76
        $region75: #{conditioner_forward.1} parent=11 // pred_region
          _
        $region76: #{conditioner_forward.1} parent=11 // pred_fallthru
          _
      $region12: #{conditioner_forward.1} parent=5 // pred_fallthru
        _
      %p486 = scmp.lt.s32.totalorder %s35, 2
      // Predicated region
      $region77: #{conditioner_forward.1} parent=5 // pred_check
        %p487 = pneg %p486
      $region78: #{conditioner_forward.1} parent=5 // pred_check_branch
        %489 = sbr.rel (%p487) target = $region80
      $region79: #{conditioner_forward.1} parent=5 // pred_region
        // Predicated region
        $region81: #{conditioner_forward.1} parent=79 // pred_check
          %p490 = pneg %p55
        $region82: #{conditioner_forward.1} parent=79 // pred_check_branch
          %492 = sbr.rel (%p490) target = $region84
        $region83: #{conditioner_forward.1} parent=79 // pred_region
          %p493 = scmp.lt.s32.totalorder %s35, 1
          %s494 = scalar_select %p493, %s35, 1
          %s495 = smul.addr %s494, 32
          %s496 = smul.addr %s495, 4
          %s497 = scalar_lea.vmem %s1, %s496
        $region84: #{conditioner_forward.1} parent=79 // pred_fallthru
          _
      $region80: #{conditioner_forward.1} parent=5 // pred_fallthru
        _
      %p498 = scmp.le.s32.totalorder 1, %s35
      %p499 = scmp.lt.s32.totalorder %s35, 3
      %p500 = pnand %p498, %p499
      %p501 = pneg %p500
      // Predicated region
      $region85: #{conditioner_forward.1} parent=5 // pred_check
        _
      $region86: #{conditioner_forward.1} parent=5 // pred_check_branch
        %503 = sbr.rel (%p500) target = $region88
      $region87: #{conditioner_forward.1} parent=5 // pred_region
        %s504 = ssub.s32 %s35, 1
        %p505 = scmp.lt.s32.totalorder %s40, 1
        %s506 = scalar_select %p505, %s40, 1
        %s507 = smul.addr %s506, 32
        %s508 = smul.addr %s507, 4
        %s509 = scalar_lea.vmem %s1, %s508
        %p510 = pneg %p61
        %p511 = pneg %p58
        %p512 = pneg %p82
        %p513 = pneg %p79
        %p514 = pneg %p103
        %p515 = pneg %p100
        %p516 = pneg %p124
        %p517 = pneg %p121
        %p518 = pneg %p145
        %p519 = pneg %p142
        %p520 = pneg %p166
        %p521 = pneg %p163
        %p522 = pneg %p187
        %p523 = pneg %p184
        %p524 = pneg %p208
        %p525 = pneg %p205
        %p526 = pneg %p229
        %p527 = pneg %p226
        %p528 = pneg %p250
        %p529 = pneg %p247
        %p530 = pneg %p271
        %p531 = pneg %p268
        %p532 = pneg %p292
        %p533 = pneg %p289
        %p534 = pneg %p313
        %p535 = pneg %p310
        %p536 = pneg %p334
        %p537 = pneg %p331
        %p538 = pneg %p355
        %p539 = pneg %p352
        %p540 = pneg %p376
        %p541 = pneg %p373
        %p542 = pneg %p397
        %p543 = pneg %p394
        %p544 = pneg %p423
        %p545 = pneg %p420
        %s546 = sand.u32 %s410, 1
        %s547 = scalar_lea.sflag [#allocation5], %s546
        %s548 = sand.u32 %s410, 1
        %s549 = smul.addr %s548, 8
        %s550 = scalar_lea.vmem [#allocation4], %s549
        %p551 = scmp.lt.s32.totalorder %s40, 1
        %s552 = scalar_select %p551, %s40, 1
        %s553 = smul.addr %s552, 32
        %s554 = smul.addr %s553, 4
        %s555 = scalar_lea.vmem %s1, %s554
        %v557 = vld [vmem:[%s555] sm:$0xff]
        %v558 = vld [vmem:[%s555 + $0x8] sm:$0xff]
        %v559 = vld [vmem:[%s555 + $0x10] sm:$0xff]
        %v560 = vld [vmem:[%s555 + $0x18] sm:$0xff]
        %v561 = vld [vmem:[%s555 + $0x20] sm:$0xff]
        %v562 = vld [vmem:[%s555 + $0x28] sm:$0xff]
        %v563 = vld [vmem:[%s555 + $0x30] sm:$0xff]
        %v564 = vld [vmem:[%s555 + $0x38] sm:$0xff]
        %v565 = vld [vmem:[%s555 + $0x40] sm:$0xff]
        %v566 = vld [vmem:[%s555 + $0x48] sm:$0xff]
        %v567 = vld [vmem:[%s555 + $0x50] sm:$0xff]
        %v568 = vld [vmem:[%s555 + $0x58] sm:$0xff]
        %v569 = vld [vmem:[%s555 + $0x60] sm:$0xff]
        %v570 = vld [vmem:[%s555 + $0x68] sm:$0xff]
        %v571 = vld [vmem:[%s555 + $0x70] sm:$0xff]
        %v572 = vld [vmem:[%s555 + $0x78] sm:$0xff]
        %v573 = vld [vmem:[%s2] sm:$0xf]
        %v574 = vld [vmem:[%s2 + $0x4] sm:$0xf]
        %v575 = vld [vmem:[%s2 + $0x8] sm:$0xf]
        %v576 = vld [vmem:[%s2 + $0xc] sm:$0xf]
        %v577 = vld [vmem:[%s2 + $0x10] sm:$0xf]
        %v578 = vld [vmem:[%s2 + $0x14] sm:$0xf]
        %v579 = vld [vmem:[%s2 + $0x18] sm:$0xf]
        %v580 = vld [vmem:[%s2 + $0x1c] sm:$0xf]
        %v581 = vld [vmem:[%s2 + $0x20] sm:$0xf]
        %v582 = vld [vmem:[%s2 + $0x24] sm:$0xf]
        %v583 = vld [vmem:[%s2 + $0x28] sm:$0xf]
        %v584 = vld [vmem:[%s2 + $0x2c] sm:$0xf]
        %v585 = vld [vmem:[%s2 + $0x30] sm:$0xf]
        %v586 = vld [vmem:[%s2 + $0x34] sm:$0xf]
        %v587 = vld [vmem:[%s2 + $0x38] sm:$0xf]
        %v588 = vld [vmem:[%s2 + $0x3c] sm:$0xf]
        %v589 = vld [vmem:[%s2 + $0x40] sm:$0xf]
        %v590 = vld [vmem:[%s2 + $0x44] sm:$0xf]
        %v591 = vld [vmem:[%s2 + $0x48] sm:$0xf]
        %v592 = vld [vmem:[%s2 + $0x4c] sm:$0xf]
        %v593 = vld [vmem:[%s2 + $0x50] sm:$0xf]
        %v594 = vld [vmem:[%s2 + $0x54] sm:$0xf]
        %v595 = vld [vmem:[%s2 + $0x58] sm:$0xf]
        %v596 = vld [vmem:[%s2 + $0x5c] sm:$0xf]
        %v597 = vld [vmem:[%s2 + $0x60] sm:$0xf]
        %v598 = vld [vmem:[%s2 + $0x64] sm:$0xf]
        %v599 = vld [vmem:[%s2 + $0x68] sm:$0xf]
        %v600 = vld [vmem:[%s2 + $0x6c] sm:$0xf]
        %v601 = vld [vmem:[%s2 + $0x70] sm:$0xf]
        %v602 = vld [vmem:[%s2 + $0x74] sm:$0xf]
        %v603 = vld [vmem:[%s2 + $0x78] sm:$0xf]
        %v604 = vld [vmem:[%s2 + $0x7c] sm:$0xf]
        %v605 = vld [vmem:[%s3] sm:$0xff]
        %v606 = vld [vmem:[%s3 + $0x8] sm:$0xff]
        %v607 = vld [vmem:[%s3 + $0x10] sm:$0xff]
        %v608 = vld [vmem:[%s3 + $0x18] sm:$0xff]
        %v609 = vld [vmem:[%s3 + $0x20] sm:$0xff]
        %v610 = vld [vmem:[%s3 + $0x28] sm:$0xff]
        %v611 = vld [vmem:[%s3 + $0x30] sm:$0xff]
        %v612 = vld [vmem:[%s3 + $0x38] sm:$0xff]
        %v613 = vld [vmem:[%s3 + $0x40] sm:$0xff]
        %v614 = vld [vmem:[%s3 + $0x48] sm:$0xff]
        %v615 = vld [vmem:[%s3 + $0x50] sm:$0xff]
        %v616 = vld [vmem:[%s3 + $0x58] sm:$0xff]
        %v617 = vld [vmem:[%s3 + $0x60] sm:$0xff]
        %v618 = vld [vmem:[%s3 + $0x68] sm:$0xff]
        %v619 = vld [vmem:[%s3 + $0x70] sm:$0xff]
        %v620 = vld [vmem:[%s3 + $0x78] sm:$0xff]
        %v637 = vunpack.c.l.b16 %v557
        %v638 = vunpack.c.h.b16 %v557
        %v639 = vunpack.c.l.b16 %v558
        %v640 = vunpack.c.h.b16 %v558
        %v641 = vunpack.c.l.b16 %v559
        %v642 = vunpack.c.h.b16 %v559
        %v643 = vunpack.c.l.b16 %v560
        %v644 = vunpack.c.h.b16 %v560
        %v645 = vunpack.c.l.b16 %v561
        %v646 = vunpack.c.h.b16 %v561
        %v647 = vunpack.c.l.b16 %v562
        %v648 = vunpack.c.h.b16 %v562
        %v649 = vunpack.c.l.b16 %v563
        %v650 = vunpack.c.h.b16 %v563
        %v651 = vunpack.c.l.b16 %v564
        %v652 = vunpack.c.h.b16 %v564
        %v653 = vunpack.c.l.b16 %v565
        %v654 = vunpack.c.h.b16 %v565
        %v655 = vunpack.c.l.b16 %v566
        %v656 = vunpack.c.h.b16 %v566
        %v657 = vunpack.c.l.b16 %v567
        %v658 = vunpack.c.h.b16 %v567
        %v659 = vunpack.c.l.b16 %v568
        %v660 = vunpack.c.h.b16 %v568
        %v661 = vunpack.c.l.b16 %v569
        %v662 = vunpack.c.h.b16 %v569
        %v663 = vunpack.c.l.b16 %v570
        %v664 = vunpack.c.h.b16 %v570
        %v665 = vunpack.c.l.b16 %v571
        %v666 = vunpack.c.h.b16 %v571
        %v667 = vunpack.c.l.b16 %v572
        %v668 = vunpack.c.h.b16 %v572
        %v669 = vpack.c.b16 %v639, %v637
        %v670 = vpack.c.b16 %v640, %v638
        %v671 = vpack.c.b16 %v643, %v641
        %v672 = vpack.c.b16 %v644, %v642
        %v673 = vpack.c.b16 %v647, %v645
        %v674 = vpack.c.b16 %v648, %v646
        %v675 = vpack.c.b16 %v651, %v649
        %v676 = vpack.c.b16 %v652, %v650
        %v677 = vpack.c.b16 %v655, %v653
        %v678 = vpack.c.b16 %v656, %v654
        %v679 = vpack.c.b16 %v659, %v657
        %v680 = vpack.c.b16 %v660, %v658
        %v681 = vpack.c.b16 %v663, %v661
        %v682 = vpack.c.b16 %v664, %v662
        %v683 = vpack.c.b16 %v667, %v665
        %v684 = vpack.c.b16 %v668, %v666
        %v733 = vunpack.c.l.b16 %v573
        %v734 = vunpack.c.l.b16 %v574
        %v735 = vunpack.c.l.b16 %v575
        %v736 = vunpack.c.l.b16 %v576
        %v737 = vunpack.c.l.b16 %v577
        %v738 = vunpack.c.l.b16 %v578
        %v739 = vunpack.c.l.b16 %v579
        %v740 = vunpack.c.l.b16 %v580
        %v741 = vunpack.c.l.b16 %v581
        %v742 = vunpack.c.l.b16 %v582
        %v743 = vunpack.c.l.b16 %v583
        %v744 = vunpack.c.l.b16 %v584
        %v745 = vunpack.c.l.b16 %v585
        %v746 = vunpack.c.l.b16 %v586
        %v747 = vunpack.c.l.b16 %v587
        %v748 = vunpack.c.l.b16 %v588
        %v749 = vunpack.c.l.b16 %v589
        %v750 = vunpack.c.l.b16 %v590
        %v751 = vunpack.c.l.b16 %v591
        %v752 = vunpack.c.l.b16 %v592
        %v753 = vunpack.c.l.b16 %v593
        %v754 = vunpack.c.l.b16 %v594
        %v755 = vunpack.c.l.b16 %v595
        %v756 = vunpack.c.l.b16 %v596
        %v757 = vunpack.c.l.b16 %v597
        %v758 = vunpack.c.l.b16 %v598
        %v759 = vunpack.c.l.b16 %v599
        %v760 = vunpack.c.l.b16 %v600
        %v761 = vunpack.c.l.b16 %v601
        %v762 = vunpack.c.l.b16 %v602
        %v763 = vunpack.c.l.b16 %v603
        %v764 = vunpack.c.l.b16 %v604
        %v765 = vpack.c.b16 %v734, %v733
        %v766 = vpack.c.b16 %v736, %v735
        %v767 = vpack.c.b16 %v738, %v737
        %v768 = vpack.c.b16 %v740, %v739
        %v769 = vpack.c.b16 %v742, %v741
        %v770 = vpack.c.b16 %v744, %v743
        %v771 = vpack.c.b16 %v746, %v745
        %v772 = vpack.c.b16 %v748, %v747
        %v773 = vpack.c.b16 %v750, %v749
        %v774 = vpack.c.b16 %v752, %v751
        %v775 = vpack.c.b16 %v754, %v753
        %v776 = vpack.c.b16 %v756, %v755
        %v777 = vpack.c.b16 %v758, %v757
        %v778 = vpack.c.b16 %v760, %v759
        %v779 = vpack.c.b16 %v762, %v761
        %v780 = vpack.c.b16 %v764, %v763
        %797 = vmatpush.bf16.msra.mxu0 %v772
        %798 = vmatpush.bf16.msra.mxu0 %v771
        %799 = vmatpush.bf16.msra.mxu0 %v770
        %800 = vmatpush.bf16.msra.mxu0 %v769
        %801 = vmatpush.bf16.msra.mxu0 %v768
        %802 = vmatpush.bf16.msra.mxu0 %v767
        %803 = vmatpush.bf16.msra.mxu0 %v766
        %804 = vmatpush.bf16.msra.mxu0 %v765
        %805 = vmatmul.bf16.gmra.mxu0 %v669
        %v806 = vpop.f32.mrf.mxu0
        %v807 = vadd.f32 %v605, %v806
        %v808 = vpop.f32.mrf.mxu0
        %v809 = vadd.f32 %v606, %v808
        %810 = vmatmul.bf16.gmra.mxu0 %v671
        %v811 = vpop.f32.mrf.mxu0
        %v812 = vadd.f32 %v607, %v811
        %v813 = vpop.f32.mrf.mxu0
        %v814 = vadd.f32 %v608, %v813
        %815 = vmatmul.bf16.gmra.mxu0 %v673
        %v816 = vpop.f32.mrf.mxu0
        %v817 = vadd.f32 %v609, %v816
        %v818 = vpop.f32.mrf.mxu0
        %v819 = vadd.f32 %v610, %v818
        %820 = vmatmul.bf16.gmra.mxu0 %v675
        %v821 = vpop.f32.mrf.mxu0
        %v822 = vadd.f32 %v611, %v821
        %v823 = vpop.f32.mrf.mxu0
        %v824 = vadd.f32 %v612, %v823
        %825 = vmatmul.bf16.gmra.mxu0 %v677
        %v826 = vpop.f32.mrf.mxu0
        %v827 = vadd.f32 %v613, %v826
        %v828 = vpop.f32.mrf.mxu0
        %v829 = vadd.f32 %v614, %v828
        %830 = vmatmul.bf16.gmra.mxu0 %v679
        %v831 = vpop.f32.mrf.mxu0
        %v832 = vadd.f32 %v615, %v831
        %v833 = vpop.f32.mrf.mxu0
        %v834 = vadd.f32 %v616, %v833
        %835 = vmatmul.bf16.gmra.mxu0 %v681
        %v836 = vpop.f32.mrf.mxu0
        %v837 = vadd.f32 %v617, %v836
        %v838 = vpop.f32.mrf.mxu0
        %v839 = vadd.f32 %v618, %v838
        %840 = vmatmul.bf16.gmra.mxu0 %v683
        %v841 = vpop.f32.mrf.mxu0
        %v842 = vadd.f32 %v619, %v841
        %v843 = vpop.f32.mrf.mxu0
        %v844 = vadd.f32 %v620, %v843
        %845 = vdwg.mxu0
        %846 = vmatpush.bf16.msra.mxu0 %v780
        %847 = vmatpush.bf16.msra.mxu0 %v779
        %848 = vmatpush.bf16.msra.mxu0 %v778
        %849 = vmatpush.bf16.msra.mxu0 %v777
        %850 = vmatpush.bf16.msra.mxu0 %v776
        %851 = vmatpush.bf16.msra.mxu0 %v775
        %852 = vmatpush.bf16.msra.mxu0 %v774
        %853 = vmatpush.bf16.msra.mxu0 %v773
        %854 = vmatmul.bf16.gmra.mxu0 %v670
        %v855 = vpop.f32.mrf.mxu0
        %v856 = vadd.f32 %v807, %v855
        %v857 = vpop.f32.mrf.mxu0
        %v858 = vadd.f32 %v809, %v857
        %859 = vmatmul.bf16.gmra.mxu0 %v672
        %v860 = vpop.f32.mrf.mxu0
        %v861 = vadd.f32 %v812, %v860
        %v862 = vpop.f32.mrf.mxu0
        %v863 = vadd.f32 %v814, %v862
        %864 = vmatmul.bf16.gmra.mxu0 %v674
        %v865 = vpop.f32.mrf.mxu0
        %v866 = vadd.f32 %v817, %v865
        %v867 = vpop.f32.mrf.mxu0
        %v868 = vadd.f32 %v819, %v867
        %869 = vmatmul.bf16.gmra.mxu0 %v676
        %v870 = vpop.f32.mrf.mxu0
        %v871 = vadd.f32 %v822, %v870
        %v872 = vpop.f32.mrf.mxu0
        %v873 = vadd.f32 %v824, %v872
        %874 = vmatmul.bf16.gmra.mxu0 %v678
        %v875 = vpop.f32.mrf.mxu0
        %v876 = vadd.f32 %v827, %v875
        %v877 = vpop.f32.mrf.mxu0
        %v878 = vadd.f32 %v829, %v877
        %879 = vmatmul.bf16.gmra.mxu0 %v680
        %v880 = vpop.f32.mrf.mxu0
        %v881 = vadd.f32 %v832, %v880
        %v882 = vpop.f32.mrf.mxu0
        %v883 = vadd.f32 %v834, %v882
        %884 = vmatmul.bf16.gmra.mxu0 %v682
        %v885 = vpop.f32.mrf.mxu0
        %v886 = vadd.f32 %v837, %v885
        %v887 = vpop.f32.mrf.mxu0
        %v888 = vadd.f32 %v839, %v887
        %889 = vmatmul.bf16.gmra.mxu0 %v684
        %v890 = vpop.f32.mrf.mxu0
        %v891 = vadd.f32 %v842, %v890
        %v892 = vpop.f32.mrf.mxu0
        %v893 = vadd.f32 %v844, %v892
        %894 = vdwg.mxu0
        %895 = vadd.xlane.f32.xlu0 %v856
        %v896 = vpop.xlane.xlu0 %895
        %897 = vadd.xlane.f32.xlu0 %v858
        %v898 = vpop.xlane.xlu0 %897
        %899 = vadd.xlane.f32.xlu0 %v861
        %v900 = vpop.xlane.xlu0 %899
        %901 = vadd.xlane.f32.xlu0 %v863
        %v902 = vpop.xlane.xlu0 %901
        %903 = vadd.xlane.f32.xlu0 %v866
        %v904 = vpop.xlane.xlu0 %903
        %905 = vadd.xlane.f32.xlu0 %v868
        %v906 = vpop.xlane.xlu0 %905
        %907 = vadd.xlane.f32.xlu0 %v871
        %v908 = vpop.xlane.xlu0 %907
        %909 = vadd.xlane.f32.xlu0 %v873
        %v910 = vpop.xlane.xlu0 %909
        %911 = vadd.xlane.f32.xlu0 %v876
        %v912 = vpop.xlane.xlu0 %911
        %913 = vadd.xlane.f32.xlu0 %v878
        %v914 = vpop.xlane.xlu0 %913
        %915 = vadd.xlane.f32.xlu0 %v881
        %v916 = vpop.xlane.xlu0 %915
        %917 = vadd.xlane.f32.xlu0 %v883
        %v918 = vpop.xlane.xlu0 %917
        %919 = vadd.xlane.f32.xlu0 %v886
        %v920 = vpop.xlane.xlu0 %919
        %921 = vadd.xlane.f32.xlu0 %v888
        %v922 = vpop.xlane.xlu0 %921
        %923 = vadd.xlane.f32.xlu0 %v891
        %v924 = vpop.xlane.xlu0 %923
        %925 = vadd.xlane.f32.xlu0 %v893
        %v926 = vpop.xlane.xlu0 %925
        %v927 = vrcp.pop 128.0
        %v928 = vmul.f32 128.0, %v927
        %v929 = vsub.f32 1.0, %v928
        %v930 = vmul.f32 %v927, %v929
        %v931 = vadd.f32 %v927, %v930
        %vm932 = vweird.f32 %v927
        %v933 = vsel %vm932, %v927, %v931
        %v934 = vmul.f32 %v896, %v933
        %v935 = vmul.f32 %v898, %v933
        %v936 = vmul.f32 %v900, %v933
        %v937 = vmul.f32 %v902, %v933
        %v938 = vmul.f32 %v904, %v933
        %v939 = vmul.f32 %v906, %v933
        %v940 = vmul.f32 %v908, %v933
        %v941 = vmul.f32 %v910, %v933
        %v942 = vmul.f32 %v912, %v933
        %v943 = vmul.f32 %v914, %v933
        %v944 = vmul.f32 %v916, %v933
        %v945 = vmul.f32 %v918, %v933
        %v946 = vmul.f32 %v920, %v933
        %v947 = vmul.f32 %v922, %v933
        %v948 = vmul.f32 %v924, %v933
        %v949 = vmul.f32 %v926, %v933
        %v950 = vsub.f32 %v856, %v934
        %v951 = vsub.f32 %v858, %v935
        %v952 = vsub.f32 %v861, %v936
        %v953 = vsub.f32 %v863, %v937
        %v954 = vsub.f32 %v866, %v938
        %v955 = vsub.f32 %v868, %v939
        %v956 = vsub.f32 %v871, %v940
        %v957 = vsub.f32 %v873, %v941
        %v958 = vsub.f32 %v876, %v942
        %v959 = vsub.f32 %v878, %v943
        %v960 = vsub.f32 %v881, %v944
        %v961 = vsub.f32 %v883, %v945
        %v962 = vsub.f32 %v886, %v946
        %v963 = vsub.f32 %v888, %v947
        %v964 = vsub.f32 %v891, %v948
        %v965 = vsub.f32 %v893, %v949
        %v966 = vmul.f32 %v950, %v950
        %v967 = vmul.f32 %v951, %v951
        %v968 = vmul.f32 %v952, %v952
        %v969 = vmul.f32 %v953, %v953
        %v970 = vmul.f32 %v954, %v954
        %v971 = vmul.f32 %v955, %v955
        %v972 = vmul.f32 %v956, %v956
        %v973 = vmul.f32 %v957, %v957
        %v974 = vmul.f32 %v958, %v958
        %v975 = vmul.f32 %v959, %v959
        %v976 = vmul.f32 %v960, %v960
        %v977 = vmul.f32 %v961, %v961
        %v978 = vmul.f32 %v962, %v962
        %v979 = vmul.f32 %v963, %v963
        %v980 = vmul.f32 %v964, %v964
        %v981 = vmul.f32 %v965, %v965
        %982 = vadd.xlane.f32.xlu0 %v966
        %v983 = vpop.xlane.xlu0 %982
        %984 = vadd.xlane.f32.xlu0 %v967
        %v985 = vpop.xlane.xlu0 %984
        %986 = vadd.xlane.f32.xlu0 %v968
        %v987 = vpop.xlane.xlu0 %986
        %988 = vadd.xlane.f32.xlu0 %v969
        %v989 = vpop.xlane.xlu0 %988
        %990 = vadd.xlane.f32.xlu0 %v970
        %v991 = vpop.xlane.xlu0 %990
        %992 = vadd.xlane.f32.xlu0 %v971
        %v993 = vpop.xlane.xlu0 %992
        %994 = vadd.xlane.f32.xlu0 %v972
        %v995 = vpop.xlane.xlu0 %994
        %996 = vadd.xlane.f32.xlu0 %v973
        %v997 = vpop.xlane.xlu0 %996
        %998 = vadd.xlane.f32.xlu0 %v974
        %v999 = vpop.xlane.xlu0 %998
        %1000 = vadd.xlane.f32.xlu0 %v975
        %v1001 = vpop.xlane.xlu0 %1000
        %1002 = vadd.xlane.f32.xlu0 %v976
        %v1003 = vpop.xlane.xlu0 %1002
        %1004 = vadd.xlane.f32.xlu0 %v977
        %v1005 = vpop.xlane.xlu0 %1004
        %1006 = vadd.xlane.f32.xlu0 %v978
        %v1007 = vpop.xlane.xlu0 %1006
        %1008 = vadd.xlane.f32.xlu0 %v979
        %v1009 = vpop.xlane.xlu0 %1008
        %1010 = vadd.xlane.f32.xlu0 %v980
        %v1011 = vpop.xlane.xlu0 %1010
        %1012 = vadd.xlane.f32.xlu0 %v981
        %v1013 = vpop.xlane.xlu0 %1012
        %v1014 = vmul.f32 %v983, %v933
        %v1015 = vmul.f32 %v985, %v933
        %v1016 = vmul.f32 %v987, %v933
        %v1017 = vmul.f32 %v989, %v933
        %v1018 = vmul.f32 %v991, %v933
        %v1019 = vmul.f32 %v993, %v933
        %v1020 = vmul.f32 %v995, %v933
        %v1021 = vmul.f32 %v997, %v933
        %v1022 = vmul.f32 %v999, %v933
        %v1023 = vmul.f32 %v1001, %v933
        %v1024 = vmul.f32 %v1003, %v933
        %v1025 = vmul.f32 %v1005, %v933
        %v1026 = vmul.f32 %v1007, %v933
        %v1027 = vmul.f32 %v1009, %v933
        %v1028 = vmul.f32 %v1011, %v933
        %v1029 = vmul.f32 %v1013, %v933
        %v1030 = vadd.f32 %v1014, 1e-05
        %v1031 = vadd.f32 %v1015, 1e-05
        %v1032 = vadd.f32 %v1016, 1e-05
        %v1033 = vadd.f32 %v1017, 1e-05
        %v1034 = vadd.f32 %v1018, 1e-05
        %v1035 = vadd.f32 %v1019, 1e-05
        %v1036 = vadd.f32 %v1020, 1e-05
        %v1037 = vadd.f32 %v1021, 1e-05
        %v1038 = vadd.f32 %v1022, 1e-05
        %v1039 = vadd.f32 %v1023, 1e-05
        %v1040 = vadd.f32 %v1024, 1e-05
        %v1041 = vadd.f32 %v1025, 1e-05
        %v1042 = vadd.f32 %v1026, 1e-05
        %v1043 = vadd.f32 %v1027, 1e-05
        %v1044 = vadd.f32 %v1028, 1e-05
        %v1045 = vadd.f32 %v1029, 1e-05
        %v1046 = vrsqrt.pop %v1030
        %v1047 = vmul.f32 %v1046, %v1030
        %v1048 = vmul.f32 %v1047, %v1046
        %v1049 = vmul.f32 0.5, %v1048
        %v1050 = vsub.f32 1.5, %v1049
        %v1051 = vmul.f32 %v1046, %v1050
        %vm1052 = vweird.f32 %v1030
        %vm1053 = vweird.f32 %v1046
        %vm1054 = vmor %vm1052, %vm1053
        %v1055 = vsel %vm1054, %v1046, %v1051
        %v1056 = vrsqrt.pop %v1031
        %v1057 = vmul.f32 %v1056, %v1031
        %v1058 = vmul.f32 %v1057, %v1056
        %v1059 = vmul.f32 0.5, %v1058
        %v1060 = vsub.f32 1.5, %v1059
        %v1061 = vmul.f32 %v1056, %v1060
        %vm1062 = vweird.f32 %v1031
        %vm1063 = vweird.f32 %v1056
        %vm1064 = vmor %vm1062, %vm1063
        %v1065 = vsel %vm1064, %v1056, %v1061
        %v1066 = vrsqrt.pop %v1032
        %v1067 = vmul.f32 %v1066, %v1032
        %v1068 = vmul.f32 %v1067, %v1066
        %v1069 = vmul.f32 0.5, %v1068
        %v1070 = vsub.f32 1.5, %v1069
        %v1071 = vmul.f32 %v1066, %v1070
        %vm1072 = vweird.f32 %v1032
        %vm1073 = vweird.f32 %v1066
        %vm1074 = vmor %vm1072, %vm1073
        %v1075 = vsel %vm1074, %v1066, %v1071
        %v1076 = vrsqrt.pop %v1033
        %v1077 = vmul.f32 %v1076, %v1033
        %v1078 = vmul.f32 %v1077, %v1076
        %v1079 = vmul.f32 0.5, %v1078
        %v1080 = vsub.f32 1.5, %v1079
        %v1081 = vmul.f32 %v1076, %v1080
        %vm1082 = vweird.f32 %v1033
        %vm1083 = vweird.f32 %v1076
        %vm1084 = vmor %vm1082, %vm1083
        %v1085 = vsel %vm1084, %v1076, %v1081
        %v1086 = vrsqrt.pop %v1034
        %v1087 = vmul.f32 %v1086, %v1034
        %v1088 = vmul.f32 %v1087, %v1086
        %v1089 = vmul.f32 0.5, %v1088
        %v1090 = vsub.f32 1.5, %v1089
        %v1091 = vmul.f32 %v1086, %v1090
        %vm1092 = vweird.f32 %v1034
        %vm1093 = vweird.f32 %v1086
        %vm1094 = vmor %vm1092, %vm1093
        %v1095 = vsel %vm1094, %v1086, %v1091
        %v1096 = vrsqrt.pop %v1035
        %v1097 = vmul.f32 %v1096, %v1035
        %v1098 = vmul.f32 %v1097, %v1096
        %v1099 = vmul.f32 0.5, %v1098
        %v1100 = vsub.f32 1.5, %v1099
        %v1101 = vmul.f32 %v1096, %v1100
        %vm1102 = vweird.f32 %v1035
        %vm1103 = vweird.f32 %v1096
        %vm1104 = vmor %vm1102, %vm1103
        %v1105 = vsel %vm1104, %v1096, %v1101
        %v1106 = vrsqrt.pop %v1036
        %v1107 = vmul.f32 %v1106, %v1036
        %v1108 = vmul.f32 %v1107, %v1106
        %v1109 = vmul.f32 0.5, %v1108
        %v1110 = vsub.f32 1.5, %v1109
        %v1111 = vmul.f32 %v1106, %v1110
        %vm1112 = vweird.f32 %v1036
        %vm1113 = vweird.f32 %v1106
        %vm1114 = vmor %vm1112, %vm1113
        %v1115 = vsel %vm1114, %v1106, %v1111
        %v1116 = vrsqrt.pop %v1037
        %v1117 = vmul.f32 %v1116, %v1037
        %v1118 = vmul.f32 %v1117, %v1116
        %v1119 = vmul.f32 0.5, %v1118
        %v1120 = vsub.f32 1.5, %v1119
        %v1121 = vmul.f32 %v1116, %v1120
        %vm1122 = vweird.f32 %v1037
        %vm1123 = vweird.f32 %v1116
        %vm1124 = vmor %vm1122, %vm1123
        %v1125 = vsel %vm1124, %v1116, %v1121
        %v1126 = vrsqrt.pop %v1038
        %v1127 = vmul.f32 %v1126, %v1038
        %v1128 = vmul.f32 %v1127, %v1126
        %v1129 = vmul.f32 0.5, %v1128
        %v1130 = vsub.f32 1.5, %v1129
        %v1131 = vmul.f32 %v1126, %v1130
        %vm1132 = vweird.f32 %v1038
        %vm1133 = vweird.f32 %v1126
        %vm1134 = vmor %vm1132, %vm1133
        %v1135 = vsel %vm1134, %v1126, %v1131
        %v1136 = vrsqrt.pop %v1039
        %v1137 = vmul.f32 %v1136, %v1039
        %v1138 = vmul.f32 %v1137, %v1136
        %v1139 = vmul.f32 0.5, %v1138
        %v1140 = vsub.f32 1.5, %v1139
        %v1141 = vmul.f32 %v1136, %v1140
        %vm1142 = vweird.f32 %v1039
        %vm1143 = vweird.f32 %v1136
        %vm1144 = vmor %vm1142, %vm1143
        %v1145 = vsel %vm1144, %v1136, %v1141
        %v1146 = vrsqrt.pop %v1040
        %v1147 = vmul.f32 %v1146, %v1040
        %v1148 = vmul.f32 %v1147, %v1146
        %v1149 = vmul.f32 0.5, %v1148
        %v1150 = vsub.f32 1.5, %v1149
        %v1151 = vmul.f32 %v1146, %v1150
        %vm1152 = vweird.f32 %v1040
        %vm1153 = vweird.f32 %v1146
        %vm1154 = vmor %vm1152, %vm1153
        %v1155 = vsel %vm1154, %v1146, %v1151
        %v1156 = vrsqrt.pop %v1041
        %v1157 = vmul.f32 %v1156, %v1041
        %v1158 = vmul.f32 %v1157, %v1156
        %v1159 = vmul.f32 0.5, %v1158
        %v1160 = vsub.f32 1.5, %v1159
        %v1161 = vmul.f32 %v1156, %v1160
        %vm1162 = vweird.f32 %v1041
        %vm1163 = vweird.f32 %v1156
        %vm1164 = vmor %vm1162, %vm1163
        %v1165 = vsel %vm1164, %v1156, %v1161
        %v1166 = vrsqrt.pop %v1042
        %v1167 = vmul.f32 %v1166, %v1042
        %v1168 = vmul.f32 %v1167, %v1166
        %v1169 = vmul.f32 0.5, %v1168
        %v1170 = vsub.f32 1.5, %v1169
        %v1171 = vmul.f32 %v1166, %v1170
        %vm1172 = vweird.f32 %v1042
        %vm1173 = vweird.f32 %v1166
        %vm1174 = vmor %vm1172, %vm1173
        %v1175 = vsel %vm1174, %v1166, %v1171
        %v1176 = vrsqrt.pop %v1043
        %v1177 = vmul.f32 %v1176, %v1043
        %v1178 = vmul.f32 %v1177, %v1176
        %v1179 = vmul.f32 0.5, %v1178
        %v1180 = vsub.f32 1.5, %v1179
        %v1181 = vmul.f32 %v1176, %v1180
        %vm1182 = vweird.f32 %v1043
        %vm1183 = vweird.f32 %v1176
        %vm1184 = vmor %vm1182, %vm1183
        %v1185 = vsel %vm1184, %v1176, %v1181
        %v1186 = vrsqrt.pop %v1044
        %v1187 = vmul.f32 %v1186, %v1044
        %v1188 = vmul.f32 %v1187, %v1186
        %v1189 = vmul.f32 0.5, %v1188
        %v1190 = vsub.f32 1.5, %v1189
        %v1191 = vmul.f32 %v1186, %v1190
        %vm1192 = vweird.f32 %v1044
        %vm1193 = vweird.f32 %v1186
        %vm1194 = vmor %vm1192, %vm1193
        %v1195 = vsel %vm1194, %v1186, %v1191
        %v1196 = vrsqrt.pop %v1045
        %v1197 = vmul.f32 %v1196, %v1045
        %v1198 = vmul.f32 %v1197, %v1196
        %v1199 = vmul.f32 0.5, %v1198
        %v1200 = vsub.f32 1.5, %v1199
        %v1201 = vmul.f32 %v1196, %v1200
        %vm1202 = vweird.f32 %v1045
        %vm1203 = vweird.f32 %v1196
        %vm1204 = vmor %vm1202, %vm1203
        %v1205 = vsel %vm1204, %v1196, %v1201
        %v1206 = vmul.f32 %v950, %v1055
        %v1207 = vmul.f32 %v951, %v1065
        %v1208 = vmul.f32 %v952, %v1075
        %v1209 = vmul.f32 %v953, %v1085
        %v1210 = vmul.f32 %v954, %v1095
        %v1211 = vmul.f32 %v955, %v1105
        %v1212 = vmul.f32 %v956, %v1115
        %v1213 = vmul.f32 %v957, %v1125
        %v1214 = vmul.f32 %v958, %v1135
        %v1215 = vmul.f32 %v959, %v1145
        %v1216 = vmul.f32 %v960, %v1155
        %v1217 = vmul.f32 %v961, %v1165
        %v1218 = vmul.f32 %v962, %v1175
        %v1219 = vmul.f32 %v963, %v1185
        %v1220 = vmul.f32 %v964, %v1195
        %v1221 = vmul.f32 %v965, %v1205
        %v1222 = vpack.c.bf16 %v1207, %v1206
        %v1223 = vpack.c.bf16 %v1209, %v1208
        %v1224 = vpack.c.bf16 %v1211, %v1210
        %v1225 = vpack.c.bf16 %v1213, %v1212
        %v1226 = vpack.c.bf16 %v1215, %v1214
        %v1227 = vpack.c.bf16 %v1217, %v1216
        %v1228 = vpack.c.bf16 %v1219, %v1218
        %v1229 = vpack.c.bf16 %v1221, %v1220
        %s1230 = sld [smem:[#allocation3 + %s40]]
        %s1231 = smul.u32 %s1230, 64
        %v1232 = vlaneseq
        %v1233 = vand.u32 %v1232, 127
        %v1234 = vstv %s1231
        %vm1235 = vcmp.ge.s32.totalorder %v1233, %v1234
        %v1236 = vsel %vm1235, -1e+30, 0.0
        %vm1237 = vcmp.ge.s32.totalorder %v1233, 0
        %vm1238 = vcmp.lt.s32.totalorder %v1233, 32
        %vm1239 = vmand %vm1237, %vm1238
        %v1240 = vsel %vm1239, 1, 0
        %v1241 = vcvt.s32.f32 %v1240
        %vm1242 = vcmp.ge.s32.totalorder %v1233, 32
        %vm1243 = vcmp.lt.s32.totalorder %v1233, 64
        %vm1244 = vmand %vm1242, %vm1243
        %v1245 = vsel %vm1244, 1, 0
        %v1246 = vcvt.s32.f32 %v1245
        %vm1247 = vcmp.ge.s32.totalorder %v1233, 64
        %vm1248 = vcmp.lt.s32.totalorder %v1233, 96
        %vm1249 = vmand %vm1247, %vm1248
        %v1250 = vsel %vm1249, 1, 0
        %v1251 = vcvt.s32.f32 %v1250
        %vm1252 = vcmp.ge.s32.totalorder %v1233, 96
        %vm1253 = vcmp.lt.s32.totalorder %v1233, 128
        %vm1254 = vmand %vm1252, %vm1253
        %v1255 = vsel %vm1254, 1, 0
        %v1256 = vcvt.s32.f32 %v1255
        %v1257 = vld [vmem:[%s4] sm:$0xff]
        %1258 = vadd.xlane.f32.xlu0 %v1257
        %v1259 = vpop.xlane.xlu0 %1258
        %v1260 = vmul.f32 %v1259, %v933
        %v1261 = vsub.f32 %v1257, %v1260
        %v1262 = vmul.f32 %v1261, %v1261
        %1263 = vadd.xlane.f32.xlu0 %v1262
        %v1264 = vpop.xlane.xlu0 %1263
        %v1265 = vmul.f32 %v1264, %v933
        %v1266 = vadd.f32 %v1265, 1e-05
        %v1267 = vrsqrt.pop %v1266
        %v1268 = vmul.f32 %v1267, %v1266
        %v1269 = vmul.f32 %v1268, %v1267
        %v1270 = vmul.f32 0.5, %v1269
        %v1271 = vsub.f32 1.5, %v1270
        %v1272 = vmul.f32 %v1267, %v1271
        %vm1273 = vweird.f32 %v1266
        %vm1274 = vweird.f32 %v1267
        %vm1275 = vmor %vm1273, %vm1274
        %v1276 = vsel %vm1275, %v1267, %v1272
        %v1277 = vmul.f32 %v1261, %v1276
        %v1278 = vpack.c.bf16 %v1277, %v1277
        %v1279 = vld [vmem:[%s5] sm:$0xf]
        %v1280 = vld [vmem:[%s5 + $0x4] sm:$0xf]
        %v1281 = vld [vmem:[%s5 + $0x8] sm:$0xf]
        %v1282 = vld [vmem:[%s5 + $0xc] sm:$0xf]
        %v1283 = vld [vmem:[%s5 + $0x10] sm:$0xf]
        %v1284 = vld [vmem:[%s5 + $0x14] sm:$0xf]
        %v1285 = vld [vmem:[%s5 + $0x18] sm:$0xf]
        %v1286 = vld [vmem:[%s5 + $0x1c] sm:$0xf]
        %v1287 = vld [vmem:[%s5 + $0x20] sm:$0xf]
        %v1288 = vld [vmem:[%s5 + $0x24] sm:$0xf]
        %v1289 = vld [vmem:[%s5 + $0x28] sm:$0xf]
        %v1290 = vld [vmem:[%s5 + $0x2c] sm:$0xf]
        %v1291 = vld [vmem:[%s5 + $0x30] sm:$0xf]
        %v1292 = vld [vmem:[%s5 + $0x34] sm:$0xf]
        %v1293 = vld [vmem:[%s5 + $0x38] sm:$0xf]
        %v1294 = vld [vmem:[%s5 + $0x3c] sm:$0xf]
        %v1295 = vld [vmem:[%s6] sm:$0x1]
        %v1297 = vperm.slane %v1295, 0
        %v1315 = vunpack.c.l.b16 %v1279
        %v1316 = vunpack.c.l.b16 %v1280
        %v1317 = vunpack.c.l.b16 %v1281
        %v1318 = vunpack.c.l.b16 %v1282
        %v1319 = vunpack.c.l.b16 %v1283
        %v1320 = vunpack.c.l.b16 %v1284
        %v1321 = vunpack.c.l.b16 %v1285
        %v1322 = vunpack.c.l.b16 %v1286
        %v1323 = vunpack.c.l.b16 %v1287
        %v1324 = vunpack.c.l.b16 %v1288
        %v1325 = vunpack.c.l.b16 %v1289
        %v1326 = vunpack.c.l.b16 %v1290
        %v1327 = vunpack.c.l.b16 %v1291
        %v1328 = vunpack.c.l.b16 %v1292
        %v1329 = vunpack.c.l.b16 %v1293
        %v1330 = vunpack.c.l.b16 %v1294
        %v1331 = vpack.c.b16 %v1316, %v1315
        %v1332 = vpack.c.b16 %v1318, %v1317
        %v1333 = vpack.c.b16 %v1320, %v1319
        %v1334 = vpack.c.b16 %v1322, %v1321
        %v1335 = vpack.c.b16 %v1324, %v1323
        %v1336 = vpack.c.b16 %v1326, %v1325
        %v1337 = vpack.c.b16 %v1328, %v1327
        %v1338 = vpack.c.b16 %v1330, %v1329
        %1347 = vmatpush.bf16.msra.mxu0 %v1338
        %1348 = vmatpush.bf16.msra.mxu0 %v1337
        %1349 = vmatpush.bf16.msra.mxu0 %v1336
        %1350 = vmatpush.bf16.msra.mxu0 %v1335
        %1351 = vmatpush.bf16.msra.mxu0 %v1334
        %1352 = vmatpush.bf16.msra.mxu0 %v1333
        %1353 = vmatpush.bf16.msra.mxu0 %v1332
        %1354 = vmatpush.bf16.msra.mxu0 %v1331
        %1355 = vmatmul.bf16.gmra.mxu0 %v1278
        %v1356 = vpop.f32.mrf.mxu0
        %v1357 = vadd.f32 %v1297, %v1356
        %v1358 = vpop.f32.mrf.mxu0
        %1359 = vdwg.mxu0
        %v1360 = vld [vmem:[%s7] sm:$0xff]
        %v1361 = vld [vmem:[%s7 + $0x8] sm:$0xff]
        %v1362 = vld [vmem:[%s7 + $0x10] sm:$0xff]
        %v1363 = vld [vmem:[%s7 + $0x18] sm:$0xff]
        %v1364 = vld [vmem:[%s7 + $0x20] sm:$0xff]
        %v1365 = vld [vmem:[%s7 + $0x28] sm:$0xff]
        %v1366 = vld [vmem:[%s7 + $0x30] sm:$0xff]
        %v1367 = vld [vmem:[%s7 + $0x38] sm:$0xff]
        %v1368 = vld [vmem:[%s7 + $0x40] sm:$0xff]
        %v1369 = vld [vmem:[%s7 + $0x48] sm:$0xff]
        %v1370 = vld [vmem:[%s7 + $0x50] sm:$0xff]
        %v1371 = vld [vmem:[%s7 + $0x58] sm:$0xff]
        %v1372 = vld [vmem:[%s7 + $0x60] sm:$0xff]
        %v1373 = vld [vmem:[%s7 + $0x68] sm:$0xff]
        %v1374 = vld [vmem:[%s7 + $0x70] sm:$0xff]
        %v1375 = vld [vmem:[%s7 + $0x78] sm:$0xff]
        %v1376 = vld [vmem:[%s8] sm:$0x3]
        %v1378 = vperm.slane %v1376, 0
        %v1379 = vperm.slane %v1376, 1
        %v1398 = vunpack.c.l.b16 %v1360
        %v1399 = vunpack.c.h.b16 %v1360
        %v1400 = vunpack.c.l.b16 %v1361
        %v1401 = vunpack.c.h.b16 %v1361
        %v1402 = vunpack.c.l.b16 %v1362
        %v1403 = vunpack.c.h.b16 %v1362
        %v1404 = vunpack.c.l.b16 %v1363
        %v1405 = vunpack.c.h.b16 %v1363
        %v1406 = vunpack.c.l.b16 %v1364
        %v1407 = vunpack.c.h.b16 %v1364
        %v1408 = vunpack.c.l.b16 %v1365
        %v1409 = vunpack.c.h.b16 %v1365
        %v1410 = vunpack.c.l.b16 %v1366
        %v1411 = vunpack.c.h.b16 %v1366
        %v1412 = vunpack.c.l.b16 %v1367
        %v1413 = vunpack.c.h.b16 %v1367
        %v1414 = vunpack.c.l.b16 %v1368
        %v1415 = vunpack.c.h.b16 %v1368
        %v1416 = vunpack.c.l.b16 %v1369
        %v1417 = vunpack.c.h.b16 %v1369
        %v1418 = vunpack.c.l.b16 %v1370
        %v1419 = vunpack.c.h.b16 %v1370
        %v1420 = vunpack.c.l.b16 %v1371
        %v1421 = vunpack.c.h.b16 %v1371
        %v1422 = vunpack.c.l.b16 %v1372
        %v1423 = vunpack.c.h.b16 %v1372
        %v1424 = vunpack.c.l.b16 %v1373
        %v1425 = vunpack.c.h.b16 %v1373
        %v1426 = vunpack.c.l.b16 %v1374
        %v1427 = vunpack.c.h.b16 %v1374
        %v1428 = vunpack.c.l.b16 %v1375
        %v1429 = vunpack.c.h.b16 %v1375
        %v1430 = vpack.c.b16 %v1400, %v1398
        %v1431 = vpack.c.b16 %v1401, %v1399
        %v1432 = vpack.c.b16 %v1404, %v1402
        %v1433 = vpack.c.b16 %v1405, %v1403
        %v1434 = vpack.c.b16 %v1408, %v1406
        %v1435 = vpack.c.b16 %v1409, %v1407
        %v1436 = vpack.c.b16 %v1412, %v1410
        %v1437 = vpack.c.b16 %v1413, %v1411
        %v1438 = vpack.c.b16 %v1416, %v1414
        %v1439 = vpack.c.b16 %v1417, %v1415
        %v1440 = vpack.c.b16 %v1420, %v1418
        %v1441 = vpack.c.b16 %v1421, %v1419
        %v1442 = vpack.c.b16 %v1424, %v1422
        %v1443 = vpack.c.b16 %v1425, %v1423
        %v1444 = vpack.c.b16 %v1428, %v1426
        %v1445 = vpack.c.b16 %v1429, %v1427
        %1462 = vmatpush.bf16.msra.mxu0 %v1444
        %1463 = vmatpush.bf16.msra.mxu0 %v1442
        %1464 = vmatpush.bf16.msra.mxu0 %v1440
        %1465 = vmatpush.bf16.msra.mxu0 %v1438
        %1466 = vmatpush.bf16.msra.mxu0 %v1436
        %1467 = vmatpush.bf16.msra.mxu0 %v1434
        %1468 = vmatpush.bf16.msra.mxu0 %v1432
        %1469 = vmatpush.bf16.msra.mxu0 %v1430
        %1470 = vmatmul.bf16.gmra.mxu0 %v1222
        %v1471 = vpop.f32.mrf.mxu0
        %v1472 = vadd.f32 %v1378, %v1471
        %v1473 = vpop.f32.mrf.mxu0
        %v1474 = vadd.f32 %v1378, %v1473
        %1475 = vmatmul.bf16.gmra.mxu0 %v1223
        %v1476 = vpop.f32.mrf.mxu0
        %v1477 = vadd.f32 %v1378, %v1476
        %v1478 = vpop.f32.mrf.mxu0
        %v1479 = vadd.f32 %v1378, %v1478
        %1480 = vmatmul.bf16.gmra.mxu0 %v1224
        %v1481 = vpop.f32.mrf.mxu0
        %v1482 = vadd.f32 %v1378, %v1481
        %v1483 = vpop.f32.mrf.mxu0
        %v1484 = vadd.f32 %v1378, %v1483
        %1485 = vmatmul.bf16.gmra.mxu0 %v1225
        %v1486 = vpop.f32.mrf.mxu0
        %v1487 = vadd.f32 %v1378, %v1486
        %v1488 = vpop.f32.mrf.mxu0
        %v1489 = vadd.f32 %v1378, %v1488
        %1490 = vmatmul.bf16.gmra.mxu0 %v1226
        %v1491 = vpop.f32.mrf.mxu0
        %v1492 = vadd.f32 %v1378, %v1491
        %v1493 = vpop.f32.mrf.mxu0
        %v1494 = vadd.f32 %v1378, %v1493
        %1495 = vmatmul.bf16.gmra.mxu0 %v1227
        %v1496 = vpop.f32.mrf.mxu0
        %v1497 = vadd.f32 %v1378, %v1496
        %v1498 = vpop.f32.mrf.mxu0
        %v1499 = vadd.f32 %v1378, %v1498
        %1500 = vmatmul.bf16.gmra.mxu0 %v1228
        %v1501 = vpop.f32.mrf.mxu0
        %v1502 = vadd.f32 %v1378, %v1501
        %v1503 = vpop.f32.mrf.mxu0
        %v1504 = vadd.f32 %v1378, %v1503
        %1505 = vmatmul.bf16.gmra.mxu0 %v1229
        %v1506 = vpop.f32.mrf.mxu0
        %v1507 = vadd.f32 %v1378, %v1506
        %v1508 = vpop.f32.mrf.mxu0
        %v1509 = vadd.f32 %v1378, %v1508
        %1510 = vdwg.mxu0
        %1511 = vmatpush.bf16.msra.mxu0 %v1445
        %1512 = vmatpush.bf16.msra.mxu0 %v1443
        %1513 = vmatpush.bf16.msra.mxu0 %v1441
        %1514 = vmatpush.bf16.msra.mxu0 %v1439
        %1515 = vmatpush.bf16.msra.mxu0 %v1437
        %1516 = vmatpush.bf16.msra.mxu0 %v1435
        %1517 = vmatpush.bf16.msra.mxu0 %v1433
        %1518 = vmatpush.bf16.msra.mxu0 %v1431
        %1519 = vmatmul.bf16.gmra.mxu0 %v1222
        %v1520 = vpop.f32.mrf.mxu0
        %v1521 = vadd.f32 %v1379, %v1520
        %v1522 = vpop.f32.mrf.mxu0
        %v1523 = vadd.f32 %v1379, %v1522
        %1524 = vmatmul.bf16.gmra.mxu0 %v1223
        %v1525 = vpop.f32.mrf.mxu0
        %v1526 = vadd.f32 %v1379, %v1525
        %v1527 = vpop.f32.mrf.mxu0
        %v1528 = vadd.f32 %v1379, %v1527
        %1529 = vmatmul.bf16.gmra.mxu0 %v1224
        %v1530 = vpop.f32.mrf.mxu0
        %v1531 = vadd.f32 %v1379, %v1530
        %v1532 = vpop.f32.mrf.mxu0
        %v1533 = vadd.f32 %v1379, %v1532
        %1534 = vmatmul.bf16.gmra.mxu0 %v1225
        %v1535 = vpop.f32.mrf.mxu0
        %v1536 = vadd.f32 %v1379, %v1535
        %v1537 = vpop.f32.mrf.mxu0
        %v1538 = vadd.f32 %v1379, %v1537
        %1539 = vmatmul.bf16.gmra.mxu0 %v1226
        %v1540 = vpop.f32.mrf.mxu0
        %v1541 = vadd.f32 %v1379, %v1540
        %v1542 = vpop.f32.mrf.mxu0
        %v1543 = vadd.f32 %v1379, %v1542
        %1544 = vmatmul.bf16.gmra.mxu0 %v1227
        %v1545 = vpop.f32.mrf.mxu0
        %v1546 = vadd.f32 %v1379, %v1545
        %v1547 = vpop.f32.mrf.mxu0
        %v1548 = vadd.f32 %v1379, %v1547
        %1549 = vmatmul.bf16.gmra.mxu0 %v1228
        %v1550 = vpop.f32.mrf.mxu0
        %v1551 = vadd.f32 %v1379, %v1550
        %v1552 = vpop.f32.mrf.mxu0
        %v1553 = vadd.f32 %v1379, %v1552
        %1554 = vmatmul.bf16.gmra.mxu0 %v1229
        %v1555 = vpop.f32.mrf.mxu0
        %v1556 = vadd.f32 %v1379, %v1555
        %v1557 = vpop.f32.mrf.mxu0
        %v1558 = vadd.f32 %v1379, %v1557
        %1559 = vdwg.mxu0
        %v1560 = vld [vmem:[%s9] sm:$0xff]
        %v1561 = vld [vmem:[%s9 + $0x8] sm:$0xff]
        %v1562 = vld [vmem:[%s9 + $0x10] sm:$0xff]
        %v1563 = vld [vmem:[%s9 + $0x18] sm:$0xff]
        %v1564 = vld [vmem:[%s9 + $0x20] sm:$0xff]
        %v1565 = vld [vmem:[%s9 + $0x28] sm:$0xff]
        %v1566 = vld [vmem:[%s9 + $0x30] sm:$0xff]
        %v1567 = vld [vmem:[%s9 + $0x38] sm:$0xff]
        %v1568 = vld [vmem:[%s9 + $0x40] sm:$0xff]
        %v1569 = vld [vmem:[%s9 + $0x48] sm:$0xff]
        %v1570 = vld [vmem:[%s9 + $0x50] sm:$0xff]
        %v1571 = vld [vmem:[%s9 + $0x58] sm:$0xff]
        %v1572 = vld [vmem:[%s9 + $0x60] sm:$0xff]
        %v1573 = vld [vmem:[%s9 + $0x68] sm:$0xff]
        %v1574 = vld [vmem:[%s9 + $0x70] sm:$0xff]
        %v1575 = vld [vmem:[%s9 + $0x78] sm:$0xff]
        %v1576 = vld [vmem:[%s10] sm:$0x3]
        %v1578 = vperm.slane %v1576, 0
        %v1579 = vperm.slane %v1576, 1
        %v1598 = vunpack.c.l.b16 %v1560
        %v1599 = vunpack.c.h.b16 %v1560
        %v1600 = vunpack.c.l.b16 %v1561
        %v1601 = vunpack.c.h.b16 %v1561
        %v1602 = vunpack.c.l.b16 %v1562
        %v1603 = vunpack.c.h.b16 %v1562
        %v1604 = vunpack.c.l.b16 %v1563
        %v1605 = vunpack.c.h.b16 %v1563
        %v1606 = vunpack.c.l.b16 %v1564
        %v1607 = vunpack.c.h.b16 %v1564
        %v1608 = vunpack.c.l.b16 %v1565
        %v1609 = vunpack.c.h.b16 %v1565
        %v1610 = vunpack.c.l.b16 %v1566
        %v1611 = vunpack.c.h.b16 %v1566
        %v1612 = vunpack.c.l.b16 %v1567
        %v1613 = vunpack.c.h.b16 %v1567
        %v1614 = vunpack.c.l.b16 %v1568
        %v1615 = vunpack.c.h.b16 %v1568
        %v1616 = vunpack.c.l.b16 %v1569
        %v1617 = vunpack.c.h.b16 %v1569
        %v1618 = vunpack.c.l.b16 %v1570
        %v1619 = vunpack.c.h.b16 %v1570
        %v1620 = vunpack.c.l.b16 %v1571
        %v1621 = vunpack.c.h.b16 %v1571
        %v1622 = vunpack.c.l.b16 %v1572
        %v1623 = vunpack.c.h.b16 %v1572
        %v1624 = vunpack.c.l.b16 %v1573
        %v1625 = vunpack.c.h.b16 %v1573
        %v1626 = vunpack.c.l.b16 %v1574
        %v1627 = vunpack.c.h.b16 %v1574
        %v1628 = vunpack.c.l.b16 %v1575
        %v1629 = vunpack.c.h.b16 %v1575
        %v1630 = vpack.c.b16 %v1600, %v1598
        %v1631 = vpack.c.b16 %v1601, %v1599
        %v1632 = vpack.c.b16 %v1604, %v1602
        %v1633 = vpack.c.b16 %v1605, %v1603
        %v1634 = vpack.c.b16 %v1608, %v1606
        %v1635 = vpack.c.b16 %v1609, %v1607
        %v1636 = vpack.c.b16 %v1612, %v1610
        %v1637 = vpack.c.b16 %v1613, %v1611
        %v1638 = vpack.c.b16 %v1616, %v1614
        %v1639 = vpack.c.b16 %v1617, %v1615
        %v1640 = vpack.c.b16 %v1620, %v1618
        %v1641 = vpack.c.b16 %v1621, %v1619
        %v1642 = vpack.c.b16 %v1624, %v1622
        %v1643 = vpack.c.b16 %v1625, %v1623
        %v1644 = vpack.c.b16 %v1628, %v1626
        %v1645 = vpack.c.b16 %v1629, %v1627
        %1662 = vmatpush.bf16.msra.mxu0 %v1644
        %1663 = vmatpush.bf16.msra.mxu0 %v1642
        %1664 = vmatpush.bf16.msra.mxu0 %v1640
        %1665 = vmatpush.bf16.msra.mxu0 %v1638
        %1666 = vmatpush.bf16.msra.mxu0 %v1636
        %1667 = vmatpush.bf16.msra.mxu0 %v1634
        %1668 = vmatpush.bf16.msra.mxu0 %v1632
        %1669 = vmatpush.bf16.msra.mxu0 %v1630
        %1670 = vmatmul.bf16.gmra.mxu0 %v1278
        %v1671 = vpop.f32.mrf.mxu0
        %v1672 = vadd.f32 %v1578, %v1671
        %v1673 = vpop.f32.mrf.mxu0
        %1674 = vdwg.mxu0
        %1675 = vmatpush.bf16.msra.mxu0 %v1645
        %1676 = vmatpush.bf16.msra.mxu0 %v1643
        %1677 = vmatpush.bf16.msra.mxu0 %v1641
        %1678 = vmatpush.bf16.msra.mxu0 %v1639
        %1679 = vmatpush.bf16.msra.mxu0 %v1637
        %1680 = vmatpush.bf16.msra.mxu0 %v1635
        %1681 = vmatpush.bf16.msra.mxu0 %v1633
        %1682 = vmatpush.bf16.msra.mxu0 %v1631
        %1683 = vmatmul.bf16.gmra.mxu0 %v1278
        %v1684 = vpop.f32.mrf.mxu0
        %v1685 = vadd.f32 %v1579, %v1684
        %v1686 = vpop.f32.mrf.mxu0
        %1687 = vdwg.mxu0
        %v1688 = vmul.f32 %v1357, %v1241
        %v1689 = vmul.f32 %v1357, %v1246
        %v1690 = vmul.f32 %v1357, %v1251
        %v1691 = vmul.f32 %v1357, %v1256
        %v1692 = vpack.c.bf16 %v1689, %v1688
        %v1693 = vpack.c.bf16 %v1691, %v1690
        %v1694 = vpack.c.bf16 %v1474, %v1472
        %v1695 = vpack.c.bf16 %v1479, %v1477
        %v1696 = vpack.c.bf16 %v1484, %v1482
        %v1697 = vpack.c.bf16 %v1489, %v1487
        %v1698 = vpack.c.bf16 %v1494, %v1492
        %v1699 = vpack.c.bf16 %v1499, %v1497
        %v1700 = vpack.c.bf16 %v1504, %v1502
        %v1701 = vpack.c.bf16 %v1509, %v1507
        %1702 = vmatpush.bf16.xpose.msra.mxu0 %v1701
        %1703 = vmatpush.bf16.xpose.msra.mxu0 %v1700
        %1704 = vmatpush.bf16.xpose.msra.mxu0 %v1699
        %1705 = vmatpush.bf16.xpose.msra.mxu0 %v1698
        %1706 = vmatpush.bf16.xpose.msra.mxu0 %v1697
        %1707 = vmatpush.bf16.xpose.msra.mxu0 %v1696
        %1708 = vmatpush.bf16.xpose.msra.mxu0 %v1695
        %1709 = vmatpush.bf16.xpose.msra.mxu0 %v1694
        %1710 = vmatmul.bf16.gmra.mxu0 %v1692
        %v1711 = vpop.f32.mrf.mxu0
        %v1712 = vadd.f32 %v1236, %v1711
        %v1713 = vpop.f32.mrf.mxu0
        %v1714 = vadd.f32 %v1236, %v1713
        %1715 = vmatmul.bf16.gmra.mxu0 %v1693
        %v1716 = vpop.f32.mrf.mxu0
        %v1717 = vadd.f32 %v1236, %v1716
        %v1718 = vpop.f32.mrf.mxu0
        %v1719 = vadd.f32 %v1236, %v1718
        %1720 = vdwg.mxu0
        %v1721 = vpack.c.bf16 %v1672, %v1672
        %1722 = vmatpush.bf16.xpose.msra.mxu0 0
        %1723 = vmatpush.bf16.xpose.msra.mxu0 0
        %1724 = vmatpush.bf16.xpose.msra.mxu0 0
        %1725 = vmatpush.bf16.xpose.msra.mxu0 0
        %1726 = vmatpush.bf16.xpose.msra.mxu0 0
        %1727 = vmatpush.bf16.xpose.msra.mxu0 0
        %1728 = vmatpush.bf16.xpose.msra.mxu0 0
        %1729 = vmatpush.bf16.xpose.msra.mxu0 %v1721
        %1730 = vmatmul.bf16.gmra.mxu0 %v1692
        %v1731 = vpop.f32.mrf.mxu0
        %v1732 = vadd.f32 0.0, %v1731
        %v1733 = vpop.f32.mrf.mxu0
        %v1734 = vadd.f32 0.0, %v1733
        %1735 = vmatmul.bf16.gmra.mxu0 %v1693
        %v1736 = vpop.f32.mrf.mxu0
        %v1737 = vadd.f32 0.0, %v1736
        %v1738 = vpop.f32.mrf.mxu0
        %v1739 = vadd.f32 0.0, %v1738
        %1740 = vdwg.mxu0
        %1741 = vmax.xlane.f32.xlu0 %v1712
        %v1742 = vpop.xlane.xlu0 %1741
        %1743 = vmax.xlane.f32.xlu0 %v1714
        %v1744 = vpop.xlane.xlu0 %1743
        %1745 = vmax.xlane.f32.xlu0 %v1717
        %v1746 = vpop.xlane.xlu0 %1745
        %1747 = vmax.xlane.f32.xlu0 %v1719
        %v1748 = vpop.xlane.xlu0 %1747
        %vm1749 = vcmask 64512
        %v1750 = vsel %vm1749, %v1732, -inf
        %1751 = vmax.xlane.f32.xlu0 %v1750
        %v1752 = vpop.xlane.xlu0 %1751
        %v1753 = vsel %vm1749, %v1734, -inf
        %1754 = vmax.xlane.f32.xlu0 %v1753
        %v1755 = vpop.xlane.xlu0 %1754
        %v1756 = vsel %vm1749, %v1737, -inf
        %1757 = vmax.xlane.f32.xlu0 %v1756
        %v1758 = vpop.xlane.xlu0 %1757
        %v1759 = vsel %vm1749, %v1739, -inf
        %1760 = vmax.xlane.f32.xlu0 %v1759
        %v1761 = vpop.xlane.xlu0 %1760
        %v1762 = vmax.f32 %v1742, %v1752
        %v1763 = vmax.f32 %v1744, %v1755
        %v1764 = vmax.f32 %v1746, %v1758
        %v1765 = vmax.f32 %v1748, %v1761
        %v1766 = vsub.f32 %v1712, %v1762
        %v1767 = vsub.f32 %v1714, %v1763
        %v1768 = vsub.f32 %v1717, %v1764
        %v1769 = vsub.f32 %v1719, %v1765
        %v1770 = vmul.f32 %v1766, 1.442695
        %v1771 = vpow.pop %v1770
        %v1772 = vmul.f32 %v1767, 1.442695
        %v1773 = vpow.pop %v1772
        %v1774 = vmul.f32 %v1768, 1.442695
        %v1775 = vpow.pop %v1774
        %v1776 = vmul.f32 %v1769, 1.442695
        %v1777 = vpow.pop %v1776
        %v1778 = vsub.f32 %v1732, %v1762
        %v1779 = vsub.f32 %v1734, %v1763
        %v1780 = vsub.f32 %v1737, %v1764
        %v1781 = vsub.f32 %v1739, %v1765
        %v1782 = vmul.f32 %v1778, 1.442695
        %v1783 = vpow.pop %v1782
        %v1784 = vmul.f32 %v1779, 1.442695
        %v1785 = vpow.pop %v1784
        %v1786 = vmul.f32 %v1780, 1.442695
        %v1787 = vpow.pop %v1786
        %v1788 = vmul.f32 %v1781, 1.442695
        %v1789 = vpow.pop %v1788
        %1790 = vadd.xlane.f32.xlu0 %v1771
        %v1791 = vpop.xlane.xlu0 %1790
        %1792 = vadd.xlane.f32.xlu0 %v1773
        %v1793 = vpop.xlane.xlu0 %1792
        %1794 = vadd.xlane.f32.xlu0 %v1775
        %v1795 = vpop.xlane.xlu0 %1794
        %1796 = vadd.xlane.f32.xlu0 %v1777
        %v1797 = vpop.xlane.xlu0 %1796
        %v1798 = vsel %vm1749, %v1783, 0.0
        %1799 = vadd.xlane.f32.xlu0 %v1798
        %v1800 = vpop.xlane.xlu0 %1799
        %v1801 = vsel %vm1749, %v1785, 0.0
        %1802 = vadd.xlane.f32.xlu0 %v1801
        %v1803 = vpop.xlane.xlu0 %1802
        %v1804 = vsel %vm1749, %v1787, 0.0
        %1805 = vadd.xlane.f32.xlu0 %v1804
        %v1806 = vpop.xlane.xlu0 %1805
        %v1807 = vsel %vm1749, %v1789, 0.0
        %1808 = vadd.xlane.f32.xlu0 %v1807
        %v1809 = vpop.xlane.xlu0 %1808
        %v1810 = vadd.f32 %v1791, %v1800
        %v1811 = vadd.f32 %v1793, %v1803
        %v1812 = vadd.f32 %v1795, %v1806
        %v1813 = vadd.f32 %v1797, %v1809
        %v1814 = vrcp.pop %v1810
        %v1815 = vrcp.pop %v1811
        %v1816 = vrcp.pop %v1812
        %v1817 = vrcp.pop %v1813
        %v1818 = vmul.f32 %v1771, %v1814
        %v1819 = vmul.f32 %v1773, %v1815
        %v1820 = vmul.f32 %v1775, %v1816
        %v1821 = vmul.f32 %v1777, %v1817
        %v1822 = vpack.c.bf16 %v1819, %v1818
        %v1823 = vpack.c.bf16 %v1821, %v1820
        %v1824 = vpack.c.bf16 %v1523, %v1521
        %v1825 = vpack.c.bf16 %v1528, %v1526
        %v1826 = vpack.c.bf16 %v1533, %v1531
        %v1827 = vpack.c.bf16 %v1538, %v1536
        %v1828 = vpack.c.bf16 %v1543, %v1541
        %v1829 = vpack.c.bf16 %v1548, %v1546
        %v1830 = vpack.c.bf16 %v1553, %v1551
        %v1831 = vpack.c.bf16 %v1558, %v1556
        %v1832 = vmul.f32 %v1783, %v1814
        %v1833 = vmul.f32 %v1785, %v1815
        %v1834 = vmul.f32 %v1787, %v1816
        %v1835 = vmul.f32 %v1789, %v1817
        %v1836 = vpack.c.bf16 %v1833, %v1832
        %v1837 = vpack.c.bf16 %v1835, %v1834
        %v1838 = vpack.c.bf16 %v1685, %v1685
        %v1840 = vsel %vm1749, %v1836, 0
        %v1843 = vsel %vm1749, %v1837, 0
        %vm1845 = vcmask 1043456
        %v1847 = vsel %vm1845, %v1838, 0
        %1849 = vmatpush.bf16.msra.mxu0 0
        %1850 = vmatpush.bf16.msra.mxu0 0
        %1851 = vmatpush.bf16.msra.mxu0 0
        %1852 = vmatpush.bf16.msra.mxu0 0
        %1853 = vmatpush.bf16.msra.mxu0 0
        %1854 = vmatpush.bf16.msra.mxu0 0
        %1855 = vmatpush.bf16.msra.mxu0 0
        %1856 = vmatpush.bf16.msra.mxu0 %v1847
        %1857 = vmatmul.bf16.gmra.mxu0 %v1840
        %v1858 = vpop.f32.mrf.mxu0
        %v1859 = vadd.f32 0.0, %v1858
        %v1860 = vpop.f32.mrf.mxu0
        %v1861 = vadd.f32 0.0, %v1860
        %1862 = vmatmul.bf16.gmra.mxu0 %v1843
        %v1863 = vpop.f32.mrf.mxu0
        %v1864 = vadd.f32 0.0, %v1863
        %v1865 = vpop.f32.mrf.mxu0
        %v1866 = vadd.f32 0.0, %v1865
        %1867 = vdwg.mxu0
        %1868 = vmatpush.bf16.msra.mxu0 %v1831
        %1869 = vmatpush.bf16.msra.mxu0 %v1830
        %1870 = vmatpush.bf16.msra.mxu0 %v1829
        %1871 = vmatpush.bf16.msra.mxu0 %v1828
        %1872 = vmatpush.bf16.msra.mxu0 %v1827
        %1873 = vmatpush.bf16.msra.mxu0 %v1826
        %1874 = vmatpush.bf16.msra.mxu0 %v1825
        %1875 = vmatpush.bf16.msra.mxu0 %v1824
        %1876 = vmatmul.bf16.gmra.mxu0 %v1822
        %v1877 = vpop.f32.mrf.mxu0
        %v1878 = vadd.f32 %v1859, %v1877
        %v1879 = vpop.f32.mrf.mxu0
        %v1880 = vadd.f32 %v1861, %v1879
        %1881 = vmatmul.bf16.gmra.mxu0 %v1823
        %v1882 = vpop.f32.mrf.mxu0
        %v1883 = vadd.f32 %v1864, %v1882
        %v1884 = vpop.f32.mrf.mxu0
        %v1885 = vadd.f32 %v1866, %v1884
        %1886 = vdwg.mxu0
        %v1887 = vmul.f32 %v1878, %v1241
        %v1888 = vmul.f32 %v1880, %v1246
        %v1889 = vmul.f32 %v1883, %v1251
        %v1890 = vmul.f32 %v1885, %v1256
        %v1891 = vadd.f32 %v1887, %v1888
        %v1892 = vadd.f32 %v1891, %v1889
        %v1893 = vadd.f32 %v1892, %v1890
        %v1894 = vpack.c.bf16 %v1893, %v1893
        %v1895 = vld [vmem:[%s11] sm:$0xf]
        %v1896 = vld [vmem:[%s11 + $0x4] sm:$0xf]
        %v1897 = vld [vmem:[%s11 + $0x8] sm:$0xf]
        %v1898 = vld [vmem:[%s11 + $0xc] sm:$0xf]
        %v1899 = vld [vmem:[%s11 + $0x10] sm:$0xf]
        %v1900 = vld [vmem:[%s11 + $0x14] sm:$0xf]
        %v1901 = vld [vmem:[%s11 + $0x18] sm:$0xf]
        %v1902 = vld [vmem:[%s11 + $0x1c] sm:$0xf]
        %v1903 = vld [vmem:[%s11 + $0x20] sm:$0xf]
        %v1904 = vld [vmem:[%s11 + $0x24] sm:$0xf]
        %v1905 = vld [vmem:[%s11 + $0x28] sm:$0xf]
        %v1906 = vld [vmem:[%s11 + $0x2c] sm:$0xf]
        %v1907 = vld [vmem:[%s11 + $0x30] sm:$0xf]
        %v1908 = vld [vmem:[%s11 + $0x34] sm:$0xf]
        %v1909 = vld [vmem:[%s11 + $0x38] sm:$0xf]
        %v1910 = vld [vmem:[%s11 + $0x3c] sm:$0xf]
        %v1911 = vld [vmem:[%s12] sm:$0x1]
        %v1913 = vperm.slane %v1911, 0
        %v1931 = vunpack.c.l.b16 %v1895
        %v1932 = vunpack.c.l.b16 %v1896
        %v1933 = vunpack.c.l.b16 %v1897
        %v1934 = vunpack.c.l.b16 %v1898
        %v1935 = vunpack.c.l.b16 %v1899
        %v1936 = vunpack.c.l.b16 %v1900
        %v1937 = vunpack.c.l.b16 %v1901
        %v1938 = vunpack.c.l.b16 %v1902
        %v1939 = vunpack.c.l.b16 %v1903
        %v1940 = vunpack.c.l.b16 %v1904
        %v1941 = vunpack.c.l.b16 %v1905
        %v1942 = vunpack.c.l.b16 %v1906
        %v1943 = vunpack.c.l.b16 %v1907
        %v1944 = vunpack.c.l.b16 %v1908
        %v1945 = vunpack.c.l.b16 %v1909
        %v1946 = vunpack.c.l.b16 %v1910
        %v1947 = vpack.c.b16 %v1932, %v1931
        %v1948 = vpack.c.b16 %v1934, %v1933
        %v1949 = vpack.c.b16 %v1936, %v1935
        %v1950 = vpack.c.b16 %v1938, %v1937
        %v1951 = vpack.c.b16 %v1940, %v1939
        %v1952 = vpack.c.b16 %v1942, %v1941
        %v1953 = vpack.c.b16 %v1944, %v1943
        %v1954 = vpack.c.b16 %v1946, %v1945
        %1963 = vmatpush.bf16.msra.mxu0 %v1954
        %1964 = vmatpush.bf16.msra.mxu0 %v1953
        %1965 = vmatpush.bf16.msra.mxu0 %v1952
        %1966 = vmatpush.bf16.msra.mxu0 %v1951
        %1967 = vmatpush.bf16.msra.mxu0 %v1950
        %1968 = vmatpush.bf16.msra.mxu0 %v1949
        %1969 = vmatpush.bf16.msra.mxu0 %v1948
        %1970 = vmatpush.bf16.msra.mxu0 %v1947
        %1971 = vmatmul.bf16.gmra.mxu0 %v1894
        %v1972 = vpop.f32.mrf.mxu0
        %v1973 = vadd.f32 %v1913, %v1972
        %v1974 = vpop.f32.mrf.mxu0
        %1975 = vdwg.mxu0
        %v1976 = vadd.f32 %v1973, %v1257
        %1977 = vadd.xlane.f32.xlu0 %v1976
        %v1978 = vpop.xlane.xlu0 %1977
        %v1979 = vmul.f32 %v1978, %v933
        %v1980 = vsub.f32 %v1976, %v1979
        %v1981 = vmul.f32 %v1980, %v1980
        %1982 = vadd.xlane.f32.xlu0 %v1981
        %v1983 = vpop.xlane.xlu0 %1982
        %v1984 = vmul.f32 %v1983, %v933
        %v1985 = vadd.f32 %v1984, 1e-05
        %v1986 = vrsqrt.pop %v1985
        %v1987 = vmul.f32 %v1986, %v1985
        %v1988 = vmul.f32 %v1987, %v1986
        %v1989 = vmul.f32 0.5, %v1988
        %v1990 = vsub.f32 1.5, %v1989
        %v1991 = vmul.f32 %v1986, %v1990
        %vm1992 = vweird.f32 %v1985
        %vm1993 = vweird.f32 %v1986
        %vm1994 = vmor %vm1992, %vm1993
        %v1995 = vsel %vm1994, %v1986, %v1991
        %v1996 = vmul.f32 %v1980, %v1995
        %v1997 = vpack.c.bf16 %v1996, %v1996
        %v1998 = vld [vmem:[%s13] sm:$0xff]
        %v1999 = vld [vmem:[%s13 + $0x8] sm:$0xff]
        %v2000 = vld [vmem:[%s13 + $0x10] sm:$0xff]
        %v2001 = vld [vmem:[%s13 + $0x18] sm:$0xff]
        %v2002 = vld [vmem:[%s13 + $0x20] sm:$0xff]
        %v2003 = vld [vmem:[%s13 + $0x28] sm:$0xff]
        %v2004 = vld [vmem:[%s13 + $0x30] sm:$0xff]
        %v2005 = vld [vmem:[%s13 + $0x38] sm:$0xff]
        %v2006 = vld [vmem:[%s13 + $0x40] sm:$0xff]
        %v2007 = vld [vmem:[%s13 + $0x48] sm:$0xff]
        %v2008 = vld [vmem:[%s13 + $0x50] sm:$0xff]
        %v2009 = vld [vmem:[%s13 + $0x58] sm:$0xff]
        %v2010 = vld [vmem:[%s13 + $0x60] sm:$0xff]
        %v2011 = vld [vmem:[%s13 + $0x68] sm:$0xff]
        %v2012 = vld [vmem:[%s13 + $0x70] sm:$0xff]
        %v2013 = vld [vmem:[%s13 + $0x78] sm:$0xff]
        %v2014 = vld [vmem:[%s13 + $0x80] sm:$0xff]
        %v2015 = vld [vmem:[%s13 + $0x88] sm:$0xff]
        %v2016 = vld [vmem:[%s13 + $0x90] sm:$0xff]
        %v2017 = vld [vmem:[%s13 + $0x98] sm:$0xff]
        %v2018 = vld [vmem:[%s13 + $0xa0] sm:$0xff]
        %v2019 = vld [vmem:[%s13 + $0xa8] sm:$0xff]
        %v2020 = vld [vmem:[%s13 + $0xb0] sm:$0xff]
        %v2021 = vld [vmem:[%s13 + $0xb8] sm:$0xff]
        %v2022 = vld [vmem:[%s13 + $0xc0] sm:$0xff]
        %v2023 = vld [vmem:[%s13 + $0xc8] sm:$0xff]
        %v2024 = vld [vmem:[%s13 + $0xd0] sm:$0xff]
        %v2025 = vld [vmem:[%s13 + $0xd8] sm:$0xff]
        %v2026 = vld [vmem:[%s13 + $0xe0] sm:$0xff]
        %v2027 = vld [vmem:[%s13 + $0xe8] sm:$0xff]
        %v2028 = vld [vmem:[%s13 + $0xf0] sm:$0xff]
        %v2029 = vld [vmem:[%s13 + $0xf8] sm:$0xff]
        %v2030 = vld [vmem:[%s14] sm:$0xf]
        %v2032 = vperm.slane %v2030, 0
        %v2033 = vperm.slane %v2030, 1
        %v2034 = vperm.slane %v2030, 2
        %v2035 = vperm.slane %v2030, 3
        %v2072 = vunpack.c.l.b16 %v1998
        %v2073 = vunpack.c.h.b16 %v1998
        %v2074 = vunpack.c.l.b16 %v1999
        %v2075 = vunpack.c.h.b16 %v1999
        %v2076 = vunpack.c.l.b16 %v2000
        %v2077 = vunpack.c.h.b16 %v2000
        %v2078 = vunpack.c.l.b16 %v2001
        %v2079 = vunpack.c.h.b16 %v2001
        %v2080 = vunpack.c.l.b16 %v2002
        %v2081 = vunpack.c.h.b16 %v2002
        %v2082 = vunpack.c.l.b16 %v2003
        %v2083 = vunpack.c.h.b16 %v2003
        %v2084 = vunpack.c.l.b16 %v2004
        %v2085 = vunpack.c.h.b16 %v2004
        %v2086 = vunpack.c.l.b16 %v2005
        %v2087 = vunpack.c.h.b16 %v2005
        %v2088 = vunpack.c.l.b16 %v2006
        %v2089 = vunpack.c.h.b16 %v2006
        %v2090 = vunpack.c.l.b16 %v2007
        %v2091 = vunpack.c.h.b16 %v2007
        %v2092 = vunpack.c.l.b16 %v2008
        %v2093 = vunpack.c.h.b16 %v2008
        %v2094 = vunpack.c.l.b16 %v2009
        %v2095 = vunpack.c.h.b16 %v2009
        %v2096 = vunpack.c.l.b16 %v2010
        %v2097 = vunpack.c.h.b16 %v2010
        %v2098 = vunpack.c.l.b16 %v2011
        %v2099 = vunpack.c.h.b16 %v2011
        %v2100 = vunpack.c.l.b16 %v2012
        %v2101 = vunpack.c.h.b16 %v2012
        %v2102 = vunpack.c.l.b16 %v2013
        %v2103 = vunpack.c.h.b16 %v2013
        %v2104 = vunpack.c.l.b16 %v2014
        %v2105 = vunpack.c.h.b16 %v2014
        %v2106 = vunpack.c.l.b16 %v2015
        %v2107 = vunpack.c.h.b16 %v2015
        %v2108 = vunpack.c.l.b16 %v2016
        %v2109 = vunpack.c.h.b16 %v2016
        %v2110 = vunpack.c.l.b16 %v2017
        %v2111 = vunpack.c.h.b16 %v2017
        %v2112 = vunpack.c.l.b16 %v2018
        %v2113 = vunpack.c.h.b16 %v2018
        %v2114 = vunpack.c.l.b16 %v2019
        %v2115 = vunpack.c.h.b16 %v2019
        %v2116 = vunpack.c.l.b16 %v2020
        %v2117 = vunpack.c.h.b16 %v2020
        %v2118 = vunpack.c.l.b16 %v2021
        %v2119 = vunpack.c.h.b16 %v2021
        %v2120 = vunpack.c.l.b16 %v2022
        %v2121 = vunpack.c.h.b16 %v2022
        %v2122 = vunpack.c.l.b16 %v2023
        %v2123 = vunpack.c.h.b16 %v2023
        %v2124 = vunpack.c.l.b16 %v2024
        %v2125 = vunpack.c.h.b16 %v2024
        %v2126 = vunpack.c.l.b16 %v2025
        %v2127 = vunpack.c.h.b16 %v2025
        %v2128 = vunpack.c.l.b16 %v2026
        %v2129 = vunpack.c.h.b16 %v2026
        %v2130 = vunpack.c.l.b16 %v2027
        %v2131 = vunpack.c.h.b16 %v2027
        %v2132 = vunpack.c.l.b16 %v2028
        %v2133 = vunpack.c.h.b16 %v2028
        %v2134 = vunpack.c.l.b16 %v2029
        %v2135 = vunpack.c.h.b16 %v2029
        %v2136 = vpack.c.b16 %v2076, %v2072
        %v2137 = vpack.c.b16 %v2077, %v2073
        %v2138 = vpack.c.b16 %v2078, %v2074
        %v2139 = vpack.c.b16 %v2079, %v2075
        %v2140 = vpack.c.b16 %v2084, %v2080
        %v2141 = vpack.c.b16 %v2085, %v2081
        %v2142 = vpack.c.b16 %v2086, %v2082
        %v2143 = vpack.c.b16 %v2087, %v2083
        %v2144 = vpack.c.b16 %v2092, %v2088
        %v2145 = vpack.c.b16 %v2093, %v2089
        %v2146 = vpack.c.b16 %v2094, %v2090
        %v2147 = vpack.c.b16 %v2095, %v2091
        %v2148 = vpack.c.b16 %v2100, %v2096
        %v2149 = vpack.c.b16 %v2101, %v2097
        %v2150 = vpack.c.b16 %v2102, %v2098
        %v2151 = vpack.c.b16 %v2103, %v2099
        %v2152 = vpack.c.b16 %v2108, %v2104
        %v2153 = vpack.c.b16 %v2109, %v2105
        %v2154 = vpack.c.b16 %v2110, %v2106
        %v2155 = vpack.c.b16 %v2111, %v2107
        %v2156 = vpack.c.b16 %v2116, %v2112
        %v2157 = vpack.c.b16 %v2117, %v2113
        %v2158 = vpack.c.b16 %v2118, %v2114
        %v2159 = vpack.c.b16 %v2119, %v2115
        %v2160 = vpack.c.b16 %v2124, %v2120
        %v2161 = vpack.c.b16 %v2125, %v2121
        %v2162 = vpack.c.b16 %v2126, %v2122
        %v2163 = vpack.c.b16 %v2127, %v2123
        %v2164 = vpack.c.b16 %v2132, %v2128
        %v2165 = vpack.c.b16 %v2133, %v2129
        %v2166 = vpack.c.b16 %v2134, %v2130
        %v2167 = vpack.c.b16 %v2135, %v2131
        %2200 = vmatpush.bf16.msra.mxu0 %v2164
        %2201 = vmatpush.bf16.msra.mxu0 %v2160
        %2202 = vmatpush.bf16.msra.mxu0 %v2156
        %2203 = vmatpush.bf16.msra.mxu0 %v2152
        %2204 = vmatpush.bf16.msra.mxu0 %v2148
        %2205 = vmatpush.bf16.msra.mxu0 %v2144
        %2206 = vmatpush.bf16.msra.mxu0 %v2140
        %2207 = vmatpush.bf16.msra.mxu0 %v2136
        %2208 = vmatmul.bf16.gmra.mxu0 %v1997
        %v2209 = vpop.f32.mrf.mxu0
        %v2210 = vadd.f32 %v2032, %v2209
        %v2211 = vpop.f32.mrf.mxu0
        %2212 = vdwg.mxu0
        %2213 = vmatpush.bf16.msra.mxu0 %v2165
        %2214 = vmatpush.bf16.msra.mxu0 %v2161
        %2215 = vmatpush.bf16.msra.mxu0 %v2157
        %2216 = vmatpush.bf16.msra.mxu0 %v2153
        %2217 = vmatpush.bf16.msra.mxu0 %v2149
        %2218 = vmatpush.bf16.msra.mxu0 %v2145
        %2219 = vmatpush.bf16.msra.mxu0 %v2141
        %2220 = vmatpush.bf16.msra.mxu0 %v2137
        %2221 = vmatmul.bf16.gmra.mxu0 %v1997
        %v2222 = vpop.f32.mrf.mxu0
        %v2223 = vadd.f32 %v2033, %v2222
        %v2224 = vpop.f32.mrf.mxu0
        %2225 = vdwg.mxu0
        %2226 = vmatpush.bf16.msra.mxu0 %v2166
        %2227 = vmatpush.bf16.msra.mxu0 %v2162
        %2228 = vmatpush.bf16.msra.mxu0 %v2158
        %2229 = vmatpush.bf16.msra.mxu0 %v2154
        %2230 = vmatpush.bf16.msra.mxu0 %v2150
        %2231 = vmatpush.bf16.msra.mxu0 %v2146
        %2232 = vmatpush.bf16.msra.mxu0 %v2142
        %2233 = vmatpush.bf16.msra.mxu0 %v2138
        %2234 = vmatmul.bf16.gmra.mxu0 %v1997
        %v2235 = vpop.f32.mrf.mxu0
        %v2236 = vadd.f32 %v2034, %v2235
        %v2237 = vpop.f32.mrf.mxu0
        %2238 = vdwg.mxu0
        %2239 = vmatpush.bf16.msra.mxu0 %v2167
        %2240 = vmatpush.bf16.msra.mxu0 %v2163
        %2241 = vmatpush.bf16.msra.mxu0 %v2159
        %2242 = vmatpush.bf16.msra.mxu0 %v2155
        %2243 = vmatpush.bf16.msra.mxu0 %v2151
        %2244 = vmatpush.bf16.msra.mxu0 %v2147
        %2245 = vmatpush.bf16.msra.mxu0 %v2143
        %2246 = vmatpush.bf16.msra.mxu0 %v2139
        %2247 = vmatmul.bf16.gmra.mxu0 %v1997
        %v2248 = vpop.f32.mrf.mxu0
        %v2249 = vadd.f32 %v2035, %v2248
        %v2250 = vpop.f32.mrf.mxu0
        %2251 = vdwg.mxu0
        %v2252 = vmul.f32 %v2210, 0.5
        %v2253 = vmul.f32 %v2223, 0.5
        %v2254 = vmul.f32 %v2236, 0.5
        %v2255 = vmul.f32 %v2249, 0.5
        %v2256 = vmul.f32 %v2210, 0.044715
        %v2257 = vmul.f32 %v2223, 0.044715
        %v2258 = vmul.f32 %v2236, 0.044715
        %v2259 = vmul.f32 %v2249, 0.044715
        %v2260 = vmul.f32 %v2256, %v2210
        %v2261 = vmul.f32 %v2257, %v2223
        %v2262 = vmul.f32 %v2258, %v2236
        %v2263 = vmul.f32 %v2259, %v2249
        %v2264 = vmul.f32 %v2260, %v2210
        %v2265 = vmul.f32 %v2261, %v2223
        %v2266 = vmul.f32 %v2262, %v2236
        %v2267 = vmul.f32 %v2263, %v2249
        %v2268 = vadd.f32 %v2210, %v2264
        %v2269 = vadd.f32 %v2223, %v2265
        %v2270 = vadd.f32 %v2236, %v2266
        %v2271 = vadd.f32 %v2249, %v2267
        %v2272 = vmul.f32 %v2268, 0.7978846
        %v2273 = vmul.f32 %v2269, 0.7978846
        %v2274 = vmul.f32 %v2270, 0.7978846
        %v2275 = vmul.f32 %v2271, 0.7978846
        %v2276 = vtanh.pop %v2272
        %v2277 = vtanh.pop %v2273
        %v2278 = vtanh.pop %v2274
        %v2279 = vtanh.pop %v2275
        %v2280 = vadd.f32 %v2276, 1.0
        %v2281 = vadd.f32 %v2277, 1.0
        %v2282 = vadd.f32 %v2278, 1.0
        %v2283 = vadd.f32 %v2279, 1.0
        %v2284 = vmul.f32 %v2252, %v2280
        %v2285 = vmul.f32 %v2253, %v2281
        %v2286 = vmul.f32 %v2254, %v2282
        %v2287 = vmul.f32 %v2255, %v2283
        %v2288 = vpack.c.bf16 %v2284, %v2284
        %v2289 = vpack.c.bf16 %v2285, %v2285
        %v2290 = vpack.c.bf16 %v2286, %v2286
        %v2291 = vpack.c.bf16 %v2287, %v2287
        %v2292 = vld [vmem:[%s15] sm:$0xf]
        %v2293 = vld [vmem:[%s15 + $0x4] sm:$0xf]
        %v2294 = vld [vmem:[%s15 + $0x8] sm:$0xf]
        %v2295 = vld [vmem:[%s15 + $0xc] sm:$0xf]
        %v2296 = vld [vmem:[%s15 + $0x10] sm:$0xf]
        %v2297 = vld [vmem:[%s15 + $0x14] sm:$0xf]
        %v2298 = vld [vmem:[%s15 + $0x18] sm:$0xf]
        %v2299 = vld [vmem:[%s15 + $0x1c] sm:$0xf]
        %v2300 = vld [vmem:[%s15 + $0x20] sm:$0xf]
        %v2301 = vld [vmem:[%s15 + $0x24] sm:$0xf]
        %v2302 = vld [vmem:[%s15 + $0x28] sm:$0xf]
        %v2303 = vld [vmem:[%s15 + $0x2c] sm:$0xf]
        %v2304 = vld [vmem:[%s15 + $0x30] sm:$0xf]
        %v2305 = vld [vmem:[%s15 + $0x34] sm:$0xf]
        %v2306 = vld [vmem:[%s15 + $0x38] sm:$0xf]
        %v2307 = vld [vmem:[%s15 + $0x3c] sm:$0xf]
        %v2308 = vld [vmem:[%s15 + $0x40] sm:$0xf]
        %v2309 = vld [vmem:[%s15 + $0x44] sm:$0xf]
        %v2310 = vld [vmem:[%s15 + $0x48] sm:$0xf]
        %v2311 = vld [vmem:[%s15 + $0x4c] sm:$0xf]
        %v2312 = vld [vmem:[%s15 + $0x50] sm:$0xf]
        %v2313 = vld [vmem:[%s15 + $0x54] sm:$0xf]
        %v2314 = vld [vmem:[%s15 + $0x58] sm:$0xf]
        %v2315 = vld [vmem:[%s15 + $0x5c] sm:$0xf]
        %v2316 = vld [vmem:[%s15 + $0x60] sm:$0xf]
        %v2317 = vld [vmem:[%s15 + $0x64] sm:$0xf]
        %v2318 = vld [vmem:[%s15 + $0x68] sm:$0xf]
        %v2319 = vld [vmem:[%s15 + $0x6c] sm:$0xf]
        %v2320 = vld [vmem:[%s15 + $0x70] sm:$0xf]
        %v2321 = vld [vmem:[%s15 + $0x74] sm:$0xf]
        %v2322 = vld [vmem:[%s15 + $0x78] sm:$0xf]
        %v2323 = vld [vmem:[%s15 + $0x7c] sm:$0xf]
        %v2324 = vld [vmem:[%s15 + $0x80] sm:$0xf]
        %v2325 = vld [vmem:[%s15 + $0x84] sm:$0xf]
        %v2326 = vld [vmem:[%s15 + $0x88] sm:$0xf]
        %v2327 = vld [vmem:[%s15 + $0x8c] sm:$0xf]
        %v2328 = vld [vmem:[%s15 + $0x90] sm:$0xf]
        %v2329 = vld [vmem:[%s15 + $0x94] sm:$0xf]
        %v2330 = vld [vmem:[%s15 + $0x98] sm:$0xf]
        %v2331 = vld [vmem:[%s15 + $0x9c] sm:$0xf]
        %v2332 = vld [vmem:[%s15 + $0xa0] sm:$0xf]
        %v2333 = vld [vmem:[%s15 + $0xa4] sm:$0xf]
        %v2334 = vld [vmem:[%s15 + $0xa8] sm:$0xf]
        %v2335 = vld [vmem:[%s15 + $0xac] sm:$0xf]
        %v2336 = vld [vmem:[%s15 + $0xb0] sm:$0xf]
        %v2337 = vld [vmem:[%s15 + $0xb4] sm:$0xf]
        %v2338 = vld [vmem:[%s15 + $0xb8] sm:$0xf]
        %v2339 = vld [vmem:[%s15 + $0xbc] sm:$0xf]
        %v2340 = vld [vmem:[%s15 + $0xc0] sm:$0xf]
        %v2341 = vld [vmem:[%s15 + $0xc4] sm:$0xf]
        %v2342 = vld [vmem:[%s15 + $0xc8] sm:$0xf]
        %v2343 = vld [vmem:[%s15 + $0xcc] sm:$0xf]
        %v2344 = vld [vmem:[%s15 + $0xd0] sm:$0xf]
        %v2345 = vld [vmem:[%s15 + $0xd4] sm:$0xf]
        %v2346 = vld [vmem:[%s15 + $0xd8] sm:$0xf]
        %v2347 = vld [vmem:[%s15 + $0xdc] sm:$0xf]
        %v2348 = vld [vmem:[%s15 + $0xe0] sm:$0xf]
        %v2349 = vld [vmem:[%s15 + $0xe4] sm:$0xf]
        %v2350 = vld [vmem:[%s15 + $0xe8] sm:$0xf]
        %v2351 = vld [vmem:[%s15 + $0xec] sm:$0xf]
        %v2352 = vld [vmem:[%s15 + $0xf0] sm:$0xf]
        %v2353 = vld [vmem:[%s15 + $0xf4] sm:$0xf]
        %v2354 = vld [vmem:[%s15 + $0xf8] sm:$0xf]
        %v2355 = vld [vmem:[%s15 + $0xfc] sm:$0xf]
        %v2420 = vunpack.c.l.b16 %v2292
        %v2421 = vunpack.c.l.b16 %v2293
        %v2422 = vunpack.c.l.b16 %v2294
        %v2423 = vunpack.c.l.b16 %v2295
        %v2424 = vunpack.c.l.b16 %v2296
        %v2425 = vunpack.c.l.b16 %v2297
        %v2426 = vunpack.c.l.b16 %v2298
        %v2427 = vunpack.c.l.b16 %v2299
        %v2428 = vunpack.c.l.b16 %v2300
        %v2429 = vunpack.c.l.b16 %v2301
        %v2430 = vunpack.c.l.b16 %v2302
        %v2431 = vunpack.c.l.b16 %v2303
        %v2432 = vunpack.c.l.b16 %v2304
        %v2433 = vunpack.c.l.b16 %v2305
        %v2434 = vunpack.c.l.b16 %v2306
        %v2435 = vunpack.c.l.b16 %v2307
        %v2436 = vunpack.c.l.b16 %v2308
        %v2437 = vunpack.c.l.b16 %v2309
        %v2438 = vunpack.c.l.b16 %v2310
        %v2439 = vunpack.c.l.b16 %v2311
        %v2440 = vunpack.c.l.b16 %v2312
        %v2441 = vunpack.c.l.b16 %v2313
        %v2442 = vunpack.c.l.b16 %v2314
        %v2443 = vunpack.c.l.b16 %v2315
        %v2444 = vunpack.c.l.b16 %v2316
        %v2445 = vunpack.c.l.b16 %v2317
        %v2446 = vunpack.c.l.b16 %v2318
        %v2447 = vunpack.c.l.b16 %v2319
        %v2448 = vunpack.c.l.b16 %v2320
        %v2449 = vunpack.c.l.b16 %v2321
        %v2450 = vunpack.c.l.b16 %v2322
        %v2451 = vunpack.c.l.b16 %v2323
        %v2452 = vunpack.c.l.b16 %v2324
        %v2453 = vunpack.c.l.b16 %v2325
        %v2454 = vunpack.c.l.b16 %v2326
        %v2455 = vunpack.c.l.b16 %v2327
        %v2456 = vunpack.c.l.b16 %v2328
        %v2457 = vunpack.c.l.b16 %v2329
        %v2458 = vunpack.c.l.b16 %v2330
        %v2459 = vunpack.c.l.b16 %v2331
        %v2460 = vunpack.c.l.b16 %v2332
        %v2461 = vunpack.c.l.b16 %v2333
        %v2462 = vunpack.c.l.b16 %v2334
        %v2463 = vunpack.c.l.b16 %v2335
        %v2464 = vunpack.c.l.b16 %v2336
        %v2465 = vunpack.c.l.b16 %v2337
        %v2466 = vunpack.c.l.b16 %v2338
        %v2467 = vunpack.c.l.b16 %v2339
        %v2468 = vunpack.c.l.b16 %v2340
        %v2469 = vunpack.c.l.b16 %v2341
        %v2470 = vunpack.c.l.b16 %v2342
        %v2471 = vunpack.c.l.b16 %v2343
        %v2472 = vunpack.c.l.b16 %v2344
        %v2473 = vunpack.c.l.b16 %v2345
        %v2474 = vunpack.c.l.b16 %v2346
        %v2475 = vunpack.c.l.b16 %v2347
        %v2476 = vunpack.c.l.b16 %v2348
        %v2477 = vunpack.c.l.b16 %v2349
        %v2478 = vunpack.c.l.b16 %v2350
        %v2479 = vunpack.c.l.b16 %v2351
        %v2480 = vunpack.c.l.b16 %v2352
        %v2481 = vunpack.c.l.b16 %v2353
        %v2482 = vunpack.c.l.b16 %v2354
        %v2483 = vunpack.c.l.b16 %v2355
        %v2484 = vpack.c.b16 %v2421, %v2420
        %v2485 = vpack.c.b16 %v2423, %v2422
        %v2486 = vpack.c.b16 %v2425, %v2424
        %v2487 = vpack.c.b16 %v2427, %v2426
        %v2488 = vpack.c.b16 %v2429, %v2428
        %v2489 = vpack.c.b16 %v2431, %v2430
        %v2490 = vpack.c.b16 %v2433, %v2432
        %v2491 = vpack.c.b16 %v2435, %v2434
        %v2492 = vpack.c.b16 %v2437, %v2436
        %v2493 = vpack.c.b16 %v2439, %v2438
        %v2494 = vpack.c.b16 %v2441, %v2440
        %v2495 = vpack.c.b16 %v2443, %v2442
        %v2496 = vpack.c.b16 %v2445, %v2444
        %v2497 = vpack.c.b16 %v2447, %v2446
        %v2498 = vpack.c.b16 %v2449, %v2448
        %v2499 = vpack.c.b16 %v2451, %v2450
        %v2500 = vpack.c.b16 %v2453, %v2452
        %v2501 = vpack.c.b16 %v2455, %v2454
        %v2502 = vpack.c.b16 %v2457, %v2456
        %v2503 = vpack.c.b16 %v2459, %v2458
        %v2504 = vpack.c.b16 %v2461, %v2460
        %v2505 = vpack.c.b16 %v2463, %v2462
        %v2506 = vpack.c.b16 %v2465, %v2464
        %v2507 = vpack.c.b16 %v2467, %v2466
        %v2508 = vpack.c.b16 %v2469, %v2468
        %v2509 = vpack.c.b16 %v2471, %v2470
        %v2510 = vpack.c.b16 %v2473, %v2472
        %v2511 = vpack.c.b16 %v2475, %v2474
        %v2512 = vpack.c.b16 %v2477, %v2476
        %v2513 = vpack.c.b16 %v2479, %v2478
        %v2514 = vpack.c.b16 %v2481, %v2480
        %v2515 = vpack.c.b16 %v2483, %v2482
        %2548 = vmatpush.bf16.msra.mxu0 %v2491
        %2549 = vmatpush.bf16.msra.mxu0 %v2490
        %2550 = vmatpush.bf16.msra.mxu0 %v2489
        %2551 = vmatpush.bf16.msra.mxu0 %v2488
        %2552 = vmatpush.bf16.msra.mxu0 %v2487
        %2553 = vmatpush.bf16.msra.mxu0 %v2486
        %2554 = vmatpush.bf16.msra.mxu0 %v2485
        %2555 = vmatpush.bf16.msra.mxu0 %v2484
        %2556 = vmatmul.bf16.gmra.mxu0 %v2288
        %v2557 = vpop.f32.mrf.mxu0
        %v2558 = vadd.f32 %v1976, %v2557
        %v2559 = vpop.f32.mrf.mxu0
        %2560 = vdwg.mxu0
        %2561 = vmatpush.bf16.msra.mxu0 %v2499
        %2562 = vmatpush.bf16.msra.mxu0 %v2498
        %2563 = vmatpush.bf16.msra.mxu0 %v2497
        %2564 = vmatpush.bf16.msra.mxu0 %v2496
        %2565 = vmatpush.bf16.msra.mxu0 %v2495
        %2566 = vmatpush.bf16.msra.mxu0 %v2494
        %2567 = vmatpush.bf16.msra.mxu0 %v2493
        %2568 = vmatpush.bf16.msra.mxu0 %v2492
        %2569 = vmatmul.bf16.gmra.mxu0 %v2289
        %v2570 = vpop.f32.mrf.mxu0
        %v2571 = vadd.f32 %v2558, %v2570
        %v2572 = vpop.f32.mrf.mxu0
        %2573 = vdwg.mxu0
        %2574 = vmatpush.bf16.msra.mxu0 %v2507
        %2575 = vmatpush.bf16.msra.mxu0 %v2506
        %2576 = vmatpush.bf16.msra.mxu0 %v2505
        %2577 = vmatpush.bf16.msra.mxu0 %v2504
        %2578 = vmatpush.bf16.msra.mxu0 %v2503
        %2579 = vmatpush.bf16.msra.mxu0 %v2502
        %2580 = vmatpush.bf16.msra.mxu0 %v2501
        %2581 = vmatpush.bf16.msra.mxu0 %v2500
        %2582 = vmatmul.bf16.gmra.mxu0 %v2290
        %v2583 = vpop.f32.mrf.mxu0
        %v2584 = vadd.f32 %v2571, %v2583
        %v2585 = vpop.f32.mrf.mxu0
        %2586 = vdwg.mxu0
        %2587 = vmatpush.bf16.msra.mxu0 %v2515
        %2588 = vmatpush.bf16.msra.mxu0 %v2514
        %2589 = vmatpush.bf16.msra.mxu0 %v2513
        %2590 = vmatpush.bf16.msra.mxu0 %v2512
        %2591 = vmatpush.bf16.msra.mxu0 %v2511
        %2592 = vmatpush.bf16.msra.mxu0 %v2510
        %2593 = vmatpush.bf16.msra.mxu0 %v2509
        %2594 = vmatpush.bf16.msra.mxu0 %v2508
        %2595 = vmatmul.bf16.gmra.mxu0 %v2291
        %v2596 = vpop.f32.mrf.mxu0
        %v2597 = vadd.f32 %v2584, %v2596
        %v2598 = vpop.f32.mrf.mxu0
        %2599 = vdwg.mxu0
        %2600 = vadd.xlane.f32.xlu0 %v2597
        %v2601 = vpop.xlane.xlu0 %2600
        %v2602 = vmul.f32 %v2601, %v933
        %v2603 = vsub.f32 %v2597, %v2602
        %v2604 = vmul.f32 %v2603, %v2603
        %2605 = vadd.xlane.f32.xlu0 %v2604
        %v2606 = vpop.xlane.xlu0 %2605
        %v2607 = vmul.f32 %v2606, %v933
        %v2608 = vadd.f32 %v2607, 1e-05
        %v2609 = vrsqrt.pop %v2608
        %v2610 = vmul.f32 %v2609, %v2608
        %v2611 = vmul.f32 %v2610, %v2609
        %v2612 = vmul.f32 0.5, %v2611
        %v2613 = vsub.f32 1.5, %v2612
        %v2614 = vmul.f32 %v2609, %v2613
        %vm2615 = vweird.f32 %v2608
        %vm2616 = vweird.f32 %v2609
        %vm2617 = vmor %vm2615, %vm2616
        %v2618 = vsel %vm2617, %v2609, %v2614
        %v2619 = vmul.f32 %v2603, %v2618
        %v2620 = vpack.c.bf16 %v2619, %v2619
        %s2621 = scalar_lea.vmem %s5, 64
        %v2622 = vld [vmem:[%s2621] sm:$0xf]
        %v2623 = vld [vmem:[%s2621 + $0x4] sm:$0xf]
        %v2624 = vld [vmem:[%s2621 + $0x8] sm:$0xf]
        %v2625 = vld [vmem:[%s2621 + $0xc] sm:$0xf]
        %v2626 = vld [vmem:[%s2621 + $0x10] sm:$0xf]
        %v2627 = vld [vmem:[%s2621 + $0x14] sm:$0xf]
        %v2628 = vld [vmem:[%s2621 + $0x18] sm:$0xf]
        %v2629 = vld [vmem:[%s2621 + $0x1c] sm:$0xf]
        %v2630 = vld [vmem:[%s2621 + $0x20] sm:$0xf]
        %v2631 = vld [vmem:[%s2621 + $0x24] sm:$0xf]
        %v2632 = vld [vmem:[%s2621 + $0x28] sm:$0xf]
        %v2633 = vld [vmem:[%s2621 + $0x2c] sm:$0xf]
        %v2634 = vld [vmem:[%s2621 + $0x30] sm:$0xf]
        %v2635 = vld [vmem:[%s2621 + $0x34] sm:$0xf]
        %v2636 = vld [vmem:[%s2621 + $0x38] sm:$0xf]
        %v2637 = vld [vmem:[%s2621 + $0x3c] sm:$0xf]
        %s2638 = scalar_lea.vmem %s6, 1
        %v2639 = vld [vmem:[%s2638] sm:$0x1]
        %v2641 = vperm.slane %v2639, 0
        %v2659 = vunpack.c.l.b16 %v2622
        %v2660 = vunpack.c.l.b16 %v2623
        %v2661 = vunpack.c.l.b16 %v2624
        %v2662 = vunpack.c.l.b16 %v2625
        %v2663 = vunpack.c.l.b16 %v2626
        %v2664 = vunpack.c.l.b16 %v2627
        %v2665 = vunpack.c.l.b16 %v2628
        %v2666 = vunpack.c.l.b16 %v2629
        %v2667 = vunpack.c.l.b16 %v2630
        %v2668 = vunpack.c.l.b16 %v2631
        %v2669 = vunpack.c.l.b16 %v2632
        %v2670 = vunpack.c.l.b16 %v2633
        %v2671 = vunpack.c.l.b16 %v2634
        %v2672 = vunpack.c.l.b16 %v2635
        %v2673 = vunpack.c.l.b16 %v2636
        %v2674 = vunpack.c.l.b16 %v2637
        %v2675 = vpack.c.b16 %v2660, %v2659
        %v2676 = vpack.c.b16 %v2662, %v2661
        %v2677 = vpack.c.b16 %v2664, %v2663
        %v2678 = vpack.c.b16 %v2666, %v2665
        %v2679 = vpack.c.b16 %v2668, %v2667
        %v2680 = vpack.c.b16 %v2670, %v2669
        %v2681 = vpack.c.b16 %v2672, %v2671
        %v2682 = vpack.c.b16 %v2674, %v2673
        %2691 = vmatpush.bf16.msra.mxu0 %v2682
        %2692 = vmatpush.bf16.msra.mxu0 %v2681
        %2693 = vmatpush.bf16.msra.mxu0 %v2680
        %2694 = vmatpush.bf16.msra.mxu0 %v2679
        %2695 = vmatpush.bf16.msra.mxu0 %v2678
        %2696 = vmatpush.bf16.msra.mxu0 %v2677
        %2697 = vmatpush.bf16.msra.mxu0 %v2676
        %2698 = vmatpush.bf16.msra.mxu0 %v2675
        %2699 = vmatmul.bf16.gmra.mxu0 %v2620
        %v2700 = vpop.f32.mrf.mxu0
        %v2701 = vadd.f32 %v2641, %v2700
        %v2702 = vpop.f32.mrf.mxu0
        %2703 = vdwg.mxu0
        %s2704 = scalar_lea.vmem %s7, 128
        %v2705 = vld [vmem:[%s2704] sm:$0xff]
        %v2706 = vld [vmem:[%s2704 + $0x8] sm:$0xff]
        %v2707 = vld [vmem:[%s2704 + $0x10] sm:$0xff]
        %v2708 = vld [vmem:[%s2704 + $0x18] sm:$0xff]
        %v2709 = vld [vmem:[%s2704 + $0x20] sm:$0xff]
        %v2710 = vld [vmem:[%s2704 + $0x28] sm:$0xff]
        %v2711 = vld [vmem:[%s2704 + $0x30] sm:$0xff]
        %v2712 = vld [vmem:[%s2704 + $0x38] sm:$0xff]
        %v2713 = vld [vmem:[%s2704 + $0x40] sm:$0xff]
        %v2714 = vld [vmem:[%s2704 + $0x48] sm:$0xff]
        %v2715 = vld [vmem:[%s2704 + $0x50] sm:$0xff]
        %v2716 = vld [vmem:[%s2704 + $0x58] sm:$0xff]
        %v2717 = vld [vmem:[%s2704 + $0x60] sm:$0xff]
        %v2718 = vld [vmem:[%s2704 + $0x68] sm:$0xff]
        %v2719 = vld [vmem:[%s2704 + $0x70] sm:$0xff]
        %v2720 = vld [vmem:[%s2704 + $0x78] sm:$0xff]
        %s2721 = scalar_lea.vmem %s8, 2
        %v2722 = vld [vmem:[%s2721] sm:$0x3]
        %v2724 = vperm.slane %v2722, 0
        %v2725 = vperm.slane %v2722, 1
        %v2744 = vunpack.c.l.b16 %v2705
        %v2745 = vunpack.c.h.b16 %v2705
        %v2746 = vunpack.c.l.b16 %v2706
        %v2747 = vunpack.c.h.b16 %v2706
        %v2748 = vunpack.c.l.b16 %v2707
        %v2749 = vunpack.c.h.b16 %v2707
        %v2750 = vunpack.c.l.b16 %v2708
        %v2751 = vunpack.c.h.b16 %v2708
        %v2752 = vunpack.c.l.b16 %v2709
        %v2753 = vunpack.c.h.b16 %v2709
        %v2754 = vunpack.c.l.b16 %v2710
        %v2755 = vunpack.c.h.b16 %v2710
        %v2756 = vunpack.c.l.b16 %v2711
        %v2757 = vunpack.c.h.b16 %v2711
        %v2758 = vunpack.c.l.b16 %v2712
        %v2759 = vunpack.c.h.b16 %v2712
        %v2760 = vunpack.c.l.b16 %v2713
        %v2761 = vunpack.c.h.b16 %v2713
        %v2762 = vunpack.c.l.b16 %v2714
        %v2763 = vunpack.c.h.b16 %v2714
        %v2764 = vunpack.c.l.b16 %v2715
        %v2765 = vunpack.c.h.b16 %v2715
        %v2766 = vunpack.c.l.b16 %v2716
        %v2767 = vunpack.c.h.b16 %v2716
        %v2768 = vunpack.c.l.b16 %v2717
        %v2769 = vunpack.c.h.b16 %v2717
        %v2770 = vunpack.c.l.b16 %v2718
        %v2771 = vunpack.c.h.b16 %v2718
        %v2772 = vunpack.c.l.b16 %v2719
        %v2773 = vunpack.c.h.b16 %v2719
        %v2774 = vunpack.c.l.b16 %v2720
        %v2775 = vunpack.c.h.b16 %v2720
        %v2776 = vpack.c.b16 %v2746, %v2744
        %v2777 = vpack.c.b16 %v2747, %v2745
        %v2778 = vpack.c.b16 %v2750, %v2748
        %v2779 = vpack.c.b16 %v2751, %v2749
        %v2780 = vpack.c.b16 %v2754, %v2752
        %v2781 = vpack.c.b16 %v2755, %v2753
        %v2782 = vpack.c.b16 %v2758, %v2756
        %v2783 = vpack.c.b16 %v2759, %v2757
        %v2784 = vpack.c.b16 %v2762, %v2760
        %v2785 = vpack.c.b16 %v2763, %v2761
        %v2786 = vpack.c.b16 %v2766, %v2764
        %v2787 = vpack.c.b16 %v2767, %v2765
        %v2788 = vpack.c.b16 %v2770, %v2768
        %v2789 = vpack.c.b16 %v2771, %v2769
        %v2790 = vpack.c.b16 %v2774, %v2772
        %v2791 = vpack.c.b16 %v2775, %v2773
        %2808 = vmatpush.bf16.msra.mxu0 %v2790
        %2809 = vmatpush.bf16.msra.mxu0 %v2788
        %2810 = vmatpush.bf16.msra.mxu0 %v2786
        %2811 = vmatpush.bf16.msra.mxu0 %v2784
        %2812 = vmatpush.bf16.msra.mxu0 %v2782
        %2813 = vmatpush.bf16.msra.mxu0 %v2780
        %2814 = vmatpush.bf16.msra.mxu0 %v2778
        %2815 = vmatpush.bf16.msra.mxu0 %v2776
        %2816 = vmatmul.bf16.gmra.mxu0 %v1222
        %v2817 = vpop.f32.mrf.mxu0
        %v2818 = vadd.f32 %v2724, %v2817
        %v2819 = vpop.f32.mrf.mxu0
        %v2820 = vadd.f32 %v2724, %v2819
        %2821 = vmatmul.bf16.gmra.mxu0 %v1223
        %v2822 = vpop.f32.mrf.mxu0
        %v2823 = vadd.f32 %v2724, %v2822
        %v2824 = vpop.f32.mrf.mxu0
        %v2825 = vadd.f32 %v2724, %v2824
        %2826 = vmatmul.bf16.gmra.mxu0 %v1224
        %v2827 = vpop.f32.mrf.mxu0
        %v2828 = vadd.f32 %v2724, %v2827
        %v2829 = vpop.f32.mrf.mxu0
        %v2830 = vadd.f32 %v2724, %v2829
        %2831 = vmatmul.bf16.gmra.mxu0 %v1225
        %v2832 = vpop.f32.mrf.mxu0
        %v2833 = vadd.f32 %v2724, %v2832
        %v2834 = vpop.f32.mrf.mxu0
        %v2835 = vadd.f32 %v2724, %v2834
        %2836 = vmatmul.bf16.gmra.mxu0 %v1226
        %v2837 = vpop.f32.mrf.mxu0
        %v2838 = vadd.f32 %v2724, %v2837
        %v2839 = vpop.f32.mrf.mxu0
        %v2840 = vadd.f32 %v2724, %v2839
        %2841 = vmatmul.bf16.gmra.mxu0 %v1227
        %v2842 = vpop.f32.mrf.mxu0
        %v2843 = vadd.f32 %v2724, %v2842
        %v2844 = vpop.f32.mrf.mxu0
        %v2845 = vadd.f32 %v2724, %v2844
        %2846 = vmatmul.bf16.gmra.mxu0 %v1228
        %v2847 = vpop.f32.mrf.mxu0
        %v2848 = vadd.f32 %v2724, %v2847
        %v2849 = vpop.f32.mrf.mxu0
        %v2850 = vadd.f32 %v2724, %v2849
        %2851 = vmatmul.bf16.gmra.mxu0 %v1229
        %v2852 = vpop.f32.mrf.mxu0
        %v2853 = vadd.f32 %v2724, %v2852
        %v2854 = vpop.f32.mrf.mxu0
        %v2855 = vadd.f32 %v2724, %v2854
        %2856 = vdwg.mxu0
        %2857 = vmatpush.bf16.msra.mxu0 %v2791
        %2858 = vmatpush.bf16.msra.mxu0 %v2789
        %2859 = vmatpush.bf16.msra.mxu0 %v2787
        %2860 = vmatpush.bf16.msra.mxu0 %v2785
        %2861 = vmatpush.bf16.msra.mxu0 %v2783
        %2862 = vmatpush.bf16.msra.mxu0 %v2781
        %2863 = vmatpush.bf16.msra.mxu0 %v2779
        %2864 = vmatpush.bf16.msra.mxu0 %v2777
        %2865 = vmatmul.bf16.gmra.mxu0 %v1222
        %v2866 = vpop.f32.mrf.mxu0
        %v2867 = vadd.f32 %v2725, %v2866
        %v2868 = vpop.f32.mrf.mxu0
        %v2869 = vadd.f32 %v2725, %v2868
        %2870 = vmatmul.bf16.gmra.mxu0 %v1223
        %v2871 = vpop.f32.mrf.mxu0
        %v2872 = vadd.f32 %v2725, %v2871
        %v2873 = vpop.f32.mrf.mxu0
        %v2874 = vadd.f32 %v2725, %v2873
        %2875 = vmatmul.bf16.gmra.mxu0 %v1224
        %v2876 = vpop.f32.mrf.mxu0
        %v2877 = vadd.f32 %v2725, %v2876
        %v2878 = vpop.f32.mrf.mxu0
        %v2879 = vadd.f32 %v2725, %v2878
        %2880 = vmatmul.bf16.gmra.mxu0 %v1225
        %v2881 = vpop.f32.mrf.mxu0
        %v2882 = vadd.f32 %v2725, %v2881
        %v2883 = vpop.f32.mrf.mxu0
        %v2884 = vadd.f32 %v2725, %v2883
        %2885 = vmatmul.bf16.gmra.mxu0 %v1226
        %v2886 = vpop.f32.mrf.mxu0
        %v2887 = vadd.f32 %v2725, %v2886
        %v2888 = vpop.f32.mrf.mxu0
        %v2889 = vadd.f32 %v2725, %v2888
        %2890 = vmatmul.bf16.gmra.mxu0 %v1227
        %v2891 = vpop.f32.mrf.mxu0
        %v2892 = vadd.f32 %v2725, %v2891
        %v2893 = vpop.f32.mrf.mxu0
        %v2894 = vadd.f32 %v2725, %v2893
        %2895 = vmatmul.bf16.gmra.mxu0 %v1228
        %v2896 = vpop.f32.mrf.mxu0
        %v2897 = vadd.f32 %v2725, %v2896
        %v2898 = vpop.f32.mrf.mxu0
        %v2899 = vadd.f32 %v2725, %v2898
        %2900 = vmatmul.bf16.gmra.mxu0 %v1229
        %v2901 = vpop.f32.mrf.mxu0
        %v2902 = vadd.f32 %v2725, %v2901
        %v2903 = vpop.f32.mrf.mxu0
        %v2904 = vadd.f32 %v2725, %v2903
        %2905 = vdwg.mxu0
        %s2906 = scalar_lea.vmem %s9, 128
        %v2907 = vld [vmem:[%s2906] sm:$0xff]
        %v2908 = vld [vmem:[%s2906 + $0x8] sm:$0xff]
        %v2909 = vld [vmem:[%s2906 + $0x10] sm:$0xff]
        %v2910 = vld [vmem:[%s2906 + $0x18] sm:$0xff]
        %v2911 = vld [vmem:[%s2906 + $0x20] sm:$0xff]
        %v2912 = vld [vmem:[%s2906 + $0x28] sm:$0xff]
        %v2913 = vld [vmem:[%s2906 + $0x30] sm:$0xff]
        %v2914 = vld [vmem:[%s2906 + $0x38] sm:$0xff]
        %v2915 = vld [vmem:[%s2906 + $0x40] sm:$0xff]
        %v2916 = vld [vmem:[%s2906 + $0x48] sm:$0xff]
        %v2917 = vld [vmem:[%s2906 + $0x50] sm:$0xff]
        %v2918 = vld [vmem:[%s2906 + $0x58] sm:$0xff]
        %v2919 = vld [vmem:[%s2906 + $0x60] sm:$0xff]
        %v2920 = vld [vmem:[%s2906 + $0x68] sm:$0xff]
        %v2921 = vld [vmem:[%s2906 + $0x70] sm:$0xff]
        %v2922 = vld [vmem:[%s2906 + $0x78] sm:$0xff]
        %s2923 = scalar_lea.vmem %s10, 2
        %v2924 = vld [vmem:[%s2923] sm:$0x3]
        %v2926 = vperm.slane %v2924, 0
        %v2927 = vperm.slane %v2924, 1
        %v2946 = vunpack.c.l.b16 %v2907
        %v2947 = vunpack.c.h.b16 %v2907
        %v2948 = vunpack.c.l.b16 %v2908
        %v2949 = vunpack.c.h.b16 %v2908
        %v2950 = vunpack.c.l.b16 %v2909
        %v2951 = vunpack.c.h.b16 %v2909
        %v2952 = vunpack.c.l.b16 %v2910
        %v2953 = vunpack.c.h.b16 %v2910
        %v2954 = vunpack.c.l.b16 %v2911
        %v2955 = vunpack.c.h.b16 %v2911
        %v2956 = vunpack.c.l.b16 %v2912
        %v2957 = vunpack.c.h.b16 %v2912
        %v2958 = vunpack.c.l.b16 %v2913
        %v2959 = vunpack.c.h.b16 %v2913
        %v2960 = vunpack.c.l.b16 %v2914
        %v2961 = vunpack.c.h.b16 %v2914
        %v2962 = vunpack.c.l.b16 %v2915
        %v2963 = vunpack.c.h.b16 %v2915
        %v2964 = vunpack.c.l.b16 %v2916
        %v2965 = vunpack.c.h.b16 %v2916
        %v2966 = vunpack.c.l.b16 %v2917
        %v2967 = vunpack.c.h.b16 %v2917
        %v2968 = vunpack.c.l.b16 %v2918
        %v2969 = vunpack.c.h.b16 %v2918
        %v2970 = vunpack.c.l.b16 %v2919
        %v2971 = vunpack.c.h.b16 %v2919
        %v2972 = vunpack.c.l.b16 %v2920
        %v2973 = vunpack.c.h.b16 %v2920
        %v2974 = vunpack.c.l.b16 %v2921
        %v2975 = vunpack.c.h.b16 %v2921
        %v2976 = vunpack.c.l.b16 %v2922
        %v2977 = vunpack.c.h.b16 %v2922
        %v2978 = vpack.c.b16 %v2948, %v2946
        %v2979 = vpack.c.b16 %v2949, %v2947
        %v2980 = vpack.c.b16 %v2952, %v2950
        %v2981 = vpack.c.b16 %v2953, %v2951
        %v2982 = vpack.c.b16 %v2956, %v2954
        %v2983 = vpack.c.b16 %v2957, %v2955
        %v2984 = vpack.c.b16 %v2960, %v2958
        %v2985 = vpack.c.b16 %v2961, %v2959
        %v2986 = vpack.c.b16 %v2964, %v2962
        %v2987 = vpack.c.b16 %v2965, %v2963
        %v2988 = vpack.c.b16 %v2968, %v2966
        %v2989 = vpack.c.b16 %v2969, %v2967
        %v2990 = vpack.c.b16 %v2972, %v2970
        %v2991 = vpack.c.b16 %v2973, %v2971
        %v2992 = vpack.c.b16 %v2976, %v2974
        %v2993 = vpack.c.b16 %v2977, %v2975
        %3010 = vmatpush.bf16.msra.mxu0 %v2992
        %3011 = vmatpush.bf16.msra.mxu0 %v2990
        %3012 = vmatpush.bf16.msra.mxu0 %v2988
        %3013 = vmatpush.bf16.msra.mxu0 %v2986
        %3014 = vmatpush.bf16.msra.mxu0 %v2984
        %3015 = vmatpush.bf16.msra.mxu0 %v2982
        %3016 = vmatpush.bf16.msra.mxu0 %v2980
        %3017 = vmatpush.bf16.msra.mxu0 %v2978
        %3018 = vmatmul.bf16.gmra.mxu0 %v2620
        %v3019 = vpop.f32.mrf.mxu0
        %v3020 = vadd.f32 %v2926, %v3019
        %v3021 = vpop.f32.mrf.mxu0
        %3022 = vdwg.mxu0
        %3023 = vmatpush.bf16.msra.mxu0 %v2993
        %3024 = vmatpush.bf16.msra.mxu0 %v2991
        %3025 = vmatpush.bf16.msra.mxu0 %v2989
        %3026 = vmatpush.bf16.msra.mxu0 %v2987
        %3027 = vmatpush.bf16.msra.mxu0 %v2985
        %3028 = vmatpush.bf16.msra.mxu0 %v2983
        %3029 = vmatpush.bf16.msra.mxu0 %v2981
        %3030 = vmatpush.bf16.msra.mxu0 %v2979
        %3031 = vmatmul.bf16.gmra.mxu0 %v2620
        %v3032 = vpop.f32.mrf.mxu0
        %v3033 = vadd.f32 %v2927, %v3032
        %v3034 = vpop.f32.mrf.mxu0
        %3035 = vdwg.mxu0
        %v3036 = vmul.f32 %v2701, %v1241
        %v3037 = vmul.f32 %v2701, %v1246
        %v3038 = vmul.f32 %v2701, %v1251
        %v3039 = vmul.f32 %v2701, %v1256
        %v3040 = vpack.c.bf16 %v3037, %v3036
        %v3041 = vpack.c.bf16 %v3039, %v3038
        %v3042 = vpack.c.bf16 %v2820, %v2818
        %v3043 = vpack.c.bf16 %v2825, %v2823
        %v3044 = vpack.c.bf16 %v2830, %v2828
        %v3045 = vpack.c.bf16 %v2835, %v2833
        %v3046 = vpack.c.bf16 %v2840, %v2838
        %v3047 = vpack.c.bf16 %v2845, %v2843
        %v3048 = vpack.c.bf16 %v2850, %v2848
        %v3049 = vpack.c.bf16 %v2855, %v2853
        %3050 = vmatpush.bf16.xpose.msra.mxu0 %v3049
        %3051 = vmatpush.bf16.xpose.msra.mxu0 %v3048
        %3052 = vmatpush.bf16.xpose.msra.mxu0 %v3047
        %3053 = vmatpush.bf16.xpose.msra.mxu0 %v3046
        %3054 = vmatpush.bf16.xpose.msra.mxu0 %v3045
        %3055 = vmatpush.bf16.xpose.msra.mxu0 %v3044
        %3056 = vmatpush.bf16.xpose.msra.mxu0 %v3043
        %3057 = vmatpush.bf16.xpose.msra.mxu0 %v3042
        %3058 = vmatmul.bf16.gmra.mxu0 %v3040
        %v3059 = vpop.f32.mrf.mxu0
        %v3060 = vadd.f32 %v1236, %v3059
        %v3061 = vpop.f32.mrf.mxu0
        %v3062 = vadd.f32 %v1236, %v3061
        %3063 = vmatmul.bf16.gmra.mxu0 %v3041
        %v3064 = vpop.f32.mrf.mxu0
        %v3065 = vadd.f32 %v1236, %v3064
        %v3066 = vpop.f32.mrf.mxu0
        %v3067 = vadd.f32 %v1236, %v3066
        %3068 = vdwg.mxu0
        %v3069 = vpack.c.bf16 %v3020, %v3020
        %3070 = vmatpush.bf16.xpose.msra.mxu0 0
        %3071 = vmatpush.bf16.xpose.msra.mxu0 0
        %3072 = vmatpush.bf16.xpose.msra.mxu0 0
        %3073 = vmatpush.bf16.xpose.msra.mxu0 0
        %3074 = vmatpush.bf16.xpose.msra.mxu0 0
        %3075 = vmatpush.bf16.xpose.msra.mxu0 0
        %3076 = vmatpush.bf16.xpose.msra.mxu0 0
        %3077 = vmatpush.bf16.xpose.msra.mxu0 %v3069
        %3078 = vmatmul.bf16.gmra.mxu0 %v3040
        %v3079 = vpop.f32.mrf.mxu0
        %v3080 = vadd.f32 0.0, %v3079
        %v3081 = vpop.f32.mrf.mxu0
        %v3082 = vadd.f32 0.0, %v3081
        %3083 = vmatmul.bf16.gmra.mxu0 %v3041
        %v3084 = vpop.f32.mrf.mxu0
        %v3085 = vadd.f32 0.0, %v3084
        %v3086 = vpop.f32.mrf.mxu0
        %v3087 = vadd.f32 0.0, %v3086
        %3088 = vdwg.mxu0
        %3089 = vmax.xlane.f32.xlu0 %v3060
        %v3090 = vpop.xlane.xlu0 %3089
        %3091 = vmax.xlane.f32.xlu0 %v3062
        %v3092 = vpop.xlane.xlu0 %3091
        %3093 = vmax.xlane.f32.xlu0 %v3065
        %v3094 = vpop.xlane.xlu0 %3093
        %3095 = vmax.xlane.f32.xlu0 %v3067
        %v3096 = vpop.xlane.xlu0 %3095
        %v3097 = vsel %vm1749, %v3080, -inf
        %3098 = vmax.xlane.f32.xlu0 %v3097
        %v3099 = vpop.xlane.xlu0 %3098
        %v3100 = vsel %vm1749, %v3082, -inf
        %3101 = vmax.xlane.f32.xlu0 %v3100
        %v3102 = vpop.xlane.xlu0 %3101
        %v3103 = vsel %vm1749, %v3085, -inf
        %3104 = vmax.xlane.f32.xlu0 %v3103
        %v3105 = vpop.xlane.xlu0 %3104
        %v3106 = vsel %vm1749, %v3087, -inf
        %3107 = vmax.xlane.f32.xlu0 %v3106
        %v3108 = vpop.xlane.xlu0 %3107
        %v3109 = vmax.f32 %v3090, %v3099
        %v3110 = vmax.f32 %v3092, %v3102
        %v3111 = vmax.f32 %v3094, %v3105
        %v3112 = vmax.f32 %v3096, %v3108
        %v3113 = vsub.f32 %v3060, %v3109
        %v3114 = vsub.f32 %v3062, %v3110
        %v3115 = vsub.f32 %v3065, %v3111
        %v3116 = vsub.f32 %v3067, %v3112
        %v3117 = vmul.f32 %v3113, 1.442695
        %v3118 = vpow.pop %v3117
        %v3119 = vmul.f32 %v3114, 1.442695
        %v3120 = vpow.pop %v3119
        %v3121 = vmul.f32 %v3115, 1.442695
        %v3122 = vpow.pop %v3121
        %v3123 = vmul.f32 %v3116, 1.442695
        %v3124 = vpow.pop %v3123
        %v3125 = vsub.f32 %v3080, %v3109
        %v3126 = vsub.f32 %v3082, %v3110
        %v3127 = vsub.f32 %v3085, %v3111
        %v3128 = vsub.f32 %v3087, %v3112
        %v3129 = vmul.f32 %v3125, 1.442695
        %v3130 = vpow.pop %v3129
        %v3131 = vmul.f32 %v3126, 1.442695
        %v3132 = vpow.pop %v3131
        %v3133 = vmul.f32 %v3127, 1.442695
        %v3134 = vpow.pop %v3133
        %v3135 = vmul.f32 %v3128, 1.442695
        %v3136 = vpow.pop %v3135
        %3137 = vadd.xlane.f32.xlu0 %v3118
        %v3138 = vpop.xlane.xlu0 %3137
        %3139 = vadd.xlane.f32.xlu0 %v3120
        %v3140 = vpop.xlane.xlu0 %3139
        %3141 = vadd.xlane.f32.xlu0 %v3122
        %v3142 = vpop.xlane.xlu0 %3141
        %3143 = vadd.xlane.f32.xlu0 %v3124
        %v3144 = vpop.xlane.xlu0 %3143
        %v3145 = vsel %vm1749, %v3130, 0.0
        %3146 = vadd.xlane.f32.xlu0 %v3145
        %v3147 = vpop.xlane.xlu0 %3146
        %v3148 = vsel %vm1749, %v3132, 0.0
        %3149 = vadd.xlane.f32.xlu0 %v3148
        %v3150 = vpop.xlane.xlu0 %3149
        %v3151 = vsel %vm1749, %v3134, 0.0
        %3152 = vadd.xlane.f32.xlu0 %v3151
        %v3153 = vpop.xlane.xlu0 %3152
        %v3154 = vsel %vm1749, %v3136, 0.0
        %3155 = vadd.xlane.f32.xlu0 %v3154
        %v3156 = vpop.xlane.xlu0 %3155
        %v3157 = vadd.f32 %v3138, %v3147
        %v3158 = vadd.f32 %v3140, %v3150
        %v3159 = vadd.f32 %v3142, %v3153
        %v3160 = vadd.f32 %v3144, %v3156
        %v3161 = vrcp.pop %v3157
        %v3162 = vrcp.pop %v3158
        %v3163 = vrcp.pop %v3159
        %v3164 = vrcp.pop %v3160
        %v3165 = vmul.f32 %v3118, %v3161
        %v3166 = vmul.f32 %v3120, %v3162
        %v3167 = vmul.f32 %v3122, %v3163
        %v3168 = vmul.f32 %v3124, %v3164
        %v3169 = vpack.c.bf16 %v3166, %v3165
        %v3170 = vpack.c.bf16 %v3168, %v3167
        %v3171 = vpack.c.bf16 %v2869, %v2867
        %v3172 = vpack.c.bf16 %v2874, %v2872
        %v3173 = vpack.c.bf16 %v2879, %v2877
        %v3174 = vpack.c.bf16 %v2884, %v2882
        %v3175 = vpack.c.bf16 %v2889, %v2887
        %v3176 = vpack.c.bf16 %v2894, %v2892
        %v3177 = vpack.c.bf16 %v2899, %v2897
        %v3178 = vpack.c.bf16 %v2904, %v2902
        %v3179 = vmul.f32 %v3130, %v3161
        %v3180 = vmul.f32 %v3132, %v3162
        %v3181 = vmul.f32 %v3134, %v3163
        %v3182 = vmul.f32 %v3136, %v3164
        %v3183 = vpack.c.bf16 %v3180, %v3179
        %v3184 = vpack.c.bf16 %v3182, %v3181
        %v3185 = vpack.c.bf16 %v3033, %v3033
        %v3187 = vsel %vm1749, %v3183, 0
        %v3190 = vsel %vm1749, %v3184, 0
        %v3193 = vsel %vm1845, %v3185, 0
        %3195 = vmatpush.bf16.msra.mxu0 0
        %3196 = vmatpush.bf16.msra.mxu0 0
        %3197 = vmatpush.bf16.msra.mxu0 0
        %3198 = vmatpush.bf16.msra.mxu0 0
        %3199 = vmatpush.bf16.msra.mxu0 0
        %3200 = vmatpush.bf16.msra.mxu0 0
        %3201 = vmatpush.bf16.msra.mxu0 0
        %3202 = vmatpush.bf16.msra.mxu0 %v3193
        %3203 = vmatmul.bf16.gmra.mxu0 %v3187
        %v3204 = vpop.f32.mrf.mxu0
        %v3205 = vadd.f32 0.0, %v3204
        %v3206 = vpop.f32.mrf.mxu0
        %v3207 = vadd.f32 0.0, %v3206
        %3208 = vmatmul.bf16.gmra.mxu0 %v3190
        %v3209 = vpop.f32.mrf.mxu0
        %v3210 = vadd.f32 0.0, %v3209
        %v3211 = vpop.f32.mrf.mxu0
        %v3212 = vadd.f32 0.0, %v3211
        %3213 = vdwg.mxu0
        %3214 = vmatpush.bf16.msra.mxu0 %v3178
        %3215 = vmatpush.bf16.msra.mxu0 %v3177
        %3216 = vmatpush.bf16.msra.mxu0 %v3176
        %3217 = vmatpush.bf16.msra.mxu0 %v3175
        %3218 = vmatpush.bf16.msra.mxu0 %v3174
        %3219 = vmatpush.bf16.msra.mxu0 %v3173
        %3220 = vmatpush.bf16.msra.mxu0 %v3172
        %3221 = vmatpush.bf16.msra.mxu0 %v3171
        %3222 = vmatmul.bf16.gmra.mxu0 %v3169
        %v3223 = vpop.f32.mrf.mxu0
        %v3224 = vadd.f32 %v3205, %v3223
        %v3225 = vpop.f32.mrf.mxu0
        %v3226 = vadd.f32 %v3207, %v3225
        %3227 = vmatmul.bf16.gmra.mxu0 %v3170
        %v3228 = vpop.f32.mrf.mxu0
        %v3229 = vadd.f32 %v3210, %v3228
        %v3230 = vpop.f32.mrf.mxu0
        %v3231 = vadd.f32 %v3212, %v3230
        %3232 = vdwg.mxu0
        %v3233 = vmul.f32 %v3224, %v1241
        %v3234 = vmul.f32 %v3226, %v1246
        %v3235 = vmul.f32 %v3229, %v1251
        %v3236 = vmul.f32 %v3231, %v1256
        %v3237 = vadd.f32 %v3233, %v3234
        %v3238 = vadd.f32 %v3237, %v3235
        %v3239 = vadd.f32 %v3238, %v3236
        %v3240 = vpack.c.bf16 %v3239, %v3239
        %s3241 = scalar_lea.vmem %s11, 64
        %v3242 = vld [vmem:[%s3241] sm:$0xf]
        %v3243 = vld [vmem:[%s3241 + $0x4] sm:$0xf]
        %v3244 = vld [vmem:[%s3241 + $0x8] sm:$0xf]
        %v3245 = vld [vmem:[%s3241 + $0xc] sm:$0xf]
        %v3246 = vld [vmem:[%s3241 + $0x10] sm:$0xf]
        %v3247 = vld [vmem:[%s3241 + $0x14] sm:$0xf]
        %v3248 = vld [vmem:[%s3241 + $0x18] sm:$0xf]
        %v3249 = vld [vmem:[%s3241 + $0x1c] sm:$0xf]
        %v3250 = vld [vmem:[%s3241 + $0x20] sm:$0xf]
        %v3251 = vld [vmem:[%s3241 + $0x24] sm:$0xf]
        %v3252 = vld [vmem:[%s3241 + $0x28] sm:$0xf]
        %v3253 = vld [vmem:[%s3241 + $0x2c] sm:$0xf]
        %v3254 = vld [vmem:[%s3241 + $0x30] sm:$0xf]
        %v3255 = vld [vmem:[%s3241 + $0x34] sm:$0xf]
        %v3256 = vld [vmem:[%s3241 + $0x38] sm:$0xf]
        %v3257 = vld [vmem:[%s3241 + $0x3c] sm:$0xf]
        %s3258 = scalar_lea.vmem %s12, 1
        %v3259 = vld [vmem:[%s3258] sm:$0x1]
        %v3261 = vperm.slane %v3259, 0
        %v3279 = vunpack.c.l.b16 %v3242
        %v3280 = vunpack.c.l.b16 %v3243
        %v3281 = vunpack.c.l.b16 %v3244
        %v3282 = vunpack.c.l.b16 %v3245
        %v3283 = vunpack.c.l.b16 %v3246
        %v3284 = vunpack.c.l.b16 %v3247
        %v3285 = vunpack.c.l.b16 %v3248
        %v3286 = vunpack.c.l.b16 %v3249
        %v3287 = vunpack.c.l.b16 %v3250
        %v3288 = vunpack.c.l.b16 %v3251
        %v3289 = vunpack.c.l.b16 %v3252
        %v3290 = vunpack.c.l.b16 %v3253
        %v3291 = vunpack.c.l.b16 %v3254
        %v3292 = vunpack.c.l.b16 %v3255
        %v3293 = vunpack.c.l.b16 %v3256
        %v3294 = vunpack.c.l.b16 %v3257
        %v3295 = vpack.c.b16 %v3280, %v3279
        %v3296 = vpack.c.b16 %v3282, %v3281
        %v3297 = vpack.c.b16 %v3284, %v3283
        %v3298 = vpack.c.b16 %v3286, %v3285
        %v3299 = vpack.c.b16 %v3288, %v3287
        %v3300 = vpack.c.b16 %v3290, %v3289
        %v3301 = vpack.c.b16 %v3292, %v3291
        %v3302 = vpack.c.b16 %v3294, %v3293
        %3311 = vmatpush.bf16.msra.mxu0 %v3302
        %3312 = vmatpush.bf16.msra.mxu0 %v3301
        %3313 = vmatpush.bf16.msra.mxu0 %v3300
        %3314 = vmatpush.bf16.msra.mxu0 %v3299
        %3315 = vmatpush.bf16.msra.mxu0 %v3298
        %3316 = vmatpush.bf16.msra.mxu0 %v3297
        %3317 = vmatpush.bf16.msra.mxu0 %v3296
        %3318 = vmatpush.bf16.msra.mxu0 %v3295
        %3319 = vmatmul.bf16.gmra.mxu0 %v3240
        %v3320 = vpop.f32.mrf.mxu0
        %v3321 = vadd.f32 %v3261, %v3320
        %v3322 = vpop.f32.mrf.mxu0
        %3323 = vdwg.mxu0
        %v3324 = vadd.f32 %v3321, %v2597
        %3325 = vadd.xlane.f32.xlu0 %v3324
        %v3326 = vpop.xlane.xlu0 %3325
        %v3327 = vmul.f32 %v3326, %v933
        %v3328 = vsub.f32 %v3324, %v3327
        %v3329 = vmul.f32 %v3328, %v3328
        %3330 = vadd.xlane.f32.xlu0 %v3329
        %v3331 = vpop.xlane.xlu0 %3330
        %v3332 = vmul.f32 %v3331, %v933
        %v3333 = vadd.f32 %v3332, 1e-05
        %v3334 = vrsqrt.pop %v3333
        %v3335 = vmul.f32 %v3334, %v3333
        %v3336 = vmul.f32 %v3335, %v3334
        %v3337 = vmul.f32 0.5, %v3336
        %v3338 = vsub.f32 1.5, %v3337
        %v3339 = vmul.f32 %v3334, %v3338
        %vm3340 = vweird.f32 %v3333
        %vm3341 = vweird.f32 %v3334
        %vm3342 = vmor %vm3340, %vm3341
        %v3343 = vsel %vm3342, %v3334, %v3339
        %v3344 = vmul.f32 %v3328, %v3343
        %v3345 = vpack.c.bf16 %v3344, %v3344
        %s3346 = scalar_lea.vmem %s13, 256
        %v3347 = vld [vmem:[%s3346] sm:$0xff]
        %v3348 = vld [vmem:[%s3346 + $0x8] sm:$0xff]
        %v3349 = vld [vmem:[%s3346 + $0x10] sm:$0xff]
        %v3350 = vld [vmem:[%s3346 + $0x18] sm:$0xff]
        %v3351 = vld [vmem:[%s3346 + $0x20] sm:$0xff]
        %v3352 = vld [vmem:[%s3346 + $0x28] sm:$0xff]
        %v3353 = vld [vmem:[%s3346 + $0x30] sm:$0xff]
        %v3354 = vld [vmem:[%s3346 + $0x38] sm:$0xff]
        %v3355 = vld [vmem:[%s3346 + $0x40] sm:$0xff]
        %v3356 = vld [vmem:[%s3346 + $0x48] sm:$0xff]
        %v3357 = vld [vmem:[%s3346 + $0x50] sm:$0xff]
        %v3358 = vld [vmem:[%s3346 + $0x58] sm:$0xff]
        %v3359 = vld [vmem:[%s3346 + $0x60] sm:$0xff]
        %v3360 = vld [vmem:[%s3346 + $0x68] sm:$0xff]
        %v3361 = vld [vmem:[%s3346 + $0x70] sm:$0xff]
        %v3362 = vld [vmem:[%s3346 + $0x78] sm:$0xff]
        %v3363 = vld [vmem:[%s3346 + $0x80] sm:$0xff]
        %v3364 = vld [vmem:[%s3346 + $0x88] sm:$0xff]
        %v3365 = vld [vmem:[%s3346 + $0x90] sm:$0xff]
        %v3366 = vld [vmem:[%s3346 + $0x98] sm:$0xff]
        %v3367 = vld [vmem:[%s3346 + $0xa0] sm:$0xff]
        %v3368 = vld [vmem:[%s3346 + $0xa8] sm:$0xff]
        %v3369 = vld [vmem:[%s3346 + $0xb0] sm:$0xff]
        %v3370 = vld [vmem:[%s3346 + $0xb8] sm:$0xff]
        %v3371 = vld [vmem:[%s3346 + $0xc0] sm:$0xff]
        %v3372 = vld [vmem:[%s3346 + $0xc8] sm:$0xff]
        %v3373 = vld [vmem:[%s3346 + $0xd0] sm:$0xff]
        %v3374 = vld [vmem:[%s3346 + $0xd8] sm:$0xff]
        %v3375 = vld [vmem:[%s3346 + $0xe0] sm:$0xff]
        %v3376 = vld [vmem:[%s3346 + $0xe8] sm:$0xff]
        %v3377 = vld [vmem:[%s3346 + $0xf0] sm:$0xff]
        %v3378 = vld [vmem:[%s3346 + $0xf8] sm:$0xff]
        %s3379 = scalar_lea.vmem %s14, 4
        %v3380 = vld [vmem:[%s3379] sm:$0xf]
        %v3382 = vperm.slane %v3380, 0
        %v3383 = vperm.slane %v3380, 1
        %v3384 = vperm.slane %v3380, 2
        %v3385 = vperm.slane %v3380, 3
        %v3422 = vunpack.c.l.b16 %v3347
        %v3423 = vunpack.c.h.b16 %v3347
        %v3424 = vunpack.c.l.b16 %v3348
        %v3425 = vunpack.c.h.b16 %v3348
        %v3426 = vunpack.c.l.b16 %v3349
        %v3427 = vunpack.c.h.b16 %v3349
        %v3428 = vunpack.c.l.b16 %v3350
        %v3429 = vunpack.c.h.b16 %v3350
        %v3430 = vunpack.c.l.b16 %v3351
        %v3431 = vunpack.c.h.b16 %v3351
        %v3432 = vunpack.c.l.b16 %v3352
        %v3433 = vunpack.c.h.b16 %v3352
        %v3434 = vunpack.c.l.b16 %v3353
        %v3435 = vunpack.c.h.b16 %v3353
        %v3436 = vunpack.c.l.b16 %v3354
        %v3437 = vunpack.c.h.b16 %v3354
        %v3438 = vunpack.c.l.b16 %v3355
        %v3439 = vunpack.c.h.b16 %v3355
        %v3440 = vunpack.c.l.b16 %v3356
        %v3441 = vunpack.c.h.b16 %v3356
        %v3442 = vunpack.c.l.b16 %v3357
        %v3443 = vunpack.c.h.b16 %v3357
        %v3444 = vunpack.c.l.b16 %v3358
        %v3445 = vunpack.c.h.b16 %v3358
        %v3446 = vunpack.c.l.b16 %v3359
        %v3447 = vunpack.c.h.b16 %v3359
        %v3448 = vunpack.c.l.b16 %v3360
        %v3449 = vunpack.c.h.b16 %v3360
        %v3450 = vunpack.c.l.b16 %v3361
        %v3451 = vunpack.c.h.b16 %v3361
        %v3452 = vunpack.c.l.b16 %v3362
        %v3453 = vunpack.c.h.b16 %v3362
        %v3454 = vunpack.c.l.b16 %v3363
        %v3455 = vunpack.c.h.b16 %v3363
        %v3456 = vunpack.c.l.b16 %v3364
        %v3457 = vunpack.c.h.b16 %v3364
        %v3458 = vunpack.c.l.b16 %v3365
        %v3459 = vunpack.c.h.b16 %v3365
        %v3460 = vunpack.c.l.b16 %v3366
        %v3461 = vunpack.c.h.b16 %v3366
        %v3462 = vunpack.c.l.b16 %v3367
        %v3463 = vunpack.c.h.b16 %v3367
        %v3464 = vunpack.c.l.b16 %v3368
        %v3465 = vunpack.c.h.b16 %v3368
        %v3466 = vunpack.c.l.b16 %v3369
        %v3467 = vunpack.c.h.b16 %v3369
        %v3468 = vunpack.c.l.b16 %v3370
        %v3469 = vunpack.c.h.b16 %v3370
        %v3470 = vunpack.c.l.b16 %v3371
        %v3471 = vunpack.c.h.b16 %v3371
        %v3472 = vunpack.c.l.b16 %v3372
        %v3473 = vunpack.c.h.b16 %v3372
        %v3474 = vunpack.c.l.b16 %v3373
        %v3475 = vunpack.c.h.b16 %v3373
        %v3476 = vunpack.c.l.b16 %v3374
        %v3477 = vunpack.c.h.b16 %v3374
        %v3478 = vunpack.c.l.b16 %v3375
        %v3479 = vunpack.c.h.b16 %v3375
        %v3480 = vunpack.c.l.b16 %v3376
        %v3481 = vunpack.c.h.b16 %v3376
        %v3482 = vunpack.c.l.b16 %v3377
        %v3483 = vunpack.c.h.b16 %v3377
        %v3484 = vunpack.c.l.b16 %v3378
        %v3485 = vunpack.c.h.b16 %v3378
        %v3486 = vpack.c.b16 %v3426, %v3422
        %v3487 = vpack.c.b16 %v3427, %v3423
        %v3488 = vpack.c.b16 %v3428, %v3424
        %v3489 = vpack.c.b16 %v3429, %v3425
        %v3490 = vpack.c.b16 %v3434, %v3430
        %v3491 = vpack.c.b16 %v3435, %v3431
        %v3492 = vpack.c.b16 %v3436, %v3432
        %v3493 = vpack.c.b16 %v3437, %v3433
        %v3494 = vpack.c.b16 %v3442, %v3438
        %v3495 = vpack.c.b16 %v3443, %v3439
        %v3496 = vpack.c.b16 %v3444, %v3440
        %v3497 = vpack.c.b16 %v3445, %v3441
        %v3498 = vpack.c.b16 %v3450, %v3446
        %v3499 = vpack.c.b16 %v3451, %v3447
        %v3500 = vpack.c.b16 %v3452, %v3448
        %v3501 = vpack.c.b16 %v3453, %v3449
        %v3502 = vpack.c.b16 %v3458, %v3454
        %v3503 = vpack.c.b16 %v3459, %v3455
        %v3504 = vpack.c.b16 %v3460, %v3456
        %v3505 = vpack.c.b16 %v3461, %v3457
        %v3506 = vpack.c.b16 %v3466, %v3462
        %v3507 = vpack.c.b16 %v3467, %v3463
        %v3508 = vpack.c.b16 %v3468, %v3464
        %v3509 = vpack.c.b16 %v3469, %v3465
        %v3510 = vpack.c.b16 %v3474, %v3470
        %v3511 = vpack.c.b16 %v3475, %v3471
        %v3512 = vpack.c.b16 %v3476, %v3472
        %v3513 = vpack.c.b16 %v3477, %v3473
        %v3514 = vpack.c.b16 %v3482, %v3478
        %v3515 = vpack.c.b16 %v3483, %v3479
        %v3516 = vpack.c.b16 %v3484, %v3480
        %v3517 = vpack.c.b16 %v3485, %v3481
        %3550 = vmatpush.bf16.msra.mxu0 %v3514
        %3551 = vmatpush.bf16.msra.mxu0 %v3510
        %3552 = vmatpush.bf16.msra.mxu0 %v3506
        %3553 = vmatpush.bf16.msra.mxu0 %v3502
        %3554 = vmatpush.bf16.msra.mxu0 %v3498
        %3555 = vmatpush.bf16.msra.mxu0 %v3494
        %3556 = vmatpush.bf16.msra.mxu0 %v3490
        %3557 = vmatpush.bf16.msra.mxu0 %v3486
        %3558 = vmatmul.bf16.gmra.mxu0 %v3345
        %v3559 = vpop.f32.mrf.mxu0
        %v3560 = vadd.f32 %v3382, %v3559
        %v3561 = vpop.f32.mrf.mxu0
        %3562 = vdwg.mxu0
        %3563 = vmatpush.bf16.msra.mxu0 %v3515
        %3564 = vmatpush.bf16.msra.mxu0 %v3511
        %3565 = vmatpush.bf16.msra.mxu0 %v3507
        %3566 = vmatpush.bf16.msra.mxu0 %v3503
        %3567 = vmatpush.bf16.msra.mxu0 %v3499
        %3568 = vmatpush.bf16.msra.mxu0 %v3495
        %3569 = vmatpush.bf16.msra.mxu0 %v3491
        %3570 = vmatpush.bf16.msra.mxu0 %v3487
        %3571 = vmatmul.bf16.gmra.mxu0 %v3345
        %v3572 = vpop.f32.mrf.mxu0
        %v3573 = vadd.f32 %v3383, %v3572
        %v3574 = vpop.f32.mrf.mxu0
        %3575 = vdwg.mxu0
        %3576 = vmatpush.bf16.msra.mxu0 %v3516
        %3577 = vmatpush.bf16.msra.mxu0 %v3512
        %3578 = vmatpush.bf16.msra.mxu0 %v3508
        %3579 = vmatpush.bf16.msra.mxu0 %v3504
        %3580 = vmatpush.bf16.msra.mxu0 %v3500
        %3581 = vmatpush.bf16.msra.mxu0 %v3496
        %3582 = vmatpush.bf16.msra.mxu0 %v3492
        %3583 = vmatpush.bf16.msra.mxu0 %v3488
        %3584 = vmatmul.bf16.gmra.mxu0 %v3345
        %v3585 = vpop.f32.mrf.mxu0
        %v3586 = vadd.f32 %v3384, %v3585
        %v3587 = vpop.f32.mrf.mxu0
        %3588 = vdwg.mxu0
        %3589 = vmatpush.bf16.msra.mxu0 %v3517
        %3590 = vmatpush.bf16.msra.mxu0 %v3513
        %3591 = vmatpush.bf16.msra.mxu0 %v3509
        %3592 = vmatpush.bf16.msra.mxu0 %v3505
        %3593 = vmatpush.bf16.msra.mxu0 %v3501
        %3594 = vmatpush.bf16.msra.mxu0 %v3497
        %3595 = vmatpush.bf16.msra.mxu0 %v3493
        %3596 = vmatpush.bf16.msra.mxu0 %v3489
        %3597 = vmatmul.bf16.gmra.mxu0 %v3345
        %v3598 = vpop.f32.mrf.mxu0
        %v3599 = vadd.f32 %v3385, %v3598
        %v3600 = vpop.f32.mrf.mxu0
        %3601 = vdwg.mxu0
        %v3602 = vmul.f32 %v3560, 0.5
        %v3603 = vmul.f32 %v3573, 0.5
        %v3604 = vmul.f32 %v3586, 0.5
        %v3605 = vmul.f32 %v3599, 0.5
        %v3606 = vmul.f32 %v3560, 0.044715
        %v3607 = vmul.f32 %v3573, 0.044715
        %v3608 = vmul.f32 %v3586, 0.044715
        %v3609 = vmul.f32 %v3599, 0.044715
        %v3610 = vmul.f32 %v3606, %v3560
        %v3611 = vmul.f32 %v3607, %v3573
        %v3612 = vmul.f32 %v3608, %v3586
        %v3613 = vmul.f32 %v3609, %v3599
        %v3614 = vmul.f32 %v3610, %v3560
        %v3615 = vmul.f32 %v3611, %v3573
        %v3616 = vmul.f32 %v3612, %v3586
        %v3617 = vmul.f32 %v3613, %v3599
        %v3618 = vadd.f32 %v3560, %v3614
        %v3619 = vadd.f32 %v3573, %v3615
        %v3620 = vadd.f32 %v3586, %v3616
        %v3621 = vadd.f32 %v3599, %v3617
        %v3622 = vmul.f32 %v3618, 0.7978846
        %v3623 = vmul.f32 %v3619, 0.7978846
        %v3624 = vmul.f32 %v3620, 0.7978846
        %v3625 = vmul.f32 %v3621, 0.7978846
        %v3626 = vtanh.pop %v3622
        %v3627 = vtanh.pop %v3623
        %v3628 = vtanh.pop %v3624
        %v3629 = vtanh.pop %v3625
        %v3630 = vadd.f32 %v3626, 1.0
        %v3631 = vadd.f32 %v3627, 1.0
        %v3632 = vadd.f32 %v3628, 1.0
        %v3633 = vadd.f32 %v3629, 1.0
        %v3634 = vmul.f32 %v3602, %v3630
        %v3635 = vmul.f32 %v3603, %v3631
        %v3636 = vmul.f32 %v3604, %v3632
        %v3637 = vmul.f32 %v3605, %v3633
        %v3638 = vpack.c.bf16 %v3634, %v3634
        %v3639 = vpack.c.bf16 %v3635, %v3635
        %v3640 = vpack.c.bf16 %v3636, %v3636
        %v3641 = vpack.c.bf16 %v3637, %v3637
        %s3642 = scalar_lea.vmem %s15, 256
        %v3643 = vld [vmem:[%s3642] sm:$0xf]
        %v3644 = vld [vmem:[%s3642 + $0x4] sm:$0xf]
        %v3645 = vld [vmem:[%s3642 + $0x8] sm:$0xf]
        %v3646 = vld [vmem:[%s3642 + $0xc] sm:$0xf]
        %v3647 = vld [vmem:[%s3642 + $0x10] sm:$0xf]
        %v3648 = vld [vmem:[%s3642 + $0x14] sm:$0xf]
        %v3649 = vld [vmem:[%s3642 + $0x18] sm:$0xf]
        %v3650 = vld [vmem:[%s3642 + $0x1c] sm:$0xf]
        %v3651 = vld [vmem:[%s3642 + $0x20] sm:$0xf]
        %v3652 = vld [vmem:[%s3642 + $0x24] sm:$0xf]
        %v3653 = vld [vmem:[%s3642 + $0x28] sm:$0xf]
        %v3654 = vld [vmem:[%s3642 + $0x2c] sm:$0xf]
        %v3655 = vld [vmem:[%s3642 + $0x30] sm:$0xf]
        %v3656 = vld [vmem:[%s3642 + $0x34] sm:$0xf]
        %v3657 = vld [vmem:[%s3642 + $0x38] sm:$0xf]
        %v3658 = vld [vmem:[%s3642 + $0x3c] sm:$0xf]
        %v3659 = vld [vmem:[%s3642 + $0x40] sm:$0xf]
        %v3660 = vld [vmem:[%s3642 + $0x44] sm:$0xf]
        %v3661 = vld [vmem:[%s3642 + $0x48] sm:$0xf]
        %v3662 = vld [vmem:[%s3642 + $0x4c] sm:$0xf]
        %v3663 = vld [vmem:[%s3642 + $0x50] sm:$0xf]
        %v3664 = vld [vmem:[%s3642 + $0x54] sm:$0xf]
        %v3665 = vld [vmem:[%s3642 + $0x58] sm:$0xf]
        %v3666 = vld [vmem:[%s3642 + $0x5c] sm:$0xf]
        %v3667 = vld [vmem:[%s3642 + $0x60] sm:$0xf]
        %v3668 = vld [vmem:[%s3642 + $0x64] sm:$0xf]
        %v3669 = vld [vmem:[%s3642 + $0x68] sm:$0xf]
        %v3670 = vld [vmem:[%s3642 + $0x6c] sm:$0xf]
        %v3671 = vld [vmem:[%s3642 + $0x70] sm:$0xf]
        %v3672 = vld [vmem:[%s3642 + $0x74] sm:$0xf]
        %v3673 = vld [vmem:[%s3642 + $0x78] sm:$0xf]
        %v3674 = vld [vmem:[%s3642 + $0x7c] sm:$0xf]
        %v3675 = vld [vmem:[%s3642 + $0x80] sm:$0xf]
        %v3676 = vld [vmem:[%s3642 + $0x84] sm:$0xf]
        %v3677 = vld [vmem:[%s3642 + $0x88] sm:$0xf]
        %v3678 = vld [vmem:[%s3642 + $0x8c] sm:$0xf]
        %v3679 = vld [vmem:[%s3642 + $0x90] sm:$0xf]
        %v3680 = vld [vmem:[%s3642 + $0x94] sm:$0xf]
        %v3681 = vld [vmem:[%s3642 + $0x98] sm:$0xf]
        %v3682 = vld [vmem:[%s3642 + $0x9c] sm:$0xf]
        %v3683 = vld [vmem:[%s3642 + $0xa0] sm:$0xf]
        %v3684 = vld [vmem:[%s3642 + $0xa4] sm:$0xf]
        %v3685 = vld [vmem:[%s3642 + $0xa8] sm:$0xf]
        %v3686 = vld [vmem:[%s3642 + $0xac] sm:$0xf]
        %v3687 = vld [vmem:[%s3642 + $0xb0] sm:$0xf]
        %v3688 = vld [vmem:[%s3642 + $0xb4] sm:$0xf]
        %v3689 = vld [vmem:[%s3642 + $0xb8] sm:$0xf]
        %v3690 = vld [vmem:[%s3642 + $0xbc] sm:$0xf]
        %v3691 = vld [vmem:[%s3642 + $0xc0] sm:$0xf]
        %v3692 = vld [vmem:[%s3642 + $0xc4] sm:$0xf]
        %v3693 = vld [vmem:[%s3642 + $0xc8] sm:$0xf]
        %v3694 = vld [vmem:[%s3642 + $0xcc] sm:$0xf]
        %v3695 = vld [vmem:[%s3642 + $0xd0] sm:$0xf]
        %v3696 = vld [vmem:[%s3642 + $0xd4] sm:$0xf]
        %v3697 = vld [vmem:[%s3642 + $0xd8] sm:$0xf]
        %v3698 = vld [vmem:[%s3642 + $0xdc] sm:$0xf]
        %v3699 = vld [vmem:[%s3642 + $0xe0] sm:$0xf]
        %v3700 = vld [vmem:[%s3642 + $0xe4] sm:$0xf]
        %v3701 = vld [vmem:[%s3642 + $0xe8] sm:$0xf]
        %v3702 = vld [vmem:[%s3642 + $0xec] sm:$0xf]
        %v3703 = vld [vmem:[%s3642 + $0xf0] sm:$0xf]
        %v3704 = vld [vmem:[%s3642 + $0xf4] sm:$0xf]
        %v3705 = vld [vmem:[%s3642 + $0xf8] sm:$0xf]
        %v3706 = vld [vmem:[%s3642 + $0xfc] sm:$0xf]
        %v3771 = vunpack.c.l.b16 %v3643
        %v3772 = vunpack.c.l.b16 %v3644
        %v3773 = vunpack.c.l.b16 %v3645
        %v3774 = vunpack.c.l.b16 %v3646
        %v3775 = vunpack.c.l.b16 %v3647
        %v3776 = vunpack.c.l.b16 %v3648
        %v3777 = vunpack.c.l.b16 %v3649
        %v3778 = vunpack.c.l.b16 %v3650
        %v3779 = vunpack.c.l.b16 %v3651
        %v3780 = vunpack.c.l.b16 %v3652
        %v3781 = vunpack.c.l.b16 %v3653
        %v3782 = vunpack.c.l.b16 %v3654
        %v3783 = vunpack.c.l.b16 %v3655
        %v3784 = vunpack.c.l.b16 %v3656
        %v3785 = vunpack.c.l.b16 %v3657
        %v3786 = vunpack.c.l.b16 %v3658
        %v3787 = vunpack.c.l.b16 %v3659
        %v3788 = vunpack.c.l.b16 %v3660
        %v3789 = vunpack.c.l.b16 %v3661
        %v3790 = vunpack.c.l.b16 %v3662
        %v3791 = vunpack.c.l.b16 %v3663
        %v3792 = vunpack.c.l.b16 %v3664
        %v3793 = vunpack.c.l.b16 %v3665
        %v3794 = vunpack.c.l.b16 %v3666
        %v3795 = vunpack.c.l.b16 %v3667
        %v3796 = vunpack.c.l.b16 %v3668
        %v3797 = vunpack.c.l.b16 %v3669
        %v3798 = vunpack.c.l.b16 %v3670
        %v3799 = vunpack.c.l.b16 %v3671
        %v3800 = vunpack.c.l.b16 %v3672
        %v3801 = vunpack.c.l.b16 %v3673
        %v3802 = vunpack.c.l.b16 %v3674
        %v3803 = vunpack.c.l.b16 %v3675
        %v3804 = vunpack.c.l.b16 %v3676
        %v3805 = vunpack.c.l.b16 %v3677
        %v3806 = vunpack.c.l.b16 %v3678
        %v3807 = vunpack.c.l.b16 %v3679
        %v3808 = vunpack.c.l.b16 %v3680
        %v3809 = vunpack.c.l.b16 %v3681
        %v3810 = vunpack.c.l.b16 %v3682
        %v3811 = vunpack.c.l.b16 %v3683
        %v3812 = vunpack.c.l.b16 %v3684
        %v3813 = vunpack.c.l.b16 %v3685
        %v3814 = vunpack.c.l.b16 %v3686
        %v3815 = vunpack.c.l.b16 %v3687
        %v3816 = vunpack.c.l.b16 %v3688
        %v3817 = vunpack.c.l.b16 %v3689
        %v3818 = vunpack.c.l.b16 %v3690
        %v3819 = vunpack.c.l.b16 %v3691
        %v3820 = vunpack.c.l.b16 %v3692
        %v3821 = vunpack.c.l.b16 %v3693
        %v3822 = vunpack.c.l.b16 %v3694
        %v3823 = vunpack.c.l.b16 %v3695
        %v3824 = vunpack.c.l.b16 %v3696
        %v3825 = vunpack.c.l.b16 %v3697
        %v3826 = vunpack.c.l.b16 %v3698
        %v3827 = vunpack.c.l.b16 %v3699
        %v3828 = vunpack.c.l.b16 %v3700
        %v3829 = vunpack.c.l.b16 %v3701
        %v3830 = vunpack.c.l.b16 %v3702
        %v3831 = vunpack.c.l.b16 %v3703
        %v3832 = vunpack.c.l.b16 %v3704
        %v3833 = vunpack.c.l.b16 %v3705
        %v3834 = vunpack.c.l.b16 %v3706
        %v3835 = vpack.c.b16 %v3772, %v3771
        %v3836 = vpack.c.b16 %v3774, %v3773
        %v3837 = vpack.c.b16 %v3776, %v3775
        %v3838 = vpack.c.b16 %v3778, %v3777
        %v3839 = vpack.c.b16 %v3780, %v3779
        %v3840 = vpack.c.b16 %v3782, %v3781
        %v3841 = vpack.c.b16 %v3784, %v3783
        %v3842 = vpack.c.b16 %v3786, %v3785
        %v3843 = vpack.c.b16 %v3788, %v3787
        %v3844 = vpack.c.b16 %v3790, %v3789
        %v3845 = vpack.c.b16 %v3792, %v3791
        %v3846 = vpack.c.b16 %v3794, %v3793
        %v3847 = vpack.c.b16 %v3796, %v3795
        %v3848 = vpack.c.b16 %v3798, %v3797
        %v3849 = vpack.c.b16 %v3800, %v3799
        %v3850 = vpack.c.b16 %v3802, %v3801
        %v3851 = vpack.c.b16 %v3804, %v3803
        %v3852 = vpack.c.b16 %v3806, %v3805
        %v3853 = vpack.c.b16 %v3808, %v3807
        %v3854 = vpack.c.b16 %v3810, %v3809
        %v3855 = vpack.c.b16 %v3812, %v3811
        %v3856 = vpack.c.b16 %v3814, %v3813
        %v3857 = vpack.c.b16 %v3816, %v3815
        %v3858 = vpack.c.b16 %v3818, %v3817
        %v3859 = vpack.c.b16 %v3820, %v3819
        %v3860 = vpack.c.b16 %v3822, %v3821
        %v3861 = vpack.c.b16 %v3824, %v3823
        %v3862 = vpack.c.b16 %v3826, %v3825
        %v3863 = vpack.c.b16 %v3828, %v3827
        %v3864 = vpack.c.b16 %v3830, %v3829
        %v3865 = vpack.c.b16 %v3832, %v3831
        %v3866 = vpack.c.b16 %v3834, %v3833
        %3899 = vmatpush.bf16.msra.mxu0 %v3842
        %3900 = vmatpush.bf16.msra.mxu0 %v3841
        %3901 = vmatpush.bf16.msra.mxu0 %v3840
        %3902 = vmatpush.bf16.msra.mxu0 %v3839
        %3903 = vmatpush.bf16.msra.mxu0 %v3838
        %3904 = vmatpush.bf16.msra.mxu0 %v3837
        %3905 = vmatpush.bf16.msra.mxu0 %v3836
        %3906 = vmatpush.bf16.msra.mxu0 %v3835
        %3907 = vmatmul.bf16.gmra.mxu0 %v3638
        %v3908 = vpop.f32.mrf.mxu0
        %v3909 = vadd.f32 %v3324, %v3908
        %v3910 = vpop.f32.mrf.mxu0
        %3911 = vdwg.mxu0
        %3912 = vmatpush.bf16.msra.mxu0 %v3850
        %3913 = vmatpush.bf16.msra.mxu0 %v3849
        %3914 = vmatpush.bf16.msra.mxu0 %v3848
        %3915 = vmatpush.bf16.msra.mxu0 %v3847
        %3916 = vmatpush.bf16.msra.mxu0 %v3846
        %3917 = vmatpush.bf16.msra.mxu0 %v3845
        %3918 = vmatpush.bf16.msra.mxu0 %v3844
        %3919 = vmatpush.bf16.msra.mxu0 %v3843
        %3920 = vmatmul.bf16.gmra.mxu0 %v3639
        %v3921 = vpop.f32.mrf.mxu0
        %v3922 = vadd.f32 %v3909, %v3921
        %v3923 = vpop.f32.mrf.mxu0
        %3924 = vdwg.mxu0
        %3925 = vmatpush.bf16.msra.mxu0 %v3858
        %3926 = vmatpush.bf16.msra.mxu0 %v3857
        %3927 = vmatpush.bf16.msra.mxu0 %v3856
        %3928 = vmatpush.bf16.msra.mxu0 %v3855
        %3929 = vmatpush.bf16.msra.mxu0 %v3854
        %3930 = vmatpush.bf16.msra.mxu0 %v3853
        %3931 = vmatpush.bf16.msra.mxu0 %v3852
        %3932 = vmatpush.bf16.msra.mxu0 %v3851
        %3933 = vmatmul.bf16.gmra.mxu0 %v3640
        %v3934 = vpop.f32.mrf.mxu0
        %v3935 = vadd.f32 %v3922, %v3934
        %v3936 = vpop.f32.mrf.mxu0
        %3937 = vdwg.mxu0
        %3938 = vmatpush.bf16.msra.mxu0 %v3866
        %3939 = vmatpush.bf16.msra.mxu0 %v3865
        %3940 = vmatpush.bf16.msra.mxu0 %v3864
        %3941 = vmatpush.bf16.msra.mxu0 %v3863
        %3942 = vmatpush.bf16.msra.mxu0 %v3862
        %3943 = vmatpush.bf16.msra.mxu0 %v3861
        %3944 = vmatpush.bf16.msra.mxu0 %v3860
        %3945 = vmatpush.bf16.msra.mxu0 %v3859
        %3946 = vmatmul.bf16.gmra.mxu0 %v3641
        %v3947 = vpop.f32.mrf.mxu0
        %v3948 = vadd.f32 %v3935, %v3947
        %v3949 = vpop.f32.mrf.mxu0
        %3950 = vdwg.mxu0
        %v3951 = vld [vmem:[%s16] sm:$0x1]
        %v3952 = vld [vmem:[%s17] sm:$0x1]
        %3953 = vadd.xlane.f32.xlu0 %v3948
        %v3954 = vpop.xlane.xlu0 %3953
        %v3955 = vmul.f32 %v3954, %v933
        %v3956 = vsub.f32 %v3948, %v3955
        %v3957 = vmul.f32 %v3956, %v3956
        %3958 = vadd.xlane.f32.xlu0 %v3957
        %v3959 = vpop.xlane.xlu0 %3958
        %v3960 = vmul.f32 %v3959, %v933
        %v3961 = vadd.f32 %v3960, 1e-05
        %v3962 = vrsqrt.pop %v3961
        %v3963 = vmul.f32 %v3962, %v3961
        %v3964 = vmul.f32 %v3963, %v3962
        %v3965 = vmul.f32 0.5, %v3964
        %v3966 = vsub.f32 1.5, %v3965
        %v3967 = vmul.f32 %v3962, %v3966
        %vm3968 = vweird.f32 %v3961
        %vm3969 = vweird.f32 %v3962
        %vm3970 = vmor %vm3968, %vm3969
        %v3971 = vsel %vm3970, %v3962, %v3967
        %v3972 = vmul.f32 %v3956, %v3971
        %v3974 = vperm.slane %v3951, 0
        %v3976 = vmul.f32 %v3972, %v3974
        %v3978 = vperm.slane %v3952, 0
        %v3980 = vadd.f32 %v3976, %v3978
        %3981 = vst [vmem:[%s550] sm:$0xff] %v3980
        %s3982 = sand.u32 %s410, 1
        %s3983 = scalar_lea.sflag [#allocation5], %s3982
        %s3984 = sand.u32 %s410, 1
        %s3985 = smul.addr %s3984, 8
        %s3986 = scalar_lea.vmem [#allocation4], %s3985
        // Predicated region
        $region89: #{conditioner_forward.1} parent=87 // pred_check
          %p3987 = pneg %p420
        $region90: #{conditioner_forward.1} parent=87 // pred_check_branch
          %3989 = sbr.rel (%p3987) target = $region92
        $region91: #{conditioner_forward.1} parent=87 // pred_region
          %3991 = vsyncadd %s3983, 0
          %s3992 = smul.addr %s40, 8
          %s3993 = scalar_lea.hbm %s18, %s3992
          %s3995 = sshll.u32 %s3986, 4
          %s3996 = int_to_ptr.vmem [resolvable:$true] %s3995
          %s3997 = sshll.u32 %s3993, 4
          %s3998 = int_to_ptr.hbm [resolvable:$true] %s3997
          %4000 = dma.vmem_to_hbm [thread:$0]  %s3996, 128, %s3998, %s3983
        $region92: #{conditioner_forward.1} parent=87 // pred_fallthru
          _
      $region88: #{conditioner_forward.1} parent=5 // pred_fallthru
        _
      %p4001 = scmp.le.s32.totalorder 2, %s35
      // Predicated region
      $region93: #{conditioner_forward.1} parent=5 // pred_check
        %p4002 = pneg %p4001
      $region94: #{conditioner_forward.1} parent=5 // pred_check_branch
        %4004 = sbr.rel (%p4002) target = $region96
      $region95: #{conditioner_forward.1} parent=5 // pred_region
        %s4005 = ssub.s32 %s35, 2
        // Predicated region
        $region97: #{conditioner_forward.1} parent=95 // pred_check
          %p4006 = pneg %p426
        $region98: #{conditioner_forward.1} parent=95 // pred_check_branch
          %4008 = sbr.rel (%p4006) target = $region100
        $region99: #{conditioner_forward.1} parent=95 // pred_region
          %s4009 = sand.u32 %s411, 1
          %s4010 = scalar_lea.sflag [#allocation5], %s4009
          %s4011 = sand.u32 %s411, 1
          %s4012 = smul.addr %s4011, 8
          %s4013 = scalar_lea.vmem [#allocation4], %s4012
          %4015 = dma.done %s4010, 128
        $region100: #{conditioner_forward.1} parent=95 // pred_fallthru
          _
      $region96: #{conditioner_forward.1} parent=5 // pred_fallthru
        _
    $region6: #{conditioner_forward.1} parent=1 // loop_footer
      %s39 = sadd.s32 1, %s35
    $region7: #{conditioner_forward.1} parent=1 // loop_footer_branch
      %34 = sbr.rel target = $region3
    $region8: #{conditioner_forward.1} parent=1 // loop_exit
      _
    %4016 = vsyncpa [#allocation5], 1
    %s4017 = scalar_lea.sflag [#allocation5], 1
    %4018 = vsyncpa %s4017, 1

</llo_original>
